<compile_context>
chip_gen: v6e
topology: v6e:2x2x1
jax: 0.10.0
libtpu: 0.0.40
codegen_flags: <defaults>
</compile_context>

<pallas_src>
import functools
import math

import jax
import jax.numpy as jnp
from jax.experimental import pallas as pl
from jax.experimental.pallas import tpu as pltpu

EPS = 1e-6             # LayerNorm eps (module default)
NEG_INF = -1e9         # masked_fill value used by the annotated transformer
MATMUL_DTYPE = jnp.bfloat16   # set to jnp.float32 for bit-closer matmuls

# Per-layer packed weights (leading dim = n_layers, streamed one layer per grid step)
LAYER_PACK = ('wqkv', 'bqkv', 'wo_s', 'bo_s',
              'wq_c', 'bq_c', 'wkv_c', 'bkv_c', 'wo_c', 'bo_c',
              'w1', 'b1', 'w2', 'b2', 'ln_a', 'ln_b')
# Final-norm params (tiny, resident for the whole call)
FINAL_PACK = ('fn_a', 'fn_b')


# --------------------------------------------------------------------------------------
# Kernel: grid = (batch_blocks, n_layers). One grid step = one decoder layer applied to
# a block of B_blk batch elements. x is carried across the layer axis in VMEM scratch.
# --------------------------------------------------------------------------------------
def _decoder_kernel(x_ref, mem_ref, tmask_ref, smask_ref,
                    wqkv_ref, bqkv_ref, wos_ref, bos_ref,
                    wqc_ref, bqc_ref, wkvc_ref, bkvc_ref, woc_ref, boc_ref,
                    w1_ref, b1_ref, w2_ref, b2_ref, lna_ref, lnb_ref,
                    fna_ref, fnb_ref,
                    o_ref, x_scr, cat_scr,
                    *, n_heads, d_model, d_k, b_blk, t_q, t_s, compute_dtype):
    f32 = jnp.float32
    cdt = compute_dtype
    rows = b_blk * t_q
    l = pl.program_id(1)

    # ---- carry the decoder stream across the (sequential) layer grid axis --------
    @pl.when(l == 0)
    def _init():
        for b in range(b_blk):
            x_scr[b * t_q:(b + 1) * t_q, :] = x_ref[b].astype(f32)

    # Masks arrive raw; convert to additive bias (0 / -1e9) here. Cheap VPU op.
    tgt_bias = jnp.where(tmask_ref[...] == 0, NEG_INF, 0.0).astype(f32)   # (B_blk, Tq, Tq)
    src_bias = jnp.where(smask_ref[...] == 0, NEG_INF, 0.0).astype(f32)   # (B_blk, Tm, Ts)

    def layer_norm(v, a, b):
        # torch: a * (v - mean) / (std + eps) + b, std UNBIASED (Bessel), all f32.
        mean = jnp.mean(v, axis=-1, keepdims=True)
        c = v - mean
        var = jnp.sum(c * c, axis=-1, keepdims=True) * (1.0 / (d_model - 1))
        inv = pl.reciprocal(jnp.sqrt(var) + EPS, approx=False)   # one recip/row + mul
        return a * (c * inv) + b

    def attention(q2, kv_for_b, bias_for_b, t_k, wo, bo):
        """q2: (rows, D) f32, Q already pre-scaled by 1/sqrt(d_k) (folded into Wq).
        kv_for_b(b) -> (k_b, v_b), each (t_k, D) in compute dtype.
        Each head's output is written into cat_scr at its column offset so the
        output projection is a single (rows, D) @ (D, D) matmul (K = d_model)."""
        for b in range(b_blk):
            qb = q2[b * t_q:(b + 1) * t_q, :].astype(cdt)
            kb, vb = kv_for_b(b)
            bias = bias_for_b(b)                                  # (Tq or 1, t_k) f32
            for hh in range(n_heads):
                sl = slice(hh * d_k, (hh + 1) * d_k)
                s = jax.lax.dot_general(qb[:, sl], kb[:, sl],
                                        (((1,), (1,)), ((), ())),
                                        preferred_element_type=f32)   # (Tq, t_k)
                s = s + bias
                m = jnp.max(s, axis=-1, keepdims=True)
                e = jnp.exp(s - m)
                p = e * pl.reciprocal(jnp.sum(e, axis=-1, keepdims=True), approx=True)
                oh = jnp.dot(p.astype(cdt), vb[:, sl],
                             preferred_element_type=f32)              # (Tq, d_k)
                cat_scr[b * t_q:(b + 1) * t_q, sl] = oh
        return jnp.dot(cat_scr[...].astype(cdt), wo, preferred_element_type=f32) + bo

    x = x_scr[...]                                   # (rows, D) f32

    # ---- sublayer 0: masked multi-head self-attention ------------------------------
    y = layer_norm(x, lna_ref[0:1, :], lnb_ref[0:1, :])
    qkv = jnp.dot(y.astype(cdt), wqkv_ref[...],
                  preferred_element_type=f32) + bqkv_ref[...]          # (rows, 3D)
    q = qkv[:, 0:d_model]
    k = qkv[:, d_model:2 * d_model].astype(cdt)
    v = qkv[:, 2 * d_model:3 * d_model].astype(cdt)
    x = x + attention(
        q,
        kv_for_b=lambda b: (k[b * t_q:(b + 1) * t_q, :], v[b * t_q:(b + 1) * t_q, :]),
        bias_for_b=lambda b: tgt_bias[b],
        t_k=t_q, wo=wos_ref[...], bo=bos_ref[...])

    # ---- sublayer 1: cross-attention over encoder memory ---------------------------
    y = layer_norm(x, lna_ref[1:2, :], lnb_ref[1:2, :])
    qc = jnp.dot(y.astype(cdt), wqc_ref[...],
                 preferred_element_type=f32) + bqc_ref[...]            # (rows, D)
    mem_kv = []
    for b in range(b_blk):     # per-element K/V projection (M = Ts rows each)
        kvb = jnp.dot(mem_ref[b].astype(cdt), wkvc_ref[...],
                      preferred_element_type=f32) + bkvc_ref[...]      # (Ts, 2D)
        mem_kv.append((kvb[:, 0:d_model].astype(cdt),
                       kvb[:, d_model:2 * d_model].astype(cdt)))
    x = x + attention(
        qc,
        kv_for_b=lambda b: mem_kv[b],
        bias_for_b=lambda b: src_bias[b],
        t_k=t_s, wo=woc_ref[...], bo=boc_ref[...])

    # ---- sublayer 2: position-wise feed-forward (hidden never leaves VMEM) ---------
    y = layer_norm(x, lna_ref[2:3, :], lnb_ref[2:3, :])
    h1 = jnp.maximum(jnp.dot(y.astype(cdt), w1_ref[...],
                             preferred_element_type=f32) + b1_ref[...], 0.0)
    x = x + jnp.dot(h1.astype(cdt), w2_ref[...],
                    preferred_element_type=f32) + b2_ref[...]

    x_scr[...] = x

    # ---- after the last layer: final LayerNorm, writeback ---------------------------
    @pl.when(l == pl.num_programs(1) - 1)
    def _final():
        yf = layer_norm(x, fna_ref[...], fnb_ref[...])
        for b in range(b_blk):
            o_ref[b] = yf[b * t_q:(b + 1) * t_q, :].astype(o_ref.dtype)


# --------------------------------------------------------------------------------------
# Wrapper: single pallas_call, grid = (batch blocks [parallel], layers [arbitrary]).
# --------------------------------------------------------------------------------------
def decoder_forward(packed, x, memory, src_mask, tgt_mask, *, n_heads, b_blk=None):
    B, Tq, D = x.shape
    Ts = memory.shape[1]
    n_layers = packed['wqkv'].shape[0]
    d_k = D // n_heads

    # Batch elements per grid step: enough rows (b_blk*Tq) to feed the MXU M-dim,
    # small enough to bound VMEM/unrolling. Must divide B.
    if b_blk is None:
        b_blk = 1
        for cand in range(1, B + 1):
            if B % cand == 0 and cand * Tq <= 256 and cand <= 8:
                b_blk = cand
    nb = B // b_blk
    rows = b_blk * Tq

    # Masks passed raw (no f32 additive pre-broadcast); only batch-broadcast if needed.
    tgt_mask = jnp.broadcast_to(jnp.asarray(tgt_mask), (B, Tq, Tq))
    src_mask = jnp.asarray(src_mask)
    Tm = src_mask.shape[-2]
    src_mask = jnp.broadcast_to(src_mask, (B, Tm, Ts))

    def _layer_spec(arr):   # stream one layer per inner grid step
        zeros = (0,) * (arr.ndim - 1)
        return pl.BlockSpec((None,) + arr.shape[1:], lambda b, l, z=zeros: (l,) + z)

    def _full_spec(arr):    # tiny final-norm params: resident
        zeros = (0,) * arr.ndim
        return pl.BlockSpec(arr.shape, lambda b, l, z=zeros: z)

    in_specs = ([
        pl.BlockSpec((b_blk, Tq, D), lambda b, l: (b, 0, 0)),     # x  (per batch block)
        pl.BlockSpec((b_blk, Ts, D), lambda b, l: (b, 0, 0)),     # encoder memory
        pl.BlockSpec((b_blk, Tq, Tq), lambda b, l: (b, 0, 0)),    # tgt_mask (raw)
        pl.BlockSpec((b_blk, Tm, Ts), lambda b, l: (b, 0, 0)),    # src_mask (raw)
    ] + [_layer_spec(packed[n]) for n in LAYER_PACK]
      + [_full_spec(packed[n]) for n in FINAL_PACK])

    # Explicit VMEM budget: 2 layers of streamed weights (double buffered) +
    # double-buffered activation/mask blocks + scratch + headroom. Clamped to the
    # smallest physical VMEM (v7x, 64 MiB) so the same call works on v5e/v6e/v7x.
    def _bytes_of(a):
        return math.prod(a.shape) * a.dtype.itemsize
    w_per_layer = sum(_bytes_of(packed[n]) for n in LAYER_PACK) // n_layers
    blk_bytes = (rows * D * x.dtype.itemsize
                 + b_blk * Ts * D * memory.dtype.itemsize
                 + b_blk * Tq * Tq * tgt_mask.dtype.itemsize
                 + b_blk * Tm * Ts * src_mask.dtype.itemsize
                 + rows * D * 4)                                   # output block
    scr_bytes = 2 * rows * D * 4
    vmem_limit = int(min(64 << 20,
                         max(2 * w_per_layer + 2 * blk_bytes + scr_bytes + (4 << 20),
                             16 << 20)))

    kernel = functools.partial(
        _decoder_kernel, n_heads=n_heads, d_model=D, d_k=d_k,
        b_blk=b_blk, t_q=Tq, t_s=Ts, compute_dtype=packed['wqkv'].dtype)

    return pl.pallas_call(
        kernel,
        out_shape=jax.ShapeDtypeStruct((B, Tq, D), jnp.float32),
        grid=(nb, n_layers),
        in_specs=in_specs,
        out_specs=pl.BlockSpec((b_blk, Tq, D), lambda b, l: (b, 0, 0)),
        scratch_shapes=[pltpu.VMEM((rows, D), jnp.float32),   # x carried across layers
                        pltpu.VMEM((rows, D), jnp.float32)],  # per-head concat buffer
        compiler_params=pltpu.CompilerParams(
            dimension_semantics=("parallel", "arbitrary"),
            vmem_limit_bytes=vmem_limit),
    )(x, memory, tgt_mask, src_mask,
      *[packed[n] for n in LAYER_PACK], *[packed[n] for n in FINAL_PACK])


# --------------------------------------------------------------------------------------
# Parameter construction (PyTorch convention) + one-time packing for the fused kernel.
# --------------------------------------------------------------------------------------
def init_params(key, d_model, d_ff, n_layers):
    def lin(k, dout, din):
        kw, kb = jax.random.split(k)
        return (0.02 * jax.random.normal(kw, (dout, din), jnp.float32),
                0.02 * jax.random.normal(kb, (dout,), jnp.float32))

    def attn_params(k):
        d = {}
        for nm, kk in zip('qkvo', jax.random.split(k, 4)):
            w, b = lin(kk, d_model, d_model)
            d['w' + nm], d['b' + nm] = w, b
        return d

    layers = []
    for lk in jax.random.split(key, n_layers):
        k_sa, k_ca, k_f1, k_f2 = jax.random.split(lk, 4)
        w1, b1 = lin(k_f1, d_ff, d_model)
        w2, b2 = lin(k_f2, d_model, d_ff)
        layers.append({
            'self_attn': attn_params(k_sa), 'src_attn': attn_params(k_ca),
            'ff_w1': w1, 'ff_b1': b1, 'ff_w2': w2, 'ff_b2': b2,
            'ln0_a': jnp.ones((d_model,), jnp.float32), 'ln0_b': jnp.zeros((d_model,), jnp.float32),
            'ln1_a': jnp.ones((d_model,), jnp.float32), 'ln1_b': jnp.zeros((d_model,), jnp.float32),
            'ln2_a': jnp.ones((d_model,), jnp.float32), 'ln2_b': jnp.zeros((d_model,), jnp.float32),
        })
    return {'layers': layers,
            'norm_a': jnp.ones((d_model,), jnp.float32),
            'norm_b': jnp.zeros((d_model,), jnp.float32)}


def pack_params(params, d_model, n_heads, matmul_dtype):
    """Hoist transposes/concats and the 1/sqrt(d_k) score scale out of the forward."""
    d_k = d_model // n_heads
    scale = 1.0 / math.sqrt(d_k)
    layers = params['layers']

    def stack(fn):
        return jnp.stack([fn(l) for l in layers], axis=0)

    def wT(w):  # PyTorch (out, in) -> (in, out)
        return jnp.asarray(w).T

    return {
        # Q projection pre-scaled by 1/sqrt(d_k) (weight AND bias) — no score mul.
        'wqkv': stack(lambda l: jnp.concatenate(
            [wT(l['self_attn']['wq']) * scale, wT(l['self_attn']['wk']),
             wT(l['self_attn']['wv'])], axis=1)).astype(matmul_dtype),
        'bqkv': stack(lambda l: jnp.concatenate(
            [l['self_attn']['bq'] * scale, l['self_attn']['bk'],
             l['self_attn']['bv']]).reshape(1, 3 * d_model)),
        'wo_s': stack(lambda l: wT(l['self_attn']['wo'])).astype(matmul_dtype),
        'bo_s': stack(lambda l: l['self_attn']['bo'].reshape(1, d_model)),
        'wq_c': stack(lambda l: wT(l['src_attn']['wq']) * scale).astype(matmul_dtype),
        'bq_c': stack(lambda l: (l['src_attn']['bq'] * scale).reshape(1, d_model)),
        'wkv_c': stack(lambda l: jnp.concatenate(
            [wT(l['src_attn']['wk']), wT(l['src_attn']['wv'])], axis=1)).astype(matmul_dtype),
        'bkv_c': stack(lambda l: jnp.concatenate(
            [l['src_attn']['bk'], l['src_attn']['bv']]).reshape(1, 2 * d_model)),
        'wo_c': stack(lambda l: wT(l['src_attn']['wo'])).astype(matmul_dtype),
        'bo_c': stack(lambda l: l['src_attn']['bo'].reshape(1, d_model)),
        'w1': stack(lambda l: wT(l['ff_w1'])).astype(matmul_dtype),
        'b1': stack(lambda l: l['ff_b1'].reshape(1, -1)),
        'w2': stack(lambda l: wT(l['ff_w2'])).astype(matmul_dtype),
        'b2': stack(lambda l: l['ff_b2'].reshape(1, -1)),
        'ln_a': stack(lambda l: jnp.stack([l['ln0_a'], l['ln1_a'], l['ln2_a']], axis=0)),
        'ln_b': stack(lambda l: jnp.stack([l['ln0_b'], l['ln1_b'], l['ln2_b']], axis=0)),
        'fn_a': params['norm_a'].reshape(1, d_model),
        'fn_b': params['norm_b'].reshape(1, d_model),
    }


# --------------------------------------------------------------------------------------
# Pure-JAX f32 reference (PyTorch semantics) for a numerical self-check.
# --------------------------------------------------------------------------------------
def decoder_reference(params, x, memory, src_mask, tgt_mask, n_heads):
    def layer_norm(v, a, b):
        mean = jnp.mean(v, -1, keepdims=True)
        var = jnp.sum((v - mean) ** 2, -1, keepdims=True) / (v.shape[-1] - 1)
        return a * (v - mean) / (jnp.sqrt(var) + EPS) + b

    def mha(p, q_in, k_in, v_in, mask):
        B, Tq, D = q_in.shape
        Tk = k_in.shape[1]
        dk = D // n_heads

        def split(t, T):
            return t.reshape(B, T, n_heads, dk).transpose(0, 2, 1, 3)

        q = split(q_in @ p['wq'].T + p['bq'], Tq)
        k = split(k_in @ p['wk'].T + p['bk'], Tk)
        v = split(v_in @ p['wv'].T + p['bv'], Tk)
        scores = jnp.einsum('bhqd,bhkd->bhqk', q, k) / math.sqrt(dk)
        scores = jnp.where(mask[:, None, :, :] == 0, NEG_INF, scores)
        att = jax.nn.softmax(scores, axis=-1)
        out = jnp.einsum('bhqk,bhkd->bhqd', att, v).transpose(0, 2, 1, 3).reshape(B, Tq, D)
        return out @ p['wo'].T + p['bo']

    for lp in params['layers']:
        y = layer_norm(x, lp['ln0_a'], lp['ln0_b'])
        x = x + mha(lp['self_attn'], y, y, y, tgt_mask)
        y = layer_norm(x, lp['ln1_a'], lp['ln1_b'])
        x = x + mha(lp['src_attn'], y, memory, memory, src_mask)
        y = layer_norm(x, lp['ln2_a'], lp['ln2_b'])
        h = jnp.maximum(y @ lp['ff_w1'].T + lp['ff_b1'], 0.0)
        x = x + h @ lp['ff_w2'].T + lp['ff_b2']
    return layer_norm(x, params['norm_a'], params['norm_b'])


if __name__ == "__main__":
    B, Tt, Ts = 2, 8, 10
    d_model, n_heads, d_ff, n_layers = 32, 4, 64, 2
    # TODO(synk): demo d_model=32 (<128 lanes) forces masked partial stores on the
    # output; real configs should use d_model >= 128 (and bf16 output if acceptable).

    key = jax.random.PRNGKey(0)
    kx, km, kp = jax.random.split(key, 3)

    x = jax.random.normal(kx, (B, Tt, d_model), jnp.float32)        # decoder input
    memory = jax.random.normal(km, (B, Ts, d_model), jnp.float32)   # encoder memory

    # tgt_mask: causal (B, Tt, Tt); src_mask: padding (B, 1, Ts)
    tgt_mask = jnp.broadcast_to(jnp.tril(jnp.ones((Tt, Tt), jnp.float32)), (B, Tt, Tt))
    src_mask = jnp.ones((B, 1, Ts), jnp.float32).at[1, 0, -2:].set(0.0)

    params = init_params(kp, d_model, d_ff, n_layers)
    packed = pack_params(params, d_model, n_heads, MATMUL_DTYPE)

    fwd = jax.jit(functools.partial(decoder_forward, n_heads=n_heads))
    out = jax.block_until_ready(fwd(packed, x, memory, src_mask, tgt_mask))

    assert out.shape == (B, Tt, d_model)
    assert bool(jnp.all(jnp.isfinite(out)))

    # Numerical self-check against the f32 reference (bf16 matmuls -> loose tol).
    ref = decoder_reference(params, x, memory, src_mask, tgt_mask, n_heads)
    max_err = float(jnp.max(jnp.abs(out - ref)))
    assert max_err < 5e-2, f"max abs err vs reference: {max_err}"

    print("KERNEL_OK")
</pallas_src>

<mosaic_0001>
module attributes {stable_mosaic.version = 11 : i64} {
  func.func @_decoder_kernel(%arg0: i32, %arg1: i32, %arg2: memref<2x8x32xf32, #tpu.memory_space<vmem>>, %arg3: memref<2x10x32xf32, #tpu.memory_space<vmem>>, %arg4: memref<2x8x8xf32, #tpu.memory_space<vmem>>, %arg5: memref<2x1x10xf32, #tpu.memory_space<vmem>>, %arg6: memref<1x32x96xbf16, #tpu.memory_space<vmem>>, %arg7: memref<1x1x96xf32, #tpu.memory_space<vmem>>, %arg8: memref<1x32x32xbf16, #tpu.memory_space<vmem>>, %arg9: memref<1x1x32xf32, #tpu.memory_space<vmem>>, %arg10: memref<1x32x32xbf16, #tpu.memory_space<vmem>>, %arg11: memref<1x1x32xf32, #tpu.memory_space<vmem>>, %arg12: memref<1x32x64xbf16, #tpu.memory_space<vmem>>, %arg13: memref<1x1x64xf32, #tpu.memory_space<vmem>>, %arg14: memref<1x32x32xbf16, #tpu.memory_space<vmem>>, %arg15: memref<1x1x32xf32, #tpu.memory_space<vmem>>, %arg16: memref<1x32x64xbf16, #tpu.memory_space<vmem>>, %arg17: memref<1x1x64xf32, #tpu.memory_space<vmem>>, %arg18: memref<1x64x32xbf16, #tpu.memory_space<vmem>>, %arg19: memref<1x1x32xf32, #tpu.memory_space<vmem>>, %arg20: memref<1x3x32xf32, #tpu.memory_space<vmem>>, %arg21: memref<1x3x32xf32, #tpu.memory_space<vmem>>, %arg22: memref<1x32xf32, #tpu.memory_space<vmem>>, %arg23: memref<1x32xf32, #tpu.memory_space<vmem>>, %arg24: memref<2x8x32xf32, #tpu.memory_space<vmem>>, %arg25: memref<16x32xf32, #tpu.memory_space<vmem>>, %arg26: memref<16x32xf32, #tpu.memory_space<vmem>>) attributes {dimension_semantics = [#tpu.dimension_semantics<parallel>, #tpu.dimension_semantics<arbitrary>], iteration_bounds = array<i64: 1, 2>, scalar_prefetch = 0 : i64, scratch_operands = 2 : i64, tpu.core_type = #tpu.core_type<tc>, window_params = [{transform_indices = @transform_0, window_bounds = array<i64: 2, 8, 32>}, {transform_indices = @transform_1, window_bounds = array<i64: 2, 10, 32>}, {transform_indices = @transform_2, window_bounds = array<i64: 2, 8, 8>}, {transform_indices = @transform_3, window_bounds = array<i64: 2, 1, 10>}, {transform_indices = @transform_4, window_bounds = array<i64: 1, 32, 96>}, {transform_indices = @transform_5, window_bounds = array<i64: 1, 1, 96>}, {transform_indices = @transform_6, window_bounds = array<i64: 1, 32, 32>}, {transform_indices = @transform_7, window_bounds = array<i64: 1, 1, 32>}, {transform_indices = @transform_8, window_bounds = array<i64: 1, 32, 32>}, {transform_indices = @transform_9, window_bounds = array<i64: 1, 1, 32>}, {transform_indices = @transform_10, window_bounds = array<i64: 1, 32, 64>}, {transform_indices = @transform_11, window_bounds = array<i64: 1, 1, 64>}, {transform_indices = @transform_12, window_bounds = array<i64: 1, 32, 32>}, {transform_indices = @transform_13, window_bounds = array<i64: 1, 1, 32>}, {transform_indices = @transform_14, window_bounds = array<i64: 1, 32, 64>}, {transform_indices = @transform_15, window_bounds = array<i64: 1, 1, 64>}, {transform_indices = @transform_16, window_bounds = array<i64: 1, 64, 32>}, {transform_indices = @transform_17, window_bounds = array<i64: 1, 1, 32>}, {transform_indices = @transform_18, window_bounds = array<i64: 1, 3, 32>}, {transform_indices = @transform_19, window_bounds = array<i64: 1, 3, 32>}, {pipeline_mode = #tpu.pipeline_mode<synchronous>, transform_indices = @transform_20, window_bounds = array<i64: 1, 32>}, {pipeline_mode = #tpu.pipeline_mode<synchronous>, transform_indices = @transform_21, window_bounds = array<i64: 1, 32>}, {transform_indices = @transform_22, window_bounds = array<i64: 2, 8, 32>}]} {
    %c0_i32 = arith.constant 0 : i32
    %0 = arith.cmpi eq, %arg1, %c0_i32 : i32
    %1 = arith.extui %0 : i1 to i32
    %c0_i32_0 = arith.constant 0 : i32
    %2 = arith.cmpi ne, %1, %c0_i32_0 : i32
    scf.if %2 {
      %c0_207 = arith.constant 0 : index
      %c0_208 = arith.constant 0 : index
      %c0_209 = arith.constant 0 : index
      %499 = vector.load %arg2[%c0_207, %c0_208, %c0_209] : memref<2x8x32xf32, #tpu.memory_space<vmem>>, vector<1x8x32xf32>
      %500 = vector.shape_cast %499 : vector<1x8x32xf32> to vector<8x32xf32>
      %c0_210 = arith.constant 0 : index
      %c0_211 = arith.constant 0 : index
      %501 = vector.load %arg25[%c0_210, %c0_211] : memref<16x32xf32, #tpu.memory_space<vmem>>, vector<8x32xf32>
      tpu.vector_store %arg25[%c0_210, %c0_211], %500 {strides = array<i32>} : memref<16x32xf32, #tpu.memory_space<vmem>>, vector<8x32xf32>,
      %c1_212 = arith.constant 1 : index
      %c0_213 = arith.constant 0 : index
      %c0_214 = arith.constant 0 : index
      %502 = vector.load %arg2[%c1_212, %c0_213, %c0_214] : memref<2x8x32xf32, #tpu.memory_space<vmem>>, vector<1x8x32xf32>
      %503 = vector.shape_cast %502 : vector<1x8x32xf32> to vector<8x32xf32>
      %c8_215 = arith.constant 8 : index
      %c0_216 = arith.constant 0 : index
      %504 = vector.load %arg25[%c8_215, %c0_216] : memref<16x32xf32, #tpu.memory_space<vmem>>, vector<8x32xf32>
      tpu.vector_store %arg25[%c8_215, %c0_216], %503 {strides = array<i32>} : memref<16x32xf32, #tpu.memory_space<vmem>>, vector<8x32xf32>,
    } else {
    }
    %c0 = arith.constant 0 : index
    %c0_1 = arith.constant 0 : index
    %c0_2 = arith.constant 0 : index
    %3 = vector.load %arg4[%c0, %c0_1, %c0_2] : memref<2x8x8xf32, #tpu.memory_space<vmem>>, vector<2x8x8xf32>
    %cst = arith.constant 0.000000e+00 : f32
    %4 = vector.broadcast %cst : f32 to vector<2x8x8xf32>
    %5 = arith.cmpf oeq, %3, %4 : vector<2x8x8xf32>
    %cst_3 = arith.constant -1.000000e+09 : f32
    %cst_4 = arith.constant 0.000000e+00 : f32
    %6 = vector.broadcast %cst_3 : f32 to vector<2x8x8xf32>
    %7 = vector.broadcast %cst_4 : f32 to vector<2x8x8xf32>
    %8 = arith.select %5, %6, %7 : vector<2x8x8xi1>, vector<2x8x8xf32>
    %c0_5 = arith.constant 0 : index
    %c0_6 = arith.constant 0 : index
    %c0_7 = arith.constant 0 : index
    %9 = vector.load %arg5[%c0_5, %c0_6, %c0_7] : memref<2x1x10xf32, #tpu.memory_space<vmem>>, vector<2x1x10xf32>
    %cst_8 = arith.constant 0.000000e+00 : f32
    %10 = vector.broadcast %cst_8 : f32 to vector<2x1x10xf32>
    %11 = arith.cmpf oeq, %9, %10 : vector<2x1x10xf32>
    %cst_9 = arith.constant -1.000000e+09 : f32
    %cst_10 = arith.constant 0.000000e+00 : f32
    %12 = vector.broadcast %cst_9 : f32 to vector<2x1x10xf32>
    %13 = vector.broadcast %cst_10 : f32 to vector<2x1x10xf32>
    %14 = arith.select %11, %12, %13 : vector<2x1x10xi1>, vector<2x1x10xf32>
    %c0_11 = arith.constant 0 : index
    %c0_12 = arith.constant 0 : index
    %15 = vector.load %arg25[%c0_11, %c0_12] : memref<16x32xf32, #tpu.memory_space<vmem>>, vector<16x32xf32>
    %c0_13 = arith.constant 0 : index
    %c0_14 = arith.constant 0 : index
    %c0_15 = arith.constant 0 : index
    %16 = vector.load %arg20[%c0_13, %c0_14, %c0_15] : memref<1x3x32xf32, #tpu.memory_space<vmem>>, vector<1x1x32xf32>
    %17 = vector.shape_cast %16 : vector<1x1x32xf32> to vector<1x32xf32>
    %c0_16 = arith.constant 0 : index
    %c0_17 = arith.constant 0 : index
    %c0_18 = arith.constant 0 : index
    %18 = vector.load %arg21[%c0_16, %c0_17, %c0_18] : memref<1x3x32xf32, #tpu.memory_space<vmem>>, vector<1x1x32xf32>
    %19 = vector.shape_cast %18 : vector<1x1x32xf32> to vector<1x32xf32>
    %cst_19 = arith.constant dense<0.000000e+00> : vector<16xf32>
    %20 = vector.multi_reduction <add>, %15, %cst_19 [1] : vector<16x32xf32> to vector<16xf32>
    %21 = vector.shape_cast %20 : vector<16xf32> to vector<16x1xf32>
    %cst_20 = arith.constant 3.200000e+01 : f32
    %22 = vector.broadcast %cst_20 : f32 to vector<16x1xf32>
    %23 = arith.divf %21, %22 : vector<16x1xf32>
    %24 = vector.broadcast %23 : vector<16x1xf32> to vector<16x32xf32>
    %25 = arith.subf %15, %24 : vector<16x32xf32>
    %26 = arith.mulf %25, %25 : vector<16x32xf32>
    %cst_21 = arith.constant dense<0.000000e+00> : vector<16xf32>
    %27 = vector.multi_reduction <add>, %26, %cst_21 [1] : vector<16x32xf32> to vector<16xf32>
    %28 = vector.shape_cast %27 : vector<16xf32> to vector<16x1xf32>
    %cst_22 = arith.constant 0.0322580636 : f32
    %29 = vector.broadcast %cst_22 : f32 to vector<16x1xf32>
    %30 = arith.mulf %28, %29 : vector<16x1xf32>
    %31 = math.sqrt %30 : vector<16x1xf32>
    %cst_23 = arith.constant 9.99999997E-7 : f32
    %32 = vector.broadcast %cst_23 : f32 to vector<16x1xf32>
    %33 = arith.addf %31, %32 : vector<16x1xf32>
    %34 = tpu.reciprocal %33 : vector<16x1xf32> -> vector<16x1xf32>
    %35 = vector.broadcast %34 : vector<16x1xf32> to vector<16x32xf32>
    %36 = arith.mulf %25, %35 : vector<16x32xf32>
    %37 = vector.broadcast %17 : vector<1x32xf32> to vector<16x32xf32>
    %38 = arith.mulf %37, %36 : vector<16x32xf32>
    %39 = vector.broadcast %19 : vector<1x32xf32> to vector<16x32xf32>
    %40 = arith.addf %38, %39 : vector<16x32xf32>
    %41 = arith.truncf %40 : vector<16x32xf32> to vector<16x32xbf16>
    %c0_24 = arith.constant 0 : index
    %c0_25 = arith.constant 0 : index
    %c0_26 = arith.constant 0 : index
    %42 = vector.load %arg6[%c0_24, %c0_25, %c0_26] : memref<1x32x96xbf16, #tpu.memory_space<vmem>>, vector<1x32x96xbf16>
    %43 = vector.shape_cast %42 : vector<1x32x96xbf16> to vector<32x96xbf16>
    %cst_27 = arith.constant dense<0.000000e+00> : vector<16x96xf32>
    %44 = tpu.matmul %41, %43, %cst_27 {dimension_numbers = #tpu.dot_dimension_numbers<[1], [0], [0], [1], [0, 0, 1, 1], [], []>} : vector<16x32xbf16>, vector<32x96xbf16>, vector<16x96xf32> -> vector<16x96xf32>
    %c0_28 = arith.constant 0 : index
    %c0_29 = arith.constant 0 : index
    %c0_30 = arith.constant 0 : index
    %45 = vector.load %arg7[%c0_28, %c0_29, %c0_30] : memref<1x1x96xf32, #tpu.memory_space<vmem>>, vector<1x1x96xf32>
    %46 = vector.shape_cast %45 : vector<1x1x96xf32> to vector<1x96xf32>
    %47 = vector.broadcast %46 : vector<1x96xf32> to vector<16x96xf32>
    %48 = arith.addf %44, %47 : vector<16x96xf32>
    %49 = vector.extract_strided_slice %48 {offsets = [0, 0], sizes = [16, 32], strides = [1, 1]} : vector<16x96xf32> to vector<16x32xf32>
    %50 = vector.extract_strided_slice %48 {offsets = [0, 32], sizes = [16, 32], strides = [1, 1]} : vector<16x96xf32> to vector<16x32xf32>
    %51 = arith.truncf %50 : vector<16x32xf32> to vector<16x32xbf16>
    %52 = vector.extract_strided_slice %48 {offsets = [0, 64], sizes = [16, 32], strides = [1, 1]} : vector<16x96xf32> to vector<16x32xf32>
    %53 = arith.truncf %52 : vector<16x32xf32> to vector<16x32xbf16>
    %c0_31 = arith.constant 0 : index
    %c0_32 = arith.constant 0 : index
    %c0_33 = arith.constant 0 : index
    %54 = vector.load %arg8[%c0_31, %c0_32, %c0_33] : memref<1x32x32xbf16, #tpu.memory_space<vmem>>, vector<1x32x32xbf16>
    %55 = vector.shape_cast %54 : vector<1x32x32xbf16> to vector<32x32xbf16>
    %c0_34 = arith.constant 0 : index
    %c0_35 = arith.constant 0 : index
    %c0_36 = arith.constant 0 : index
    %56 = vector.load %arg9[%c0_34, %c0_35, %c0_36] : memref<1x1x32xf32, #tpu.memory_space<vmem>>, vector<1x1x32xf32>
    %57 = vector.shape_cast %56 : vector<1x1x32xf32> to vector<1x32xf32>
    %58 = vector.extract_strided_slice %49 {offsets = [0, 0], sizes = [8, 32], strides = [1, 1]} : vector<16x32xf32> to vector<8x32xf32>
    %59 = arith.truncf %58 : vector<8x32xf32> to vector<8x32xbf16>
    %60 = vector.extract_strided_slice %51 {offsets = [0, 0], sizes = [8, 32], strides = [1, 1]} : vector<16x32xbf16> to vector<8x32xbf16>
    %61 = vector.extract_strided_slice %53 {offsets = [0, 0], sizes = [8, 32], strides = [1, 1]} : vector<16x32xbf16> to vector<8x32xbf16>
    %62 = vector.extract_strided_slice %8 {offsets = [0, 0, 0], sizes = [1, 8, 8], strides = [1, 1, 1]} : vector<2x8x8xf32> to vector<1x8x8xf32>
    %63 = vector.shape_cast %62 : vector<1x8x8xf32> to vector<8x8xf32>
    %64 = vector.extract_strided_slice %59 {offsets = [0, 0], sizes = [8, 8], strides = [1, 1]} : vector<8x32xbf16> to vector<8x8xbf16>
    %65 = vector.extract_strided_slice %60 {offsets = [0, 0], sizes = [8, 8], strides = [1, 1]} : vector<8x32xbf16> to vector<8x8xbf16>
    %cst_37 = arith.constant dense<0.000000e+00> : vector<8x8xf32>
    %66 = tpu.matmul %64, %65, %cst_37 {dimension_numbers = #tpu.dot_dimension_numbers<[1], [1], [0], [0], [0, 0, 1, 0], [], []>} : vector<8x8xbf16>, vector<8x8xbf16>, vector<8x8xf32> -> vector<8x8xf32>
    %67 = arith.addf %66, %63 : vector<8x8xf32>
    %cst_38 = arith.constant dense<0xFF800000> : vector<8xf32>
    %68 = vector.multi_reduction <maximumf>, %67, %cst_38 [1] : vector<8x8xf32> to vector<8xf32>
    %69 = vector.shape_cast %68 : vector<8xf32> to vector<8x1xf32>
    %70 = vector.broadcast %69 : vector<8x1xf32> to vector<8x8xf32>
    %71 = arith.subf %67, %70 : vector<8x8xf32>
    %72 = math.exp %71 : vector<8x8xf32>
    %cst_39 = arith.constant dense<0.000000e+00> : vector<8xf32>
    %73 = vector.multi_reduction <add>, %72, %cst_39 [1] : vector<8x8xf32> to vector<8xf32>
    %74 = vector.shape_cast %73 : vector<8xf32> to vector<8x1xf32>
    %75 = tpu.reciprocal %74 {approx = true} : vector<8x1xf32> -> vector<8x1xf32>
    %76 = vector.broadcast %75 : vector<8x1xf32> to vector<8x8xf32>
    %77 = arith.mulf %72, %76 : vector<8x8xf32>
    %78 = arith.truncf %77 : vector<8x8xf32> to vector<8x8xbf16>
    %79 = vector.extract_strided_slice %61 {offsets = [0, 0], sizes = [8, 8], strides = [1, 1]} : vector<8x32xbf16> to vector<8x8xbf16>
    %cst_40 = arith.constant dense<0.000000e+00> : vector<8x8xf32>
    %80 = tpu.matmul %78, %79, %cst_40 {dimension_numbers = #tpu.dot_dimension_numbers<[1], [0], [0], [1], [0, 0, 1, 1], [], []>} : vector<8x8xbf16>, vector<8x8xbf16>, vector<8x8xf32> -> vector<8x8xf32>
    %c0_41 = arith.constant 0 : index
    %c0_42 = arith.constant 0 : index
    %81 = vector.load %arg26[%c0_41, %c0_42] : memref<16x32xf32, #tpu.memory_space<vmem>>, vector<8x8xf32>
    tpu.vector_store %arg26[%c0_41, %c0_42], %80 {strides = array<i32>} : memref<16x32xf32, #tpu.memory_space<vmem>>, vector<8x8xf32>,
    %82 = vector.extract_strided_slice %59 {offsets = [0, 8], sizes = [8, 8], strides = [1, 1]} : vector<8x32xbf16> to vector<8x8xbf16>
    %83 = vector.extract_strided_slice %60 {offsets = [0, 8], sizes = [8, 8], strides = [1, 1]} : vector<8x32xbf16> to vector<8x8xbf16>
    %cst_43 = arith.constant dense<0.000000e+00> : vector<8x8xf32>
    %84 = tpu.matmul %82, %83, %cst_43 {dimension_numbers = #tpu.dot_dimension_numbers<[1], [1], [0], [0], [0, 0, 1, 0], [], []>} : vector<8x8xbf16>, vector<8x8xbf16>, vector<8x8xf32> -> vector<8x8xf32>
    %85 = arith.addf %84, %63 : vector<8x8xf32>
    %cst_44 = arith.constant dense<0xFF800000> : vector<8xf32>
    %86 = vector.multi_reduction <maximumf>, %85, %cst_44 [1] : vector<8x8xf32> to vector<8xf32>
    %87 = vector.shape_cast %86 : vector<8xf32> to vector<8x1xf32>
    %88 = vector.broadcast %87 : vector<8x1xf32> to vector<8x8xf32>
    %89 = arith.subf %85, %88 : vector<8x8xf32>
    %90 = math.exp %89 : vector<8x8xf32>
    %cst_45 = arith.constant dense<0.000000e+00> : vector<8xf32>
    %91 = vector.multi_reduction <add>, %90, %cst_45 [1] : vector<8x8xf32> to vector<8xf32>
    %92 = vector.shape_cast %91 : vector<8xf32> to vector<8x1xf32>
    %93 = tpu.reciprocal %92 {approx = true} : vector<8x1xf32> -> vector<8x1xf32>
    %94 = vector.broadcast %93 : vector<8x1xf32> to vector<8x8xf32>
    %95 = arith.mulf %90, %94 : vector<8x8xf32>
    %96 = arith.truncf %95 : vector<8x8xf32> to vector<8x8xbf16>
    %97 = vector.extract_strided_slice %61 {offsets = [0, 8], sizes = [8, 8], strides = [1, 1]} : vector<8x32xbf16> to vector<8x8xbf16>
    %cst_46 = arith.constant dense<0.000000e+00> : vector<8x8xf32>
    %98 = tpu.matmul %96, %97, %cst_46 {dimension_numbers = #tpu.dot_dimension_numbers<[1], [0], [0], [1], [0, 0, 1, 1], [], []>} : vector<8x8xbf16>, vector<8x8xbf16>, vector<8x8xf32> -> vector<8x8xf32>
    %c0_47 = arith.constant 0 : index
    %c8 = arith.constant 8 : index
    %99 = vector.load %arg26[%c0_47, %c8] : memref<16x32xf32, #tpu.memory_space<vmem>>, vector<8x8xf32>
    tpu.vector_store %arg26[%c0_47, %c8], %98 {strides = array<i32>} : memref<16x32xf32, #tpu.memory_space<vmem>>, vector<8x8xf32>,
    %100 = vector.extract_strided_slice %59 {offsets = [0, 16], sizes = [8, 8], strides = [1, 1]} : vector<8x32xbf16> to vector<8x8xbf16>
    %101 = vector.extract_strided_slice %60 {offsets = [0, 16], sizes = [8, 8], strides = [1, 1]} : vector<8x32xbf16> to vector<8x8xbf16>
    %cst_48 = arith.constant dense<0.000000e+00> : vector<8x8xf32>
    %102 = tpu.matmul %100, %101, %cst_48 {dimension_numbers = #tpu.dot_dimension_numbers<[1], [1], [0], [0], [0, 0, 1, 0], [], []>} : vector<8x8xbf16>, vector<8x8xbf16>, vector<8x8xf32> -> vector<8x8xf32>
    %103 = arith.addf %102, %63 : vector<8x8xf32>
    %cst_49 = arith.constant dense<0xFF800000> : vector<8xf32>
    %104 = vector.multi_reduction <maximumf>, %103, %cst_49 [1] : vector<8x8xf32> to vector<8xf32>
    %105 = vector.shape_cast %104 : vector<8xf32> to vector<8x1xf32>
    %106 = vector.broadcast %105 : vector<8x1xf32> to vector<8x8xf32>
    %107 = arith.subf %103, %106 : vector<8x8xf32>
    %108 = math.exp %107 : vector<8x8xf32>
    %cst_50 = arith.constant dense<0.000000e+00> : vector<8xf32>
    %109 = vector.multi_reduction <add>, %108, %cst_50 [1] : vector<8x8xf32> to vector<8xf32>
    %110 = vector.shape_cast %109 : vector<8xf32> to vector<8x1xf32>
    %111 = tpu.reciprocal %110 {approx = true} : vector<8x1xf32> -> vector<8x1xf32>
    %112 = vector.broadcast %111 : vector<8x1xf32> to vector<8x8xf32>
    %113 = arith.mulf %108, %112 : vector<8x8xf32>
    %114 = arith.truncf %113 : vector<8x8xf32> to vector<8x8xbf16>
    %115 = vector.extract_strided_slice %61 {offsets = [0, 16], sizes = [8, 8], strides = [1, 1]} : vector<8x32xbf16> to vector<8x8xbf16>
    %cst_51 = arith.constant dense<0.000000e+00> : vector<8x8xf32>
    %116 = tpu.matmul %114, %115, %cst_51 {dimension_numbers = #tpu.dot_dimension_numbers<[1], [0], [0], [1], [0, 0, 1, 1], [], []>} : vector<8x8xbf16>, vector<8x8xbf16>, vector<8x8xf32> -> vector<8x8xf32>
    %c0_52 = arith.constant 0 : index
    %c16 = arith.constant 16 : index
    %117 = vector.load %arg26[%c0_52, %c16] : memref<16x32xf32, #tpu.memory_space<vmem>>, vector<8x8xf32>
    tpu.vector_store %arg26[%c0_52, %c16], %116 {strides = array<i32>} : memref<16x32xf32, #tpu.memory_space<vmem>>, vector<8x8xf32>,
    %118 = vector.extract_strided_slice %59 {offsets = [0, 24], sizes = [8, 8], strides = [1, 1]} : vector<8x32xbf16> to vector<8x8xbf16>
    %119 = vector.extract_strided_slice %60 {offsets = [0, 24], sizes = [8, 8], strides = [1, 1]} : vector<8x32xbf16> to vector<8x8xbf16>
    %cst_53 = arith.constant dense<0.000000e+00> : vector<8x8xf32>
    %120 = tpu.matmul %118, %119, %cst_53 {dimension_numbers = #tpu.dot_dimension_numbers<[1], [1], [0], [0], [0, 0, 1, 0], [], []>} : vector<8x8xbf16>, vector<8x8xbf16>, vector<8x8xf32> -> vector<8x8xf32>
    %121 = arith.addf %120, %63 : vector<8x8xf32>
    %cst_54 = arith.constant dense<0xFF800000> : vector<8xf32>
    %122 = vector.multi_reduction <maximumf>, %121, %cst_54 [1] : vector<8x8xf32> to vector<8xf32>
    %123 = vector.shape_cast %122 : vector<8xf32> to vector<8x1xf32>
    %124 = vector.broadcast %123 : vector<8x1xf32> to vector<8x8xf32>
    %125 = arith.subf %121, %124 : vector<8x8xf32>
    %126 = math.exp %125 : vector<8x8xf32>
    %cst_55 = arith.constant dense<0.000000e+00> : vector<8xf32>
    %127 = vector.multi_reduction <add>, %126, %cst_55 [1] : vector<8x8xf32> to vector<8xf32>
    %128 = vector.shape_cast %127 : vector<8xf32> to vector<8x1xf32>
    %129 = tpu.reciprocal %128 {approx = true} : vector<8x1xf32> -> vector<8x1xf32>
    %130 = vector.broadcast %129 : vector<8x1xf32> to vector<8x8xf32>
    %131 = arith.mulf %126, %130 : vector<8x8xf32>
    %132 = arith.truncf %131 : vector<8x8xf32> to vector<8x8xbf16>
    %133 = vector.extract_strided_slice %61 {offsets = [0, 24], sizes = [8, 8], strides = [1, 1]} : vector<8x32xbf16> to vector<8x8xbf16>
    %cst_56 = arith.constant dense<0.000000e+00> : vector<8x8xf32>
    %134 = tpu.matmul %132, %133, %cst_56 {dimension_numbers = #tpu.dot_dimension_numbers<[1], [0], [0], [1], [0, 0, 1, 1], [], []>} : vector<8x8xbf16>, vector<8x8xbf16>, vector<8x8xf32> -> vector<8x8xf32>
    %c0_57 = arith.constant 0 : index
    %c24 = arith.constant 24 : index
    %135 = vector.load %arg26[%c0_57, %c24] : memref<16x32xf32, #tpu.memory_space<vmem>>, vector<8x8xf32>
    tpu.vector_store %arg26[%c0_57, %c24], %134 {strides = array<i32>} : memref<16x32xf32, #tpu.memory_space<vmem>>, vector<8x8xf32>,
    %136 = vector.extract_strided_slice %49 {offsets = [8, 0], sizes = [8, 32], strides = [1, 1]} : vector<16x32xf32> to vector<8x32xf32>
    %137 = arith.truncf %136 : vector<8x32xf32> to vector<8x32xbf16>
    %138 = vector.extract_strided_slice %51 {offsets = [8, 0], sizes = [8, 32], strides = [1, 1]} : vector<16x32xbf16> to vector<8x32xbf16>
    %139 = vector.extract_strided_slice %53 {offsets = [8, 0], sizes = [8, 32], strides = [1, 1]} : vector<16x32xbf16> to vector<8x32xbf16>
    %140 = vector.extract_strided_slice %8 {offsets = [1, 0, 0], sizes = [1, 8, 8], strides = [1, 1, 1]} : vector<2x8x8xf32> to vector<1x8x8xf32>
    %141 = vector.shape_cast %140 : vector<1x8x8xf32> to vector<8x8xf32>
    %142 = vector.extract_strided_slice %137 {offsets = [0, 0], sizes = [8, 8], strides = [1, 1]} : vector<8x32xbf16> to vector<8x8xbf16>
    %143 = vector.extract_strided_slice %138 {offsets = [0, 0], sizes = [8, 8], strides = [1, 1]} : vector<8x32xbf16> to vector<8x8xbf16>
    %cst_58 = arith.constant dense<0.000000e+00> : vector<8x8xf32>
    %144 = tpu.matmul %142, %143, %cst_58 {dimension_numbers = #tpu.dot_dimension_numbers<[1], [1], [0], [0], [0, 0, 1, 0], [], []>} : vector<8x8xbf16>, vector<8x8xbf16>, vector<8x8xf32> -> vector<8x8xf32>
    %145 = arith.addf %144, %141 : vector<8x8xf32>
    %cst_59 = arith.constant dense<0xFF800000> : vector<8xf32>
    %146 = vector.multi_reduction <maximumf>, %145, %cst_59 [1] : vector<8x8xf32> to vector<8xf32>
    %147 = vector.shape_cast %146 : vector<8xf32> to vector<8x1xf32>
    %148 = vector.broadcast %147 : vector<8x1xf32> to vector<8x8xf32>
    %149 = arith.subf %145, %148 : vector<8x8xf32>
    %150 = math.exp %149 : vector<8x8xf32>
    %cst_60 = arith.constant dense<0.000000e+00> : vector<8xf32>
    %151 = vector.multi_reduction <add>, %150, %cst_60 [1] : vector<8x8xf32> to vector<8xf32>
    %152 = vector.shape_cast %151 : vector<8xf32> to vector<8x1xf32>
    %153 = tpu.reciprocal %152 {approx = true} : vector<8x1xf32> -> vector<8x1xf32>
    %154 = vector.broadcast %153 : vector<8x1xf32> to vector<8x8xf32>
    %155 = arith.mulf %150, %154 : vector<8x8xf32>
    %156 = arith.truncf %155 : vector<8x8xf32> to vector<8x8xbf16>
    %157 = vector.extract_strided_slice %139 {offsets = [0, 0], sizes = [8, 8], strides = [1, 1]} : vector<8x32xbf16> to vector<8x8xbf16>
    %cst_61 = arith.constant dense<0.000000e+00> : vector<8x8xf32>
    %158 = tpu.matmul %156, %157, %cst_61 {dimension_numbers = #tpu.dot_dimension_numbers<[1], [0], [0], [1], [0, 0, 1, 1], [], []>} : vector<8x8xbf16>, vector<8x8xbf16>, vector<8x8xf32> -> vector<8x8xf32>
    %c8_62 = arith.constant 8 : index
    %c0_63 = arith.constant 0 : index
    %159 = vector.load %arg26[%c8_62, %c0_63] : memref<16x32xf32, #tpu.memory_space<vmem>>, vector<8x8xf32>
    tpu.vector_store %arg26[%c8_62, %c0_63], %158 {strides = array<i32>} : memref<16x32xf32, #tpu.memory_space<vmem>>, vector<8x8xf32>,
    %160 = vector.extract_strided_slice %137 {offsets = [0, 8], sizes = [8, 8], strides = [1, 1]} : vector<8x32xbf16> to vector<8x8xbf16>
    %161 = vector.extract_strided_slice %138 {offsets = [0, 8], sizes = [8, 8], strides = [1, 1]} : vector<8x32xbf16> to vector<8x8xbf16>
    %cst_64 = arith.constant dense<0.000000e+00> : vector<8x8xf32>
    %162 = tpu.matmul %160, %161, %cst_64 {dimension_numbers = #tpu.dot_dimension_numbers<[1], [1], [0], [0], [0, 0, 1, 0], [], []>} : vector<8x8xbf16>, vector<8x8xbf16>, vector<8x8xf32> -> vector<8x8xf32>
    %163 = arith.addf %162, %141 : vector<8x8xf32>
    %cst_65 = arith.constant dense<0xFF800000> : vector<8xf32>
    %164 = vector.multi_reduction <maximumf>, %163, %cst_65 [1] : vector<8x8xf32> to vector<8xf32>
    %165 = vector.shape_cast %164 : vector<8xf32> to vector<8x1xf32>
    %166 = vector.broadcast %165 : vector<8x1xf32> to vector<8x8xf32>
    %167 = arith.subf %163, %166 : vector<8x8xf32>
    %168 = math.exp %167 : vector<8x8xf32>
    %cst_66 = arith.constant dense<0.000000e+00> : vector<8xf32>
    %169 = vector.multi_reduction <add>, %168, %cst_66 [1] : vector<8x8xf32> to vector<8xf32>
    %170 = vector.shape_cast %169 : vector<8xf32> to vector<8x1xf32>
    %171 = tpu.reciprocal %170 {approx = true} : vector<8x1xf32> -> vector<8x1xf32>
    %172 = vector.broadcast %171 : vector<8x1xf32> to vector<8x8xf32>
    %173 = arith.mulf %168, %172 : vector<8x8xf32>
    %174 = arith.truncf %173 : vector<8x8xf32> to vector<8x8xbf16>
    %175 = vector.extract_strided_slice %139 {offsets = [0, 8], sizes = [8, 8], strides = [1, 1]} : vector<8x32xbf16> to vector<8x8xbf16>
    %cst_67 = arith.constant dense<0.000000e+00> : vector<8x8xf32>
    %176 = tpu.matmul %174, %175, %cst_67 {dimension_numbers = #tpu.dot_dimension_numbers<[1], [0], [0], [1], [0, 0, 1, 1], [], []>} : vector<8x8xbf16>, vector<8x8xbf16>, vector<8x8xf32> -> vector<8x8xf32>
    %c8_68 = arith.constant 8 : index
    %c8_69 = arith.constant 8 : index
    %177 = vector.load %arg26[%c8_68, %c8_69] : memref<16x32xf32, #tpu.memory_space<vmem>>, vector<8x8xf32>
    tpu.vector_store %arg26[%c8_68, %c8_69], %176 {strides = array<i32>} : memref<16x32xf32, #tpu.memory_space<vmem>>, vector<8x8xf32>,
    %178 = vector.extract_strided_slice %137 {offsets = [0, 16], sizes = [8, 8], strides = [1, 1]} : vector<8x32xbf16> to vector<8x8xbf16>
    %179 = vector.extract_strided_slice %138 {offsets = [0, 16], sizes = [8, 8], strides = [1, 1]} : vector<8x32xbf16> to vector<8x8xbf16>
    %cst_70 = arith.constant dense<0.000000e+00> : vector<8x8xf32>
    %180 = tpu.matmul %178, %179, %cst_70 {dimension_numbers = #tpu.dot_dimension_numbers<[1], [1], [0], [0], [0, 0, 1, 0], [], []>} : vector<8x8xbf16>, vector<8x8xbf16>, vector<8x8xf32> -> vector<8x8xf32>
    %181 = arith.addf %180, %141 : vector<8x8xf32>
    %cst_71 = arith.constant dense<0xFF800000> : vector<8xf32>
    %182 = vector.multi_reduction <maximumf>, %181, %cst_71 [1] : vector<8x8xf32> to vector<8xf32>
    %183 = vector.shape_cast %182 : vector<8xf32> to vector<8x1xf32>
    %184 = vector.broadcast %183 : vector<8x1xf32> to vector<8x8xf32>
    %185 = arith.subf %181, %184 : vector<8x8xf32>
    %186 = math.exp %185 : vector<8x8xf32>
    %cst_72 = arith.constant dense<0.000000e+00> : vector<8xf32>
    %187 = vector.multi_reduction <add>, %186, %cst_72 [1] : vector<8x8xf32> to vector<8xf32>
    %188 = vector.shape_cast %187 : vector<8xf32> to vector<8x1xf32>
    %189 = tpu.reciprocal %188 {approx = true} : vector<8x1xf32> -> vector<8x1xf32>
    %190 = vector.broadcast %189 : vector<8x1xf32> to vector<8x8xf32>
    %191 = arith.mulf %186, %190 : vector<8x8xf32>
    %192 = arith.truncf %191 : vector<8x8xf32> to vector<8x8xbf16>
    %193 = vector.extract_strided_slice %139 {offsets = [0, 16], sizes = [8, 8], strides = [1, 1]} : vector<8x32xbf16> to vector<8x8xbf16>
    %cst_73 = arith.constant dense<0.000000e+00> : vector<8x8xf32>
    %194 = tpu.matmul %192, %193, %cst_73 {dimension_numbers = #tpu.dot_dimension_numbers<[1], [0], [0], [1], [0, 0, 1, 1], [], []>} : vector<8x8xbf16>, vector<8x8xbf16>, vector<8x8xf32> -> vector<8x8xf32>
    %c8_74 = arith.constant 8 : index
    %c16_75 = arith.constant 16 : index
    %195 = vector.load %arg26[%c8_74, %c16_75] : memref<16x32xf32, #tpu.memory_space<vmem>>, vector<8x8xf32>
    tpu.vector_store %arg26[%c8_74, %c16_75], %194 {strides = array<i32>} : memref<16x32xf32, #tpu.memory_space<vmem>>, vector<8x8xf32>,
    %196 = vector.extract_strided_slice %137 {offsets = [0, 24], sizes = [8, 8], strides = [1, 1]} : vector<8x32xbf16> to vector<8x8xbf16>
    %197 = vector.extract_strided_slice %138 {offsets = [0, 24], sizes = [8, 8], strides = [1, 1]} : vector<8x32xbf16> to vector<8x8xbf16>
    %cst_76 = arith.constant dense<0.000000e+00> : vector<8x8xf32>
    %198 = tpu.matmul %196, %197, %cst_76 {dimension_numbers = #tpu.dot_dimension_numbers<[1], [1], [0], [0], [0, 0, 1, 0], [], []>} : vector<8x8xbf16>, vector<8x8xbf16>, vector<8x8xf32> -> vector<8x8xf32>
    %199 = arith.addf %198, %141 : vector<8x8xf32>
    %cst_77 = arith.constant dense<0xFF800000> : vector<8xf32>
    %200 = vector.multi_reduction <maximumf>, %199, %cst_77 [1] : vector<8x8xf32> to vector<8xf32>
    %201 = vector.shape_cast %200 : vector<8xf32> to vector<8x1xf32>
    %202 = vector.broadcast %201 : vector<8x1xf32> to vector<8x8xf32>
    %203 = arith.subf %199, %202 : vector<8x8xf32>
    %204 = math.exp %203 : vector<8x8xf32>
    %cst_78 = arith.constant dense<0.000000e+00> : vector<8xf32>
    %205 = vector.multi_reduction <add>, %204, %cst_78 [1] : vector<8x8xf32> to vector<8xf32>
    %206 = vector.shape_cast %205 : vector<8xf32> to vector<8x1xf32>
    %207 = tpu.reciprocal %206 {approx = true} : vector<8x1xf32> -> vector<8x1xf32>
    %208 = vector.broadcast %207 : vector<8x1xf32> to vector<8x8xf32>
    %209 = arith.mulf %204, %208 : vector<8x8xf32>
    %210 = arith.truncf %209 : vector<8x8xf32> to vector<8x8xbf16>
    %211 = vector.extract_strided_slice %139 {offsets = [0, 24], sizes = [8, 8], strides = [1, 1]} : vector<8x32xbf16> to vector<8x8xbf16>
    %cst_79 = arith.constant dense<0.000000e+00> : vector<8x8xf32>
    %212 = tpu.matmul %210, %211, %cst_79 {dimension_numbers = #tpu.dot_dimension_numbers<[1], [0], [0], [1], [0, 0, 1, 1], [], []>} : vector<8x8xbf16>, vector<8x8xbf16>, vector<8x8xf32> -> vector<8x8xf32>
    %c8_80 = arith.constant 8 : index
    %c24_81 = arith.constant 24 : index
    %213 = vector.load %arg26[%c8_80, %c24_81] : memref<16x32xf32, #tpu.memory_space<vmem>>, vector<8x8xf32>
    tpu.vector_store %arg26[%c8_80, %c24_81], %212 {strides = array<i32>} : memref<16x32xf32, #tpu.memory_space<vmem>>, vector<8x8xf32>,
    %c0_82 = arith.constant 0 : index
    %c0_83 = arith.constant 0 : index
    %214 = vector.load %arg26[%c0_82, %c0_83] : memref<16x32xf32, #tpu.memory_space<vmem>>, vector<16x32xf32>
    %215 = arith.truncf %214 : vector<16x32xf32> to vector<16x32xbf16>
    %cst_84 = arith.constant dense<0.000000e+00> : vector<16x32xf32>
    %216 = tpu.matmul %215, %55, %cst_84 {dimension_numbers = #tpu.dot_dimension_numbers<[1], [0], [0], [1], [0, 0, 1, 1], [], []>} : vector<16x32xbf16>, vector<32x32xbf16>, vector<16x32xf32> -> vector<16x32xf32>
    %217 = vector.broadcast %57 : vector<1x32xf32> to vector<16x32xf32>
    %218 = arith.addf %216, %217 : vector<16x32xf32>
    %219 = arith.addf %15, %218 : vector<16x32xf32>
    %c0_85 = arith.constant 0 : index
    %c1 = arith.constant 1 : index
    %c0_86 = arith.constant 0 : index
    %220 = vector.load %arg20[%c0_85, %c1, %c0_86] : memref<1x3x32xf32, #tpu.memory_space<vmem>>, vector<1x1x32xf32>
    %221 = vector.shape_cast %220 : vector<1x1x32xf32> to vector<1x32xf32>
    %c0_87 = arith.constant 0 : index
    %c1_88 = arith.constant 1 : index
    %c0_89 = arith.constant 0 : index
    %222 = vector.load %arg21[%c0_87, %c1_88, %c0_89] : memref<1x3x32xf32, #tpu.memory_space<vmem>>, vector<1x1x32xf32>
    %223 = vector.shape_cast %222 : vector<1x1x32xf32> to vector<1x32xf32>
    %cst_90 = arith.constant dense<0.000000e+00> : vector<16xf32>
    %224 = vector.multi_reduction <add>, %219, %cst_90 [1] : vector<16x32xf32> to vector<16xf32>
    %225 = vector.shape_cast %224 : vector<16xf32> to vector<16x1xf32>
    %cst_91 = arith.constant 3.200000e+01 : f32
    %226 = vector.broadcast %cst_91 : f32 to vector<16x1xf32>
    %227 = arith.divf %225, %226 : vector<16x1xf32>
    %228 = vector.broadcast %227 : vector<16x1xf32> to vector<16x32xf32>
    %229 = arith.subf %219, %228 : vector<16x32xf32>
    %230 = arith.mulf %229, %229 : vector<16x32xf32>
    %cst_92 = arith.constant dense<0.000000e+00> : vector<16xf32>
    %231 = vector.multi_reduction <add>, %230, %cst_92 [1] : vector<16x32xf32> to vector<16xf32>
    %232 = vector.shape_cast %231 : vector<16xf32> to vector<16x1xf32>
    %cst_93 = arith.constant 0.0322580636 : f32
    %233 = vector.broadcast %cst_93 : f32 to vector<16x1xf32>
    %234 = arith.mulf %232, %233 : vector<16x1xf32>
    %235 = math.sqrt %234 : vector<16x1xf32>
    %cst_94 = arith.constant 9.99999997E-7 : f32
    %236 = vector.broadcast %cst_94 : f32 to vector<16x1xf32>
    %237 = arith.addf %235, %236 : vector<16x1xf32>
    %238 = tpu.reciprocal %237 : vector<16x1xf32> -> vector<16x1xf32>
    %239 = vector.broadcast %238 : vector<16x1xf32> to vector<16x32xf32>
    %240 = arith.mulf %229, %239 : vector<16x32xf32>
    %241 = vector.broadcast %221 : vector<1x32xf32> to vector<16x32xf32>
    %242 = arith.mulf %241, %240 : vector<16x32xf32>
    %243 = vector.broadcast %223 : vector<1x32xf32> to vector<16x32xf32>
    %244 = arith.addf %242, %243 : vector<16x32xf32>
    %245 = arith.truncf %244 : vector<16x32xf32> to vector<16x32xbf16>
    %c0_95 = arith.constant 0 : index
    %c0_96 = arith.constant 0 : index
    %c0_97 = arith.constant 0 : index
    %246 = vector.load %arg10[%c0_95, %c0_96, %c0_97] : memref<1x32x32xbf16, #tpu.memory_space<vmem>>, vector<1x32x32xbf16>
    %247 = vector.shape_cast %246 : vector<1x32x32xbf16> to vector<32x32xbf16>
    %cst_98 = arith.constant dense<0.000000e+00> : vector<16x32xf32>
    %248 = tpu.matmul %245, %247, %cst_98 {dimension_numbers = #tpu.dot_dimension_numbers<[1], [0], [0], [1], [0, 0, 1, 1], [], []>} : vector<16x32xbf16>, vector<32x32xbf16>, vector<16x32xf32> -> vector<16x32xf32>
    %c0_99 = arith.constant 0 : index
    %c0_100 = arith.constant 0 : index
    %c0_101 = arith.constant 0 : index
    %249 = vector.load %arg11[%c0_99, %c0_100, %c0_101] : memref<1x1x32xf32, #tpu.memory_space<vmem>>, vector<1x1x32xf32>
    %250 = vector.shape_cast %249 : vector<1x1x32xf32> to vector<1x32xf32>
    %251 = vector.broadcast %250 : vector<1x32xf32> to vector<16x32xf32>
    %252 = arith.addf %248, %251 : vector<16x32xf32>
    %c0_102 = arith.constant 0 : index
    %c0_103 = arith.constant 0 : index
    %c0_104 = arith.constant 0 : index
    %253 = vector.load %arg3[%c0_102, %c0_103, %c0_104] : memref<2x10x32xf32, #tpu.memory_space<vmem>>, vector<1x10x32xf32>
    %254 = vector.shape_cast %253 : vector<1x10x32xf32> to vector<10x32xf32>
    %255 = arith.truncf %254 : vector<10x32xf32> to vector<10x32xbf16>
    %c0_105 = arith.constant 0 : index
    %c0_106 = arith.constant 0 : index
    %c0_107 = arith.constant 0 : index
    %256 = vector.load %arg12[%c0_105, %c0_106, %c0_107] : memref<1x32x64xbf16, #tpu.memory_space<vmem>>, vector<1x32x64xbf16>
    %257 = vector.shape_cast %256 : vector<1x32x64xbf16> to vector<32x64xbf16>
    %cst_108 = arith.constant dense<0.000000e+00> : vector<10x64xf32>
    %258 = tpu.matmul %255, %257, %cst_108 {dimension_numbers = #tpu.dot_dimension_numbers<[1], [0], [0], [1], [0, 0, 1, 1], [], []>} : vector<10x32xbf16>, vector<32x64xbf16>, vector<10x64xf32> -> vector<10x64xf32>
    %c0_109 = arith.constant 0 : index
    %c0_110 = arith.constant 0 : index
    %c0_111 = arith.constant 0 : index
    %259 = vector.load %arg13[%c0_109, %c0_110, %c0_111] : memref<1x1x64xf32, #tpu.memory_space<vmem>>, vector<1x1x64xf32>
    %260 = vector.shape_cast %259 : vector<1x1x64xf32> to vector<1x64xf32>
    %261 = vector.broadcast %260 : vector<1x64xf32> to vector<10x64xf32>
    %262 = arith.addf %258, %261 : vector<10x64xf32>
    %263 = vector.extract_strided_slice %262 {offsets = [0, 0], sizes = [10, 32], strides = [1, 1]} : vector<10x64xf32> to vector<10x32xf32>
    %264 = arith.truncf %263 : vector<10x32xf32> to vector<10x32xbf16>
    %265 = vector.extract_strided_slice %262 {offsets = [0, 32], sizes = [10, 32], strides = [1, 1]} : vector<10x64xf32> to vector<10x32xf32>
    %266 = arith.truncf %265 : vector<10x32xf32> to vector<10x32xbf16>
    %c1_112 = arith.constant 1 : index
    %c0_113 = arith.constant 0 : index
    %c0_114 = arith.constant 0 : index
    %267 = vector.load %arg3[%c1_112, %c0_113, %c0_114] : memref<2x10x32xf32, #tpu.memory_space<vmem>>, vector<1x10x32xf32>
    %268 = vector.shape_cast %267 : vector<1x10x32xf32> to vector<10x32xf32>
    %269 = arith.truncf %268 : vector<10x32xf32> to vector<10x32xbf16>
    %c0_115 = arith.constant 0 : index
    %c0_116 = arith.constant 0 : index
    %c0_117 = arith.constant 0 : index
    %270 = vector.load %arg12[%c0_115, %c0_116, %c0_117] : memref<1x32x64xbf16, #tpu.memory_space<vmem>>, vector<1x32x64xbf16>
    %271 = vector.shape_cast %270 : vector<1x32x64xbf16> to vector<32x64xbf16>
    %cst_118 = arith.constant dense<0.000000e+00> : vector<10x64xf32>
    %272 = tpu.matmul %269, %271, %cst_118 {dimension_numbers = #tpu.dot_dimension_numbers<[1], [0], [0], [1], [0, 0, 1, 1], [], []>} : vector<10x32xbf16>, vector<32x64xbf16>, vector<10x64xf32> -> vector<10x64xf32>
    %c0_119 = arith.constant 0 : index
    %c0_120 = arith.constant 0 : index
    %c0_121 = arith.constant 0 : index
    %273 = vector.load %arg13[%c0_119, %c0_120, %c0_121] : memref<1x1x64xf32, #tpu.memory_space<vmem>>, vector<1x1x64xf32>
    %274 = vector.shape_cast %273 : vector<1x1x64xf32> to vector<1x64xf32>
    %275 = vector.broadcast %274 : vector<1x64xf32> to vector<10x64xf32>
    %276 = arith.addf %272, %275 : vector<10x64xf32>
    %277 = vector.extract_strided_slice %276 {offsets = [0, 0], sizes = [10, 32], strides = [1, 1]} : vector<10x64xf32> to vector<10x32xf32>
    %278 = arith.truncf %277 : vector<10x32xf32> to vector<10x32xbf16>
    %279 = vector.extract_strided_slice %276 {offsets = [0, 32], sizes = [10, 32], strides = [1, 1]} : vector<10x64xf32> to vector<10x32xf32>
    %280 = arith.truncf %279 : vector<10x32xf32> to vector<10x32xbf16>
    %c0_122 = arith.constant 0 : index
    %c0_123 = arith.constant 0 : index
    %c0_124 = arith.constant 0 : index
    %281 = vector.load %arg14[%c0_122, %c0_123, %c0_124] : memref<1x32x32xbf16, #tpu.memory_space<vmem>>, vector<1x32x32xbf16>
    %282 = vector.shape_cast %281 : vector<1x32x32xbf16> to vector<32x32xbf16>
    %c0_125 = arith.constant 0 : index
    %c0_126 = arith.constant 0 : index
    %c0_127 = arith.constant 0 : index
    %283 = vector.load %arg15[%c0_125, %c0_126, %c0_127] : memref<1x1x32xf32, #tpu.memory_space<vmem>>, vector<1x1x32xf32>
    %284 = vector.shape_cast %283 : vector<1x1x32xf32> to vector<1x32xf32>
    %285 = vector.extract_strided_slice %252 {offsets = [0, 0], sizes = [8, 32], strides = [1, 1]} : vector<16x32xf32> to vector<8x32xf32>
    %286 = arith.truncf %285 : vector<8x32xf32> to vector<8x32xbf16>
    %287 = vector.extract_strided_slice %14 {offsets = [0, 0, 0], sizes = [1, 1, 10], strides = [1, 1, 1]} : vector<2x1x10xf32> to vector<1x1x10xf32>
    %288 = vector.shape_cast %287 : vector<1x1x10xf32> to vector<1x10xf32>
    %289 = vector.extract_strided_slice %286 {offsets = [0, 0], sizes = [8, 8], strides = [1, 1]} : vector<8x32xbf16> to vector<8x8xbf16>
    %290 = vector.extract_strided_slice %264 {offsets = [0, 0], sizes = [10, 8], strides = [1, 1]} : vector<10x32xbf16> to vector<10x8xbf16>
    %cst_128 = arith.constant dense<0.000000e+00> : vector<8x10xf32>
    %291 = tpu.matmul %289, %290, %cst_128 {dimension_numbers = #tpu.dot_dimension_numbers<[1], [1], [0], [0], [0, 0, 1, 0], [], []>} : vector<8x8xbf16>, vector<10x8xbf16>, vector<8x10xf32> -> vector<8x10xf32>
    %292 = vector.broadcast %288 : vector<1x10xf32> to vector<8x10xf32>
    %293 = arith.addf %291, %292 : vector<8x10xf32>
    %cst_129 = arith.constant dense<0xFF800000> : vector<8xf32>
    %294 = vector.multi_reduction <maximumf>, %293, %cst_129 [1] : vector<8x10xf32> to vector<8xf32>
    %295 = vector.shape_cast %294 : vector<8xf32> to vector<8x1xf32>
    %296 = vector.broadcast %295 : vector<8x1xf32> to vector<8x10xf32>
    %297 = arith.subf %293, %296 : vector<8x10xf32>
    %298 = math.exp %297 : vector<8x10xf32>
    %cst_130 = arith.constant dense<0.000000e+00> : vector<8xf32>
    %299 = vector.multi_reduction <add>, %298, %cst_130 [1] : vector<8x10xf32> to vector<8xf32>
    %300 = vector.shape_cast %299 : vector<8xf32> to vector<8x1xf32>
    %301 = tpu.reciprocal %300 {approx = true} : vector<8x1xf32> -> vector<8x1xf32>
    %302 = vector.broadcast %301 : vector<8x1xf32> to vector<8x10xf32>
    %303 = arith.mulf %298, %302 : vector<8x10xf32>
    %304 = arith.truncf %303 : vector<8x10xf32> to vector<8x10xbf16>
    %305 = vector.extract_strided_slice %266 {offsets = [0, 0], sizes = [10, 8], strides = [1, 1]} : vector<10x32xbf16> to vector<10x8xbf16>
    %cst_131 = arith.constant dense<0.000000e+00> : vector<8x8xf32>
    %306 = tpu.matmul %304, %305, %cst_131 {dimension_numbers = #tpu.dot_dimension_numbers<[1], [0], [0], [1], [0, 0, 1, 1], [], []>} : vector<8x10xbf16>, vector<10x8xbf16>, vector<8x8xf32> -> vector<8x8xf32>
    %c0_132 = arith.constant 0 : index
    %c0_133 = arith.constant 0 : index
    %307 = vector.load %arg26[%c0_132, %c0_133] : memref<16x32xf32, #tpu.memory_space<vmem>>, vector<8x8xf32>
    tpu.vector_store %arg26[%c0_132, %c0_133], %306 {strides = array<i32>} : memref<16x32xf32, #tpu.memory_space<vmem>>, vector<8x8xf32>,
    %308 = vector.extract_strided_slice %286 {offsets = [0, 8], sizes = [8, 8], strides = [1, 1]} : vector<8x32xbf16> to vector<8x8xbf16>
    %309 = vector.extract_strided_slice %264 {offsets = [0, 8], sizes = [10, 8], strides = [1, 1]} : vector<10x32xbf16> to vector<10x8xbf16>
    %cst_134 = arith.constant dense<0.000000e+00> : vector<8x10xf32>
    %310 = tpu.matmul %308, %309, %cst_134 {dimension_numbers = #tpu.dot_dimension_numbers<[1], [1], [0], [0], [0, 0, 1, 0], [], []>} : vector<8x8xbf16>, vector<10x8xbf16>, vector<8x10xf32> -> vector<8x10xf32>
    %311 = vector.broadcast %288 : vector<1x10xf32> to vector<8x10xf32>
    %312 = arith.addf %310, %311 : vector<8x10xf32>
    %cst_135 = arith.constant dense<0xFF800000> : vector<8xf32>
    %313 = vector.multi_reduction <maximumf>, %312, %cst_135 [1] : vector<8x10xf32> to vector<8xf32>
    %314 = vector.shape_cast %313 : vector<8xf32> to vector<8x1xf32>
    %315 = vector.broadcast %314 : vector<8x1xf32> to vector<8x10xf32>
    %316 = arith.subf %312, %315 : vector<8x10xf32>
    %317 = math.exp %316 : vector<8x10xf32>
    %cst_136 = arith.constant dense<0.000000e+00> : vector<8xf32>
    %318 = vector.multi_reduction <add>, %317, %cst_136 [1] : vector<8x10xf32> to vector<8xf32>
    %319 = vector.shape_cast %318 : vector<8xf32> to vector<8x1xf32>
    %320 = tpu.reciprocal %319 {approx = true} : vector<8x1xf32> -> vector<8x1xf32>
    %321 = vector.broadcast %320 : vector<8x1xf32> to vector<8x10xf32>
    %322 = arith.mulf %317, %321 : vector<8x10xf32>
    %323 = arith.truncf %322 : vector<8x10xf32> to vector<8x10xbf16>
    %324 = vector.extract_strided_slice %266 {offsets = [0, 8], sizes = [10, 8], strides = [1, 1]} : vector<10x32xbf16> to vector<10x8xbf16>
    %cst_137 = arith.constant dense<0.000000e+00> : vector<8x8xf32>
    %325 = tpu.matmul %323, %324, %cst_137 {dimension_numbers = #tpu.dot_dimension_numbers<[1], [0], [0], [1], [0, 0, 1, 1], [], []>} : vector<8x10xbf16>, vector<10x8xbf16>, vector<8x8xf32> -> vector<8x8xf32>
    %c0_138 = arith.constant 0 : index
    %c8_139 = arith.constant 8 : index
    %326 = vector.load %arg26[%c0_138, %c8_139] : memref<16x32xf32, #tpu.memory_space<vmem>>, vector<8x8xf32>
    tpu.vector_store %arg26[%c0_138, %c8_139], %325 {strides = array<i32>} : memref<16x32xf32, #tpu.memory_space<vmem>>, vector<8x8xf32>,
    %327 = vector.extract_strided_slice %286 {offsets = [0, 16], sizes = [8, 8], strides = [1, 1]} : vector<8x32xbf16> to vector<8x8xbf16>
    %328 = vector.extract_strided_slice %264 {offsets = [0, 16], sizes = [10, 8], strides = [1, 1]} : vector<10x32xbf16> to vector<10x8xbf16>
    %cst_140 = arith.constant dense<0.000000e+00> : vector<8x10xf32>
    %329 = tpu.matmul %327, %328, %cst_140 {dimension_numbers = #tpu.dot_dimension_numbers<[1], [1], [0], [0], [0, 0, 1, 0], [], []>} : vector<8x8xbf16>, vector<10x8xbf16>, vector<8x10xf32> -> vector<8x10xf32>
    %330 = vector.broadcast %288 : vector<1x10xf32> to vector<8x10xf32>
    %331 = arith.addf %329, %330 : vector<8x10xf32>
    %cst_141 = arith.constant dense<0xFF800000> : vector<8xf32>
    %332 = vector.multi_reduction <maximumf>, %331, %cst_141 [1] : vector<8x10xf32> to vector<8xf32>
    %333 = vector.shape_cast %332 : vector<8xf32> to vector<8x1xf32>
    %334 = vector.broadcast %333 : vector<8x1xf32> to vector<8x10xf32>
    %335 = arith.subf %331, %334 : vector<8x10xf32>
    %336 = math.exp %335 : vector<8x10xf32>
    %cst_142 = arith.constant dense<0.000000e+00> : vector<8xf32>
    %337 = vector.multi_reduction <add>, %336, %cst_142 [1] : vector<8x10xf32> to vector<8xf32>
    %338 = vector.shape_cast %337 : vector<8xf32> to vector<8x1xf32>
    %339 = tpu.reciprocal %338 {approx = true} : vector<8x1xf32> -> vector<8x1xf32>
    %340 = vector.broadcast %339 : vector<8x1xf32> to vector<8x10xf32>
    %341 = arith.mulf %336, %340 : vector<8x10xf32>
    %342 = arith.truncf %341 : vector<8x10xf32> to vector<8x10xbf16>
    %343 = vector.extract_strided_slice %266 {offsets = [0, 16], sizes = [10, 8], strides = [1, 1]} : vector<10x32xbf16> to vector<10x8xbf16>
    %cst_143 = arith.constant dense<0.000000e+00> : vector<8x8xf32>
    %344 = tpu.matmul %342, %343, %cst_143 {dimension_numbers = #tpu.dot_dimension_numbers<[1], [0], [0], [1], [0, 0, 1, 1], [], []>} : vector<8x10xbf16>, vector<10x8xbf16>, vector<8x8xf32> -> vector<8x8xf32>
    %c0_144 = arith.constant 0 : index
    %c16_145 = arith.constant 16 : index
    %345 = vector.load %arg26[%c0_144, %c16_145] : memref<16x32xf32, #tpu.memory_space<vmem>>, vector<8x8xf32>
    tpu.vector_store %arg26[%c0_144, %c16_145], %344 {strides = array<i32>} : memref<16x32xf32, #tpu.memory_space<vmem>>, vector<8x8xf32>,
    %346 = vector.extract_strided_slice %286 {offsets = [0, 24], sizes = [8, 8], strides = [1, 1]} : vector<8x32xbf16> to vector<8x8xbf16>
    %347 = vector.extract_strided_slice %264 {offsets = [0, 24], sizes = [10, 8], strides = [1, 1]} : vector<10x32xbf16> to vector<10x8xbf16>
    %cst_146 = arith.constant dense<0.000000e+00> : vector<8x10xf32>
    %348 = tpu.matmul %346, %347, %cst_146 {dimension_numbers = #tpu.dot_dimension_numbers<[1], [1], [0], [0], [0, 0, 1, 0], [], []>} : vector<8x8xbf16>, vector<10x8xbf16>, vector<8x10xf32> -> vector<8x10xf32>
    %349 = vector.broadcast %288 : vector<1x10xf32> to vector<8x10xf32>
    %350 = arith.addf %348, %349 : vector<8x10xf32>
    %cst_147 = arith.constant dense<0xFF800000> : vector<8xf32>
    %351 = vector.multi_reduction <maximumf>, %350, %cst_147 [1] : vector<8x10xf32> to vector<8xf32>
    %352 = vector.shape_cast %351 : vector<8xf32> to vector<8x1xf32>
    %353 = vector.broadcast %352 : vector<8x1xf32> to vector<8x10xf32>
    %354 = arith.subf %350, %353 : vector<8x10xf32>
    %355 = math.exp %354 : vector<8x10xf32>
    %cst_148 = arith.constant dense<0.000000e+00> : vector<8xf32>
    %356 = vector.multi_reduction <add>, %355, %cst_148 [1] : vector<8x10xf32> to vector<8xf32>
    %357 = vector.shape_cast %356 : vector<8xf32> to vector<8x1xf32>
    %358 = tpu.reciprocal %357 {approx = true} : vector<8x1xf32> -> vector<8x1xf32>
    %359 = vector.broadcast %358 : vector<8x1xf32> to vector<8x10xf32>
    %360 = arith.mulf %355, %359 : vector<8x10xf32>
    %361 = arith.truncf %360 : vector<8x10xf32> to vector<8x10xbf16>
    %362 = vector.extract_strided_slice %266 {offsets = [0, 24], sizes = [10, 8], strides = [1, 1]} : vector<10x32xbf16> to vector<10x8xbf16>
    %cst_149 = arith.constant dense<0.000000e+00> : vector<8x8xf32>
    %363 = tpu.matmul %361, %362, %cst_149 {dimension_numbers = #tpu.dot_dimension_numbers<[1], [0], [0], [1], [0, 0, 1, 1], [], []>} : vector<8x10xbf16>, vector<10x8xbf16>, vector<8x8xf32> -> vector<8x8xf32>
    %c0_150 = arith.constant 0 : index
    %c24_151 = arith.constant 24 : index
    %364 = vector.load %arg26[%c0_150, %c24_151] : memref<16x32xf32, #tpu.memory_space<vmem>>, vector<8x8xf32>
    tpu.vector_store %arg26[%c0_150, %c24_151], %363 {strides = array<i32>} : memref<16x32xf32, #tpu.memory_space<vmem>>, vector<8x8xf32>,
    %365 = vector.extract_strided_slice %252 {offsets = [8, 0], sizes = [8, 32], strides = [1, 1]} : vector<16x32xf32> to vector<8x32xf32>
    %366 = arith.truncf %365 : vector<8x32xf32> to vector<8x32xbf16>
    %367 = vector.extract_strided_slice %14 {offsets = [1, 0, 0], sizes = [1, 1, 10], strides = [1, 1, 1]} : vector<2x1x10xf32> to vector<1x1x10xf32>
    %368 = vector.shape_cast %367 : vector<1x1x10xf32> to vector<1x10xf32>
    %369 = vector.extract_strided_slice %366 {offsets = [0, 0], sizes = [8, 8], strides = [1, 1]} : vector<8x32xbf16> to vector<8x8xbf16>
    %370 = vector.extract_strided_slice %278 {offsets = [0, 0], sizes = [10, 8], strides = [1, 1]} : vector<10x32xbf16> to vector<10x8xbf16>
    %cst_152 = arith.constant dense<0.000000e+00> : vector<8x10xf32>
    %371 = tpu.matmul %369, %370, %cst_152 {dimension_numbers = #tpu.dot_dimension_numbers<[1], [1], [0], [0], [0, 0, 1, 0], [], []>} : vector<8x8xbf16>, vector<10x8xbf16>, vector<8x10xf32> -> vector<8x10xf32>
    %372 = vector.broadcast %368 : vector<1x10xf32> to vector<8x10xf32>
    %373 = arith.addf %371, %372 : vector<8x10xf32>
    %cst_153 = arith.constant dense<0xFF800000> : vector<8xf32>
    %374 = vector.multi_reduction <maximumf>, %373, %cst_153 [1] : vector<8x10xf32> to vector<8xf32>
    %375 = vector.shape_cast %374 : vector<8xf32> to vector<8x1xf32>
    %376 = vector.broadcast %375 : vector<8x1xf32> to vector<8x10xf32>
    %377 = arith.subf %373, %376 : vector<8x10xf32>
    %378 = math.exp %377 : vector<8x10xf32>
    %cst_154 = arith.constant dense<0.000000e+00> : vector<8xf32>
    %379 = vector.multi_reduction <add>, %378, %cst_154 [1] : vector<8x10xf32> to vector<8xf32>
    %380 = vector.shape_cast %379 : vector<8xf32> to vector<8x1xf32>
    %381 = tpu.reciprocal %380 {approx = true} : vector<8x1xf32> -> vector<8x1xf32>
    %382 = vector.broadcast %381 : vector<8x1xf32> to vector<8x10xf32>
    %383 = arith.mulf %378, %382 : vector<8x10xf32>
    %384 = arith.truncf %383 : vector<8x10xf32> to vector<8x10xbf16>
    %385 = vector.extract_strided_slice %280 {offsets = [0, 0], sizes = [10, 8], strides = [1, 1]} : vector<10x32xbf16> to vector<10x8xbf16>
    %cst_155 = arith.constant dense<0.000000e+00> : vector<8x8xf32>
    %386 = tpu.matmul %384, %385, %cst_155 {dimension_numbers = #tpu.dot_dimension_numbers<[1], [0], [0], [1], [0, 0, 1, 1], [], []>} : vector<8x10xbf16>, vector<10x8xbf16>, vector<8x8xf32> -> vector<8x8xf32>
    %c8_156 = arith.constant 8 : index
    %c0_157 = arith.constant 0 : index
    %387 = vector.load %arg26[%c8_156, %c0_157] : memref<16x32xf32, #tpu.memory_space<vmem>>, vector<8x8xf32>
    tpu.vector_store %arg26[%c8_156, %c0_157], %386 {strides = array<i32>} : memref<16x32xf32, #tpu.memory_space<vmem>>, vector<8x8xf32>,
    %388 = vector.extract_strided_slice %366 {offsets = [0, 8], sizes = [8, 8], strides = [1, 1]} : vector<8x32xbf16> to vector<8x8xbf16>
    %389 = vector.extract_strided_slice %278 {offsets = [0, 8], sizes = [10, 8], strides = [1, 1]} : vector<10x32xbf16> to vector<10x8xbf16>
    %cst_158 = arith.constant dense<0.000000e+00> : vector<8x10xf32>
    %390 = tpu.matmul %388, %389, %cst_158 {dimension_numbers = #tpu.dot_dimension_numbers<[1], [1], [0], [0], [0, 0, 1, 0], [], []>} : vector<8x8xbf16>, vector<10x8xbf16>, vector<8x10xf32> -> vector<8x10xf32>
    %391 = vector.broadcast %368 : vector<1x10xf32> to vector<8x10xf32>
    %392 = arith.addf %390, %391 : vector<8x10xf32>
    %cst_159 = arith.constant dense<0xFF800000> : vector<8xf32>
    %393 = vector.multi_reduction <maximumf>, %392, %cst_159 [1] : vector<8x10xf32> to vector<8xf32>
    %394 = vector.shape_cast %393 : vector<8xf32> to vector<8x1xf32>
    %395 = vector.broadcast %394 : vector<8x1xf32> to vector<8x10xf32>
    %396 = arith.subf %392, %395 : vector<8x10xf32>
    %397 = math.exp %396 : vector<8x10xf32>
    %cst_160 = arith.constant dense<0.000000e+00> : vector<8xf32>
    %398 = vector.multi_reduction <add>, %397, %cst_160 [1] : vector<8x10xf32> to vector<8xf32>
    %399 = vector.shape_cast %398 : vector<8xf32> to vector<8x1xf32>
    %400 = tpu.reciprocal %399 {approx = true} : vector<8x1xf32> -> vector<8x1xf32>
    %401 = vector.broadcast %400 : vector<8x1xf32> to vector<8x10xf32>
    %402 = arith.mulf %397, %401 : vector<8x10xf32>
    %403 = arith.truncf %402 : vector<8x10xf32> to vector<8x10xbf16>
    %404 = vector.extract_strided_slice %280 {offsets = [0, 8], sizes = [10, 8], strides = [1, 1]} : vector<10x32xbf16> to vector<10x8xbf16>
    %cst_161 = arith.constant dense<0.000000e+00> : vector<8x8xf32>
    %405 = tpu.matmul %403, %404, %cst_161 {dimension_numbers = #tpu.dot_dimension_numbers<[1], [0], [0], [1], [0, 0, 1, 1], [], []>} : vector<8x10xbf16>, vector<10x8xbf16>, vector<8x8xf32> -> vector<8x8xf32>
    %c8_162 = arith.constant 8 : index
    %c8_163 = arith.constant 8 : index
    %406 = vector.load %arg26[%c8_162, %c8_163] : memref<16x32xf32, #tpu.memory_space<vmem>>, vector<8x8xf32>
    tpu.vector_store %arg26[%c8_162, %c8_163], %405 {strides = array<i32>} : memref<16x32xf32, #tpu.memory_space<vmem>>, vector<8x8xf32>,
    %407 = vector.extract_strided_slice %366 {offsets = [0, 16], sizes = [8, 8], strides = [1, 1]} : vector<8x32xbf16> to vector<8x8xbf16>
    %408 = vector.extract_strided_slice %278 {offsets = [0, 16], sizes = [10, 8], strides = [1, 1]} : vector<10x32xbf16> to vector<10x8xbf16>
    %cst_164 = arith.constant dense<0.000000e+00> : vector<8x10xf32>
    %409 = tpu.matmul %407, %408, %cst_164 {dimension_numbers = #tpu.dot_dimension_numbers<[1], [1], [0], [0], [0, 0, 1, 0], [], []>} : vector<8x8xbf16>, vector<10x8xbf16>, vector<8x10xf32> -> vector<8x10xf32>
    %410 = vector.broadcast %368 : vector<1x10xf32> to vector<8x10xf32>
    %411 = arith.addf %409, %410 : vector<8x10xf32>
    %cst_165 = arith.constant dense<0xFF800000> : vector<8xf32>
    %412 = vector.multi_reduction <maximumf>, %411, %cst_165 [1] : vector<8x10xf32> to vector<8xf32>
    %413 = vector.shape_cast %412 : vector<8xf32> to vector<8x1xf32>
    %414 = vector.broadcast %413 : vector<8x1xf32> to vector<8x10xf32>
    %415 = arith.subf %411, %414 : vector<8x10xf32>
    %416 = math.exp %415 : vector<8x10xf32>
    %cst_166 = arith.constant dense<0.000000e+00> : vector<8xf32>
    %417 = vector.multi_reduction <add>, %416, %cst_166 [1] : vector<8x10xf32> to vector<8xf32>
    %418 = vector.shape_cast %417 : vector<8xf32> to vector<8x1xf32>
    %419 = tpu.reciprocal %418 {approx = true} : vector<8x1xf32> -> vector<8x1xf32>
    %420 = vector.broadcast %419 : vector<8x1xf32> to vector<8x10xf32>
    %421 = arith.mulf %416, %420 : vector<8x10xf32>
    %422 = arith.truncf %421 : vector<8x10xf32> to vector<8x10xbf16>
    %423 = vector.extract_strided_slice %280 {offsets = [0, 16], sizes = [10, 8], strides = [1, 1]} : vector<10x32xbf16> to vector<10x8xbf16>
    %cst_167 = arith.constant dense<0.000000e+00> : vector<8x8xf32>
    %424 = tpu.matmul %422, %423, %cst_167 {dimension_numbers = #tpu.dot_dimension_numbers<[1], [0], [0], [1], [0, 0, 1, 1], [], []>} : vector<8x10xbf16>, vector<10x8xbf16>, vector<8x8xf32> -> vector<8x8xf32>
    %c8_168 = arith.constant 8 : index
    %c16_169 = arith.constant 16 : index
    %425 = vector.load %arg26[%c8_168, %c16_169] : memref<16x32xf32, #tpu.memory_space<vmem>>, vector<8x8xf32>
    tpu.vector_store %arg26[%c8_168, %c16_169], %424 {strides = array<i32>} : memref<16x32xf32, #tpu.memory_space<vmem>>, vector<8x8xf32>,
    %426 = vector.extract_strided_slice %366 {offsets = [0, 24], sizes = [8, 8], strides = [1, 1]} : vector<8x32xbf16> to vector<8x8xbf16>
    %427 = vector.extract_strided_slice %278 {offsets = [0, 24], sizes = [10, 8], strides = [1, 1]} : vector<10x32xbf16> to vector<10x8xbf16>
    %cst_170 = arith.constant dense<0.000000e+00> : vector<8x10xf32>
    %428 = tpu.matmul %426, %427, %cst_170 {dimension_numbers = #tpu.dot_dimension_numbers<[1], [1], [0], [0], [0, 0, 1, 0], [], []>} : vector<8x8xbf16>, vector<10x8xbf16>, vector<8x10xf32> -> vector<8x10xf32>
    %429 = vector.broadcast %368 : vector<1x10xf32> to vector<8x10xf32>
    %430 = arith.addf %428, %429 : vector<8x10xf32>
    %cst_171 = arith.constant dense<0xFF800000> : vector<8xf32>
    %431 = vector.multi_reduction <maximumf>, %430, %cst_171 [1] : vector<8x10xf32> to vector<8xf32>
    %432 = vector.shape_cast %431 : vector<8xf32> to vector<8x1xf32>
    %433 = vector.broadcast %432 : vector<8x1xf32> to vector<8x10xf32>
    %434 = arith.subf %430, %433 : vector<8x10xf32>
    %435 = math.exp %434 : vector<8x10xf32>
    %cst_172 = arith.constant dense<0.000000e+00> : vector<8xf32>
    %436 = vector.multi_reduction <add>, %435, %cst_172 [1] : vector<8x10xf32> to vector<8xf32>
    %437 = vector.shape_cast %436 : vector<8xf32> to vector<8x1xf32>
    %438 = tpu.reciprocal %437 {approx = true} : vector<8x1xf32> -> vector<8x1xf32>
    %439 = vector.broadcast %438 : vector<8x1xf32> to vector<8x10xf32>
    %440 = arith.mulf %435, %439 : vector<8x10xf32>
    %441 = arith.truncf %440 : vector<8x10xf32> to vector<8x10xbf16>
    %442 = vector.extract_strided_slice %280 {offsets = [0, 24], sizes = [10, 8], strides = [1, 1]} : vector<10x32xbf16> to vector<10x8xbf16>
    %cst_173 = arith.constant dense<0.000000e+00> : vector<8x8xf32>
    %443 = tpu.matmul %441, %442, %cst_173 {dimension_numbers = #tpu.dot_dimension_numbers<[1], [0], [0], [1], [0, 0, 1, 1], [], []>} : vector<8x10xbf16>, vector<10x8xbf16>, vector<8x8xf32> -> vector<8x8xf32>
    %c8_174 = arith.constant 8 : index
    %c24_175 = arith.constant 24 : index
    %444 = vector.load %arg26[%c8_174, %c24_175] : memref<16x32xf32, #tpu.memory_space<vmem>>, vector<8x8xf32>
    tpu.vector_store %arg26[%c8_174, %c24_175], %443 {strides = array<i32>} : memref<16x32xf32, #tpu.memory_space<vmem>>, vector<8x8xf32>,
    %c0_176 = arith.constant 0 : index
    %c0_177 = arith.constant 0 : index
    %445 = vector.load %arg26[%c0_176, %c0_177] : memref<16x32xf32, #tpu.memory_space<vmem>>, vector<16x32xf32>
    %446 = arith.truncf %445 : vector<16x32xf32> to vector<16x32xbf16>
    %cst_178 = arith.constant dense<0.000000e+00> : vector<16x32xf32>
    %447 = tpu.matmul %446, %282, %cst_178 {dimension_numbers = #tpu.dot_dimension_numbers<[1], [0], [0], [1], [0, 0, 1, 1], [], []>} : vector<16x32xbf16>, vector<32x32xbf16>, vector<16x32xf32> -> vector<16x32xf32>
    %448 = vector.broadcast %284 : vector<1x32xf32> to vector<16x32xf32>
    %449 = arith.addf %447, %448 : vector<16x32xf32>
    %450 = arith.addf %219, %449 : vector<16x32xf32>
    %c0_179 = arith.constant 0 : index
    %c2 = arith.constant 2 : index
    %c0_180 = arith.constant 0 : index
    %451 = vector.load %arg20[%c0_179, %c2, %c0_180] : memref<1x3x32xf32, #tpu.memory_space<vmem>>, vector<1x1x32xf32>
    %452 = vector.shape_cast %451 : vector<1x1x32xf32> to vector<1x32xf32>
    %c0_181 = arith.constant 0 : index
    %c2_182 = arith.constant 2 : index
    %c0_183 = arith.constant 0 : index
    %453 = vector.load %arg21[%c0_181, %c2_182, %c0_183] : memref<1x3x32xf32, #tpu.memory_space<vmem>>, vector<1x1x32xf32>
    %454 = vector.shape_cast %453 : vector<1x1x32xf32> to vector<1x32xf32>
    %cst_184 = arith.constant dense<0.000000e+00> : vector<16xf32>
    %455 = vector.multi_reduction <add>, %450, %cst_184 [1] : vector<16x32xf32> to vector<16xf32>
    %456 = vector.shape_cast %455 : vector<16xf32> to vector<16x1xf32>
    %cst_185 = arith.constant 3.200000e+01 : f32
    %457 = vector.broadcast %cst_185 : f32 to vector<16x1xf32>
    %458 = arith.divf %456, %457 : vector<16x1xf32>
    %459 = vector.broadcast %458 : vector<16x1xf32> to vector<16x32xf32>
    %460 = arith.subf %450, %459 : vector<16x32xf32>
    %461 = arith.mulf %460, %460 : vector<16x32xf32>
    %cst_186 = arith.constant dense<0.000000e+00> : vector<16xf32>
    %462 = vector.multi_reduction <add>, %461, %cst_186 [1] : vector<16x32xf32> to vector<16xf32>
    %463 = vector.shape_cast %462 : vector<16xf32> to vector<16x1xf32>
    %cst_187 = arith.constant 0.0322580636 : f32
    %464 = vector.broadcast %cst_187 : f32 to vector<16x1xf32>
    %465 = arith.mulf %463, %464 : vector<16x1xf32>
    %466 = math.sqrt %465 : vector<16x1xf32>
    %cst_188 = arith.constant 9.99999997E-7 : f32
    %467 = vector.broadcast %cst_188 : f32 to vector<16x1xf32>
    %468 = arith.addf %466, %467 : vector<16x1xf32>
    %469 = tpu.reciprocal %468 : vector<16x1xf32> -> vector<16x1xf32>
    %470 = vector.broadcast %469 : vector<16x1xf32> to vector<16x32xf32>
    %471 = arith.mulf %460, %470 : vector<16x32xf32>
    %472 = vector.broadcast %452 : vector<1x32xf32> to vector<16x32xf32>
    %473 = arith.mulf %472, %471 : vector<16x32xf32>
    %474 = vector.broadcast %454 : vector<1x32xf32> to vector<16x32xf32>
    %475 = arith.addf %473, %474 : vector<16x32xf32>
    %476 = arith.truncf %475 : vector<16x32xf32> to vector<16x32xbf16>
    %c0_189 = arith.constant 0 : index
    %c0_190 = arith.constant 0 : index
    %c0_191 = arith.constant 0 : index
    %477 = vector.load %arg16[%c0_189, %c0_190, %c0_191] : memref<1x32x64xbf16, #tpu.memory_space<vmem>>, vector<1x32x64xbf16>
    %478 = vector.shape_cast %477 : vector<1x32x64xbf16> to vector<32x64xbf16>
    %cst_192 = arith.constant dense<0.000000e+00> : vector<16x64xf32>
    %479 = tpu.matmul %476, %478, %cst_192 {dimension_numbers = #tpu.dot_dimension_numbers<[1], [0], [0], [1], [0, 0, 1, 1], [], []>} : vector<16x32xbf16>, vector<32x64xbf16>, vector<16x64xf32> -> vector<16x64xf32>
    %c0_193 = arith.constant 0 : index
    %c0_194 = arith.constant 0 : index
    %c0_195 = arith.constant 0 : index
    %480 = vector.load %arg17[%c0_193, %c0_194, %c0_195] : memref<1x1x64xf32, #tpu.memory_space<vmem>>, vector<1x1x64xf32>
    %481 = vector.shape_cast %480 : vector<1x1x64xf32> to vector<1x64xf32>
    %482 = vector.broadcast %481 : vector<1x64xf32> to vector<16x64xf32>
    %483 = arith.addf %479, %482 : vector<16x64xf32>
    %cst_196 = arith.constant 0.000000e+00 : f32
    %484 = vector.broadcast %cst_196 : f32 to vector<16x64xf32>
    %485 = arith.maximumf %483, %484 : vector<16x64xf32>
    %486 = arith.truncf %485 : vector<16x64xf32> to vector<16x64xbf16>
    %c0_197 = arith.constant 0 : index
    %c0_198 = arith.constant 0 : index
    %c0_199 = arith.constant 0 : index
    %487 = vector.load %arg18[%c0_197, %c0_198, %c0_199] : memref<1x64x32xbf16, #tpu.memory_space<vmem>>, vector<1x64x32xbf16>
    %488 = vector.shape_cast %487 : vector<1x64x32xbf16> to vector<64x32xbf16>
    %cst_200 = arith.constant dense<0.000000e+00> : vector<16x32xf32>
    %489 = tpu.matmul %486, %488, %cst_200 {dimension_numbers = #tpu.dot_dimension_numbers<[1], [0], [0], [1], [0, 0, 1, 1], [], []>} : vector<16x64xbf16>, vector<64x32xbf16>, vector<16x32xf32> -> vector<16x32xf32>
    %490 = arith.addf %450, %489 : vector<16x32xf32>
    %c0_201 = arith.constant 0 : index
    %c0_202 = arith.constant 0 : index
    %c0_203 = arith.constant 0 : index
    %491 = vector.load %arg19[%c0_201, %c0_202, %c0_203] : memref<1x1x32xf32, #tpu.memory_space<vmem>>, vector<1x1x32xf32>
    %492 = vector.shape_cast %491 : vector<1x1x32xf32> to vector<1x32xf32>
    %493 = vector.broadcast %492 : vector<1x32xf32> to vector<16x32xf32>
    %494 = arith.addf %490, %493 : vector<16x32xf32>
    %c0_204 = arith.constant 0 : index
    %c0_205 = arith.constant 0 : index
    %495 = vector.load %arg25[%c0_204, %c0_205] : memref<16x32xf32, #tpu.memory_space<vmem>>, vector<16x32xf32>
    tpu.vector_store %arg25[%c0_204, %c0_205], %494 {strides = array<i32>} : memref<16x32xf32, #tpu.memory_space<vmem>>, vector<16x32xf32>,
    %c1_i32 = arith.constant 1 : i32
    %496 = arith.cmpi eq, %arg1, %c1_i32 : i32
    %497 = arith.extui %496 : i1 to i32
    %c0_i32_206 = arith.constant 0 : i32
    %498 = arith.cmpi ne, %497, %c0_i32_206 : i32
    scf.if %498 {
      %c0_207 = arith.constant 0 : index
      %c0_208 = arith.constant 0 : index
      %499 = vector.load %arg22[%c0_207, %c0_208] : memref<1x32xf32, #tpu.memory_space<vmem>>, vector<1x32xf32>
      %c0_209 = arith.constant 0 : index
      %c0_210 = arith.constant 0 : index
      %500 = vector.load %arg23[%c0_209, %c0_210] : memref<1x32xf32, #tpu.memory_space<vmem>>, vector<1x32xf32>
      %cst_211 = arith.constant dense<0.000000e+00> : vector<16xf32>
      %501 = vector.multi_reduction <add>, %494, %cst_211 [1] : vector<16x32xf32> to vector<16xf32>
      %502 = vector.shape_cast %501 : vector<16xf32> to vector<16x1xf32>
      %cst_212 = arith.constant 3.200000e+01 : f32
      %503 = vector.broadcast %cst_212 : f32 to vector<16x1xf32>
      %504 = arith.divf %502, %503 : vector<16x1xf32>
      %505 = vector.broadcast %504 : vector<16x1xf32> to vector<16x32xf32>
      %506 = arith.subf %494, %505 : vector<16x32xf32>
      %507 = arith.mulf %506, %506 : vector<16x32xf32>
      %cst_213 = arith.constant dense<0.000000e+00> : vector<16xf32>
      %508 = vector.multi_reduction <add>, %507, %cst_213 [1] : vector<16x32xf32> to vector<16xf32>
      %509 = vector.shape_cast %508 : vector<16xf32> to vector<16x1xf32>
      %cst_214 = arith.constant 0.0322580636 : f32
      %510 = vector.broadcast %cst_214 : f32 to vector<16x1xf32>
      %511 = arith.mulf %509, %510 : vector<16x1xf32>
      %512 = math.sqrt %511 : vector<16x1xf32>
      %cst_215 = arith.constant 9.99999997E-7 : f32
      %513 = vector.broadcast %cst_215 : f32 to vector<16x1xf32>
      %514 = arith.addf %512, %513 : vector<16x1xf32>
      %515 = tpu.reciprocal %514 : vector<16x1xf32> -> vector<16x1xf32>
      %516 = vector.broadcast %515 : vector<16x1xf32> to vector<16x32xf32>
      %517 = arith.mulf %506, %516 : vector<16x32xf32>
      %518 = vector.broadcast %499 : vector<1x32xf32> to vector<16x32xf32>
      %519 = arith.mulf %518, %517 : vector<16x32xf32>
      %520 = vector.broadcast %500 : vector<1x32xf32> to vector<16x32xf32>
      %521 = arith.addf %519, %520 : vector<16x32xf32>
      %522 = vector.extract_strided_slice %521 {offsets = [0, 0], sizes = [8, 32], strides = [1, 1]} : vector<16x32xf32> to vector<8x32xf32>
      %c0_216 = arith.constant 0 : index
      %c0_217 = arith.constant 0 : index
      %c0_218 = arith.constant 0 : index
      %523 = vector.load %arg24[%c0_216, %c0_217, %c0_218] : memref<2x8x32xf32, #tpu.memory_space<vmem>>, vector<1x8x32xf32>
      %524 = vector.shape_cast %523 : vector<1x8x32xf32> to vector<8x32xf32>
      %525 = vector.shape_cast %522 : vector<8x32xf32> to vector<1x8x32xf32>
      tpu.vector_store %arg24[%c0_216, %c0_217, %c0_218], %525 {strides = array<i32>} : memref<2x8x32xf32, #tpu.memory_space<vmem>>, vector<1x8x32xf32>,
      %526 = vector.extract_strided_slice %521 {offsets = [8, 0], sizes = [8, 32], strides = [1, 1]} : vector<16x32xf32> to vector<8x32xf32>
      %c1_219 = arith.constant 1 : index
      %c0_220 = arith.constant 0 : index
      %c0_221 = arith.constant 0 : index
      %527 = vector.load %arg24[%c1_219, %c0_220, %c0_221] : memref<2x8x32xf32, #tpu.memory_space<vmem>>, vector<1x8x32xf32>
      %528 = vector.shape_cast %527 : vector<1x8x32xf32> to vector<8x32xf32>
      %529 = vector.shape_cast %526 : vector<8x32xf32> to vector<1x8x32xf32>
      tpu.vector_store %arg24[%c1_219, %c0_220, %c0_221], %529 {strides = array<i32>} : memref<2x8x32xf32, #tpu.memory_space<vmem>>, vector<1x8x32xf32>,
    } else {
    }
    return
  }
  func.func @transform_0(%arg0: i32, %arg1: i32) -> (i32, i32, i32) {
    %c0_i32 = arith.constant 0 : i32
    %c0_i32_0 = arith.constant 0 : i32
    %c0_i32_1 = arith.constant 0 : i32
    return %arg0, %c0_i32, %c0_i32_0 : i32, i32, i32
  }
  func.func @transform_1(%arg0: i32, %arg1: i32) -> (i32, i32, i32) {
    %c0_i32 = arith.constant 0 : i32
    %c0_i32_0 = arith.constant 0 : i32
    %c0_i32_1 = arith.constant 0 : i32
    return %arg0, %c0_i32, %c0_i32_0 : i32, i32, i32
  }
  func.func @transform_2(%arg0: i32, %arg1: i32) -> (i32, i32, i32) {
    %c0_i32 = arith.constant 0 : i32
    %c0_i32_0 = arith.constant 0 : i32
    %c0_i32_1 = arith.constant 0 : i32
    return %arg0, %c0_i32, %c0_i32_0 : i32, i32, i32
  }
  func.func @transform_3(%arg0: i32, %arg1: i32) -> (i32, i32, i32) {
    %c0_i32 = arith.constant 0 : i32
    %c0_i32_0 = arith.constant 0 : i32
    %c0_i32_1 = arith.constant 0 : i32
    return %arg0, %c0_i32, %c0_i32_0 : i32, i32, i32
  }
  func.func @transform_4(%arg0: i32, %arg1: i32) -> (i32, i32, i32) {
    %c0_i32 = arith.constant 0 : i32
    %c0_i32_0 = arith.constant 0 : i32
    %c0_i32_1 = arith.constant 0 : i32
    return %arg1, %c0_i32, %c0_i32_0 : i32, i32, i32
  }
  func.func @transform_5(%arg0: i32, %arg1: i32) -> (i32, i32, i32) {
    %c0_i32 = arith.constant 0 : i32
    %c0_i32_0 = arith.constant 0 : i32
    %c0_i32_1 = arith.constant 0 : i32
    return %arg1, %c0_i32, %c0_i32_0 : i32, i32, i32
  }
  func.func @transform_6(%arg0: i32, %arg1: i32) -> (i32, i32, i32) {
    %c0_i32 = arith.constant 0 : i32
    %c0_i32_0 = arith.constant 0 : i32
    %c0_i32_1 = arith.constant 0 : i32
    return %arg1, %c0_i32, %c0_i32_0 : i32, i32, i32
  }
  func.func @transform_7(%arg0: i32, %arg1: i32) -> (i32, i32, i32) {
    %c0_i32 = arith.constant 0 : i32
    %c0_i32_0 = arith.constant 0 : i32
    %c0_i32_1 = arith.constant 0 : i32
    return %arg1, %c0_i32, %c0_i32_0 : i32, i32, i32
  }
  func.func @transform_8(%arg0: i32, %arg1: i32) -> (i32, i32, i32) {
    %c0_i32 = arith.constant 0 : i32
    %c0_i32_0 = arith.constant 0 : i32
    %c0_i32_1 = arith.constant 0 : i32
    return %arg1, %c0_i32, %c0_i32_0 : i32, i32, i32
  }
  func.func @transform_9(%arg0: i32, %arg1: i32) -> (i32, i32, i32) {
    %c0_i32 = arith.constant 0 : i32
    %c0_i32_0 = arith.constant 0 : i32
    %c0_i32_1 = arith.constant 0 : i32
    return %arg1, %c0_i32, %c0_i32_0 : i32, i32, i32
  }
  func.func @transform_10(%arg0: i32, %arg1: i32) -> (i32, i32, i32) {
    %c0_i32 = arith.constant 0 : i32
    %c0_i32_0 = arith.constant 0 : i32
    %c0_i32_1 = arith.constant 0 : i32
    return %arg1, %c0_i32, %c0_i32_0 : i32, i32, i32
  }
  func.func @transform_11(%arg0: i32, %arg1: i32) -> (i32, i32, i32) {
    %c0_i32 = arith.constant 0 : i32
    %c0_i32_0 = arith.constant 0 : i32
    %c0_i32_1 = arith.constant 0 : i32
    return %arg1, %c0_i32, %c0_i32_0 : i32, i32, i32
  }
  func.func @transform_12(%arg0: i32, %arg1: i32) -> (i32, i32, i32) {
    %c0_i32 = arith.constant 0 : i32
    %c0_i32_0 = arith.constant 0 : i32
    %c0_i32_1 = arith.constant 0 : i32
    return %arg1, %c0_i32, %c0_i32_0 : i32, i32, i32
  }
  func.func @transform_13(%arg0: i32, %arg1: i32) -> (i32, i32, i32) {
    %c0_i32 = arith.constant 0 : i32
    %c0_i32_0 = arith.constant 0 : i32
    %c0_i32_1 = arith.constant 0 : i32
    return %arg1, %c0_i32, %c0_i32_0 : i32, i32, i32
  }
  func.func @transform_14(%arg0: i32, %arg1: i32) -> (i32, i32, i32) {
    %c0_i32 = arith.constant 0 : i32
    %c0_i32_0 = arith.constant 0 : i32
    %c0_i32_1 = arith.constant 0 : i32
    return %arg1, %c0_i32, %c0_i32_0 : i32, i32, i32
  }
  func.func @transform_15(%arg0: i32, %arg1: i32) -> (i32, i32, i32) {
    %c0_i32 = arith.constant 0 : i32
    %c0_i32_0 = arith.constant 0 : i32
    %c0_i32_1 = arith.constant 0 : i32
    return %arg1, %c0_i32, %c0_i32_0 : i32, i32, i32
  }
  func.func @transform_16(%arg0: i32, %arg1: i32) -> (i32, i32, i32) {
    %c0_i32 = arith.constant 0 : i32
    %c0_i32_0 = arith.constant 0 : i32
    %c0_i32_1 = arith.constant 0 : i32
    return %arg1, %c0_i32, %c0_i32_0 : i32, i32, i32
  }
  func.func @transform_17(%arg0: i32, %arg1: i32) -> (i32, i32, i32) {
    %c0_i32 = arith.constant 0 : i32
    %c0_i32_0 = arith.constant 0 : i32
    %c0_i32_1 = arith.constant 0 : i32
    return %arg1, %c0_i32, %c0_i32_0 : i32, i32, i32
  }
  func.func @transform_18(%arg0: i32, %arg1: i32) -> (i32, i32, i32) {
    %c0_i32 = arith.constant 0 : i32
    %c0_i32_0 = arith.constant 0 : i32
    %c0_i32_1 = arith.constant 0 : i32
    return %arg1, %c0_i32, %c0_i32_0 : i32, i32, i32
  }
  func.func @transform_19(%arg0: i32, %arg1: i32) -> (i32, i32, i32) {
    %c0_i32 = arith.constant 0 : i32
    %c0_i32_0 = arith.constant 0 : i32
    %c0_i32_1 = arith.constant 0 : i32
    return %arg1, %c0_i32, %c0_i32_0 : i32, i32, i32
  }
  func.func @transform_20(%arg0: i32, %arg1: i32) -> (i32, i32) {
    %c0_i32 = arith.constant 0 : i32
    %c0_i32_0 = arith.constant 0 : i32
    %c0_i32_1 = arith.constant 0 : i32
    return %c0_i32, %c0_i32_0 : i32, i32
  }
  func.func @transform_21(%arg0: i32, %arg1: i32) -> (i32, i32) {
    %c0_i32 = arith.constant 0 : i32
    %c0_i32_0 = arith.constant 0 : i32
    %c0_i32_1 = arith.constant 0 : i32
    return %c0_i32, %c0_i32_0 : i32, i32
  }
  func.func @transform_22(%arg0: i32, %arg1: i32) -> (i32, i32, i32) {
    %c0_i32 = arith.constant 0 : i32
    %c0_i32_0 = arith.constant 0 : i32
    %c0_i32_1 = arith.constant 0 : i32
    return %arg0, %c0_i32, %c0_i32_0 : i32, i32, i32
  }
}

</mosaic_0001>

<llo_original>
// kernel: decoder_forward.1
$region0: #{decoder_forward.1}
  #allocation0 [shape = 'u32[]', space=smem, size = 0x4, offset = 0x4, fixed_abs, tag = 'smem constant byte address 0x4 - core index']
  #allocation1 [shape = 'u32[144,128]{1,0:T(1,128)}', space=vmem, size = 0x12000, scoped, tag = 'internal scratch']
  #allocation2 [shape = 'f32[16,32]{1,0:T(8,128)}', space=vmem, size = 0x2000, scoped, tag = 'scratch operand']
  #allocation3 [shape = 'f32[16,32]{1,0:T(8,128)}', space=vmem, size = 0x2000, scoped, tag = 'scratch operand']
  %s0 = inlined_call_operand.vmem [shape: f32[2,8,32], index: 0, kind: input, shape index: {}]
  %s1 = inlined_call_operand.vmem [shape: f32[2,10,32], index: 1, kind: input, shape index: {}]
  %s2 = inlined_call_operand.hbm [shape: f32[2,8,8], index: 2, kind: input, shape index: {}]
  %s3 = inlined_call_operand.vmem [shape: f32[2,1,10], index: 3, kind: input, shape index: {}]
  %s4 = inlined_call_operand.vmem [shape: bf16[2,32,96], index: 4, kind: input, shape index: {}]
  %s5 = inlined_call_operand.hbm [shape: f32[2,1,96], index: 5, kind: input, shape index: {}]
  %s6 = inlined_call_operand.vmem [shape: bf16[2,32,32], index: 6, kind: input, shape index: {}]
  %s7 = inlined_call_operand.hbm [shape: f32[2,1,32], index: 7, kind: input, shape index: {}]
  %s8 = inlined_call_operand.vmem [shape: bf16[2,32,32], index: 8, kind: input, shape index: {}]
  %s9 = inlined_call_operand.hbm [shape: f32[2,1,32], index: 9, kind: input, shape index: {}]
  %s10 = inlined_call_operand.vmem [shape: bf16[2,32,64], index: 10, kind: input, shape index: {}]
  %s11 = inlined_call_operand.hbm [shape: f32[2,1,64], index: 11, kind: input, shape index: {}]
  %s12 = inlined_call_operand.vmem [shape: bf16[2,32,32], index: 12, kind: input, shape index: {}]
  %s13 = inlined_call_operand.hbm [shape: f32[2,1,32], index: 13, kind: input, shape index: {}]
  %s14 = inlined_call_operand.vmem [shape: bf16[2,32,64], index: 14, kind: input, shape index: {}]
  %s15 = inlined_call_operand.hbm [shape: f32[2,1,64], index: 15, kind: input, shape index: {}]
  %s16 = inlined_call_operand.vmem [shape: bf16[2,64,32], index: 16, kind: input, shape index: {}]
  %s17 = inlined_call_operand.hbm [shape: f32[2,1,32], index: 17, kind: input, shape index: {}]
  %s18 = inlined_call_operand.vmem [shape: f32[2,3,32], index: 18, kind: input, shape index: {}]
  %s19 = inlined_call_operand.vmem [shape: f32[2,3,32], index: 19, kind: input, shape index: {}]
  %s20 = inlined_call_operand.hbm [shape: f32[1,32], index: 20, kind: input, shape index: {}]
  %s21 = inlined_call_operand.hbm [shape: f32[1,32], index: 21, kind: input, shape index: {}]
  %s22 = inlined_call_operand.hbm [shape: f32[2,8,32], index: 22, kind: output, shape index: {}]
  %s23 = sld [smem:[#allocation0]]
  $region169: #{decoder_forward.1} parent=0
    _
  %s25 = ssub.s32 1, %s23
  %s26 = scalar_select 0, %s25, %s23
  $region1: #{decoder_forward.1} parent=0
    #allocation4 [shape = 'u8[8192]{0}', space=vmem, size = 0x2000, scoped, tag = 'input window, operand 2, single buffered']
    #allocation5 [shape = 's32[2]{0}', space=sflag, size = 0x8, scoped, tag = 'scoped memory for decoder_forward.1']
    #allocation6 [shape = 's32[2]{0}', space=sflag, size = 0x8, scoped, tag = 'scoped memory for decoder_forward.1']
    #allocation7 [shape = 'u8[1024]{0}', space=vmem, size = 0x400, scoped, tag = 'input window, operand 5']
    #allocation8 [shape = 's32[2]{0}', space=sflag, size = 0x8, scoped, tag = 'scoped memory for decoder_forward.1']
    #allocation9 [shape = 'u8[1024]{0}', space=vmem, size = 0x400, scoped, tag = 'input window, operand 7']
    #allocation10 [shape = 'u8[1024]{0}', space=vmem, size = 0x400, scoped, tag = 'input window, operand 9']
    #allocation11 [shape = 's32[2]{0}', space=sflag, size = 0x8, scoped, tag = 'scoped memory for decoder_forward.1']
    #allocation12 [shape = 'u8[1024]{0}', space=vmem, size = 0x400, scoped, tag = 'input window, operand 11']
    #allocation13 [shape = 'u8[1024]{0}', space=vmem, size = 0x400, scoped, tag = 'input window, operand 13']
    #allocation14 [shape = 's32[2]{0}', space=sflag, size = 0x8, scoped, tag = 'scoped memory for decoder_forward.1']
    #allocation15 [shape = 'u8[1024]{0}', space=vmem, size = 0x400, scoped, tag = 'input window, operand 15']
    #allocation16 [shape = 'u8[1024]{0}', space=vmem, size = 0x400, scoped, tag = 'input window, operand 17']
    #allocation17 [shape = 's32[2]{0}', space=sflag, size = 0x8, scoped, tag = 'scoped memory for decoder_forward.1']
    #allocation18 [shape = 'u8[512]{0}', space=vmem, size = 0x400, scoped, tag = 'input window, operand 20, single buffered']
    #allocation19 [shape = 'u8[512]{0}', space=vmem, size = 0x400, scoped, tag = 'input window, operand 21, single buffered']
    #allocation20 [shape = 's32[1]{0}', space=sflag, size = 0x4, scoped, tag = 'scoped memory for decoder_forward.1']
    #allocation21 [shape = 'u8[8192]{0}', space=vmem, size = 0x2000, scoped, tag = 'output window, operand 0, single buffered']
    %27 = vsyncpa [#allocation5], 0
    %28 = vsyncpa [#allocation8], 0
    %s29 = scalar_lea.sflag [#allocation8], 1
    %30 = vsyncpa %s29, 0
    %31 = vsyncpa [#allocation11], 0
    %s32 = scalar_lea.sflag [#allocation11], 1
    %33 = vsyncpa %s32, 0
    %34 = vsyncpa [#allocation14], 0
    %s35 = scalar_lea.sflag [#allocation14], 1
    %36 = vsyncpa %s35, 0
    %37 = vsyncpa [#allocation17], 0
    %s38 = scalar_lea.sflag [#allocation17], 1
    %39 = vsyncpa %s38, 0
    %40 = vsyncpa [#allocation20], 0
    %41 = vsyncpa [#allocation6], 0
    loop: start=0, step=1, limit=4
    $region2: #{decoder_forward.1} parent=1 // loop_pre_header
      _
    $region3: #{decoder_forward.1} parent=1 // loop_header
      %s43 = sphi 0, %s47
      %p44 = scmp.ge.s32.totalorder %s43, 4
      %s50 = sphi 0, %s62
      %s51 = sphi 0, %s58
      %s52 = sphi 0, %s50
      %s53 = sphi 0, %s51
      %s54 = sphi 0, %s52
      %s55 = sphi 0, %s53
      %s65 = sphi 0, %s67
      %s68 = sphi 0, %s65
      %s69 = sphi 0, %s68
      %s85 = sphi 0, %s69
      %s91 = sphi 0, %s93
      %s94 = sphi 0, %s91
      %s95 = sphi 0, %s94
      %s111 = sphi 0, %s95
      %s117 = sphi 0, %s119
      %s120 = sphi 0, %s117
      %s121 = sphi 0, %s120
      %s137 = sphi 0, %s121
      %s143 = sphi 0, %s145
      %s146 = sphi 0, %s143
      %s147 = sphi 0, %s146
      %s163 = sphi 0, %s147
      %s169 = sphi 0, %s171
      %s172 = sphi 0, %s169
      %s173 = sphi 0, %s172
      %s189 = sphi 0, %s173
      %s195 = sphi 0, %s197
      %s198 = sphi 0, %s195
      %s199 = sphi 0, %s198
      %s215 = sphi 0, %s199
      %s221 = sphi 0, %s223
      %s224 = sphi 0, %s221
      %s225 = sphi 0, %s224
      %s241 = sphi 0, %s225
      %s247 = sphi 0, %s249
      %s250 = sphi 0, %s247
      %s251 = sphi 0, %s250
      %s267 = sphi 0, %s251
      %s273 = sphi 0, %s275
      %s276 = sphi 0, %s273
      %s277 = sphi 0, %s276
      %s293 = sphi 0, %s277
      %s299 = sphi 0, %s301
      %s302 = sphi 0, %s299
      %s303 = sphi 0, %s302
      %s319 = sphi 0, %s303
      %s325 = sphi 0, %s327
      %s328 = sphi 0, %s325
      %s329 = sphi 0, %s328
      %s345 = sphi 0, %s329
      %s351 = sphi 0, %s353
      %s354 = sphi 0, %s351
      %s355 = sphi 0, %s354
      %s371 = sphi 0, %s355
      %s377 = sphi 0, %s379
      %s380 = sphi 0, %s377
      %s381 = sphi 0, %s380
      %s397 = sphi 0, %s381
      %s403 = sphi 0, %s405
      %s406 = sphi 0, %s403
      %s407 = sphi 0, %s406
      %s423 = sphi 0, %s407
      %s429 = sphi 0, %s431
      %s432 = sphi 0, %s429
      %s433 = sphi 0, %s432
      %s449 = sphi 0, %s433
      %s455 = sphi 0, %s457
      %s458 = sphi 0, %s455
      %s459 = sphi 0, %s458
      %s475 = sphi 0, %s459
      %s481 = sphi 0, %s483
      %s484 = sphi 0, %s481
      %s485 = sphi 0, %s484
      %s501 = sphi 0, %s485
      %s507 = sphi 0, %s509
      %s510 = sphi 0, %s507
      %s511 = sphi 0, %s510
      %s527 = sphi 0, %s511
      %s533 = sphi 0, %s535
      %s536 = sphi 0, %s533
      %s537 = sphi 0, %s536
      %s553 = sphi 0, %s537
      %s559 = sphi 0, %s561
      %s562 = sphi 0, %s559
      %s563 = sphi 0, %s562
      %s579 = sphi 0, %s563
      %s583 = sphi 0, %s583
      %s585 = sphi 0, %s583
      %s586 = sphi 0, %s585
      %s600 = sphi 0, %s586
      %s604 = sphi 0, %s604
      %s606 = sphi 0, %s604
      %s607 = sphi 0, %s606
      %s621 = sphi 0, %s607
      %s627 = sphi 0, %s629
      %s630 = sphi 0, %s627
      %s631 = sphi 0, %s630
      %s647 = sphi 0, %s631
    $region4: #{decoder_forward.1} parent=1 // loop_header_branch
      %46 = sbr.rel (%p44) target = $region8
    $region5: #{decoder_forward.1} parent=1 // loop_body
      %s48 = ssub.s32 %s43, 1
      %s49 = ssub.s32 %s43, 2
      %s56 = sadd.s32 1, %s51
      %p57 = scmp.ge.s32.totalorder %s56, 2
      %s58 = scalar_select %p57, 0, %s56
      %s59 = sadd.s32 1, %s50
      %s60 = scalar_select %p57, %s59, %s50
      %p61 = scmp.ge.s32.totalorder %s60, 1
      %s62 = scalar_select %p61, 0, %s60
      %s63 = ssub.s32 %s50, %s62
      %p64 = scmp.eq.s32.totalorder %s63, 0
      %s66 = sadd.s32 %s65, 1
      %s67 = scalar_select %p64, %s65, %s66
      %p70 = pneg %p64
      %p71 = scmp.eq.s32.totalorder %s43, 1
      %p72 = por %p70, %p71
      %p73 = scmp.ne.s32.totalorder %s65, %s68
      %p74 = scmp.eq.s32.totalorder %s43, 0
      %p75 = por %p73, %p74
      %p76 = scmp.ne.s32.totalorder %s65, %s68
      %p77 = scmp.eq.s32.totalorder %s48, 1
      %p78 = por %p76, %p77
      %p79 = scmp.ne.s32.totalorder %s68, %s69
      %p80 = scmp.eq.s32.totalorder %s48, 0
      %p81 = por %p79, %p80
      %p82 = scmp.ne.s32.totalorder %s68, %s69
      %p83 = scmp.eq.s32.totalorder %s49, 1
      %p84 = por %p82, %p83
      %p86 = scmp.ne.s32.totalorder %s69, %s85
      %p87 = scmp.eq.s32.totalorder %s49, 0
      %p88 = por %p86, %p87
      %s89 = ssub.s32 %s50, %s62
      %p90 = scmp.eq.s32.totalorder %s89, 0
      %s92 = sadd.s32 %s91, 1
      %s93 = scalar_select %p90, %s91, %s92
      %p96 = pneg %p90
      %p97 = scmp.eq.s32.totalorder %s43, 1
      %p98 = por %p96, %p97
      %p99 = scmp.ne.s32.totalorder %s91, %s94
      %p100 = scmp.eq.s32.totalorder %s43, 0
      %p101 = por %p99, %p100
      %p102 = scmp.ne.s32.totalorder %s91, %s94
      %p103 = scmp.eq.s32.totalorder %s48, 1
      %p104 = por %p102, %p103
      %p105 = scmp.ne.s32.totalorder %s94, %s95
      %p106 = scmp.eq.s32.totalorder %s48, 0
      %p107 = por %p105, %p106
      %p108 = scmp.ne.s32.totalorder %s94, %s95
      %p109 = scmp.eq.s32.totalorder %s49, 1
      %p110 = por %p108, %p109
      %p112 = scmp.ne.s32.totalorder %s95, %s111
      %p113 = scmp.eq.s32.totalorder %s49, 0
      %p114 = por %p112, %p113
      %s115 = ssub.s32 %s50, %s62
      %p116 = scmp.eq.s32.totalorder %s115, 0
      %s118 = sadd.s32 %s117, 1
      %s119 = scalar_select %p116, %s117, %s118
      %p122 = pneg %p116
      %p123 = scmp.eq.s32.totalorder %s43, 1
      %p124 = por %p122, %p123
      %p125 = scmp.ne.s32.totalorder %s117, %s120
      %p126 = scmp.eq.s32.totalorder %s43, 0
      %p127 = por %p125, %p126
      %p128 = scmp.ne.s32.totalorder %s117, %s120
      %p129 = scmp.eq.s32.totalorder %s48, 1
      %p130 = por %p128, %p129
      %p131 = scmp.ne.s32.totalorder %s120, %s121
      %p132 = scmp.eq.s32.totalorder %s48, 0
      %p133 = por %p131, %p132
      %p134 = scmp.ne.s32.totalorder %s120, %s121
      %p135 = scmp.eq.s32.totalorder %s49, 1
      %p136 = por %p134, %p135
      %p138 = scmp.ne.s32.totalorder %s121, %s137
      %p139 = scmp.eq.s32.totalorder %s49, 0
      %p140 = por %p138, %p139
      %s141 = ssub.s32 %s50, %s62
      %p142 = scmp.eq.s32.totalorder %s141, 0
      %s144 = sadd.s32 %s143, 1
      %s145 = scalar_select %p142, %s143, %s144
      %p148 = pneg %p142
      %p149 = scmp.eq.s32.totalorder %s43, 1
      %p150 = por %p148, %p149
      %p151 = scmp.ne.s32.totalorder %s143, %s146
      %p152 = scmp.eq.s32.totalorder %s43, 0
      %p153 = por %p151, %p152
      %p154 = scmp.ne.s32.totalorder %s143, %s146
      %p155 = scmp.eq.s32.totalorder %s48, 1
      %p156 = por %p154, %p155
      %p157 = scmp.ne.s32.totalorder %s146, %s147
      %p158 = scmp.eq.s32.totalorder %s48, 0
      %p159 = por %p157, %p158
      %p160 = scmp.ne.s32.totalorder %s146, %s147
      %p161 = scmp.eq.s32.totalorder %s49, 1
      %p162 = por %p160, %p161
      %p164 = scmp.ne.s32.totalorder %s147, %s163
      %p165 = scmp.eq.s32.totalorder %s49, 0
      %p166 = por %p164, %p165
      %s167 = ssub.s32 %s51, %s58
      %p168 = scmp.eq.s32.totalorder %s167, 0
      %s170 = sadd.s32 %s169, 1
      %s171 = scalar_select %p168, %s169, %s170
      %p174 = pneg %p168
      %p175 = scmp.eq.s32.totalorder %s43, 1
      %p176 = por %p174, %p175
      %p177 = scmp.ne.s32.totalorder %s169, %s172
      %p178 = scmp.eq.s32.totalorder %s43, 0
      %p179 = por %p177, %p178
      %p180 = scmp.ne.s32.totalorder %s169, %s172
      %p181 = scmp.eq.s32.totalorder %s48, 1
      %p182 = por %p180, %p181
      %p183 = scmp.ne.s32.totalorder %s172, %s173
      %p184 = scmp.eq.s32.totalorder %s48, 0
      %p185 = por %p183, %p184
      %p186 = scmp.ne.s32.totalorder %s172, %s173
      %p187 = scmp.eq.s32.totalorder %s49, 1
      %p188 = por %p186, %p187
      %p190 = scmp.ne.s32.totalorder %s173, %s189
      %p191 = scmp.eq.s32.totalorder %s49, 0
      %p192 = por %p190, %p191
      %s193 = ssub.s32 %s51, %s58
      %p194 = scmp.eq.s32.totalorder %s193, 0
      %s196 = sadd.s32 %s195, 1
      %s197 = scalar_select %p194, %s195, %s196
      %p200 = pneg %p194
      %p201 = scmp.eq.s32.totalorder %s43, 1
      %p202 = por %p200, %p201
      %p203 = scmp.ne.s32.totalorder %s195, %s198
      %p204 = scmp.eq.s32.totalorder %s43, 0
      %p205 = por %p203, %p204
      %p206 = scmp.ne.s32.totalorder %s195, %s198
      %p207 = scmp.eq.s32.totalorder %s48, 1
      %p208 = por %p206, %p207
      %p209 = scmp.ne.s32.totalorder %s198, %s199
      %p210 = scmp.eq.s32.totalorder %s48, 0
      %p211 = por %p209, %p210
      %p212 = scmp.ne.s32.totalorder %s198, %s199
      %p213 = scmp.eq.s32.totalorder %s49, 1
      %p214 = por %p212, %p213
      %p216 = scmp.ne.s32.totalorder %s199, %s215
      %p217 = scmp.eq.s32.totalorder %s49, 0
      %p218 = por %p216, %p217
      %s219 = ssub.s32 %s51, %s58
      %p220 = scmp.eq.s32.totalorder %s219, 0
      %s222 = sadd.s32 %s221, 1
      %s223 = scalar_select %p220, %s221, %s222
      %p226 = pneg %p220
      %p227 = scmp.eq.s32.totalorder %s43, 1
      %p228 = por %p226, %p227
      %p229 = scmp.ne.s32.totalorder %s221, %s224
      %p230 = scmp.eq.s32.totalorder %s43, 0
      %p231 = por %p229, %p230
      %p232 = scmp.ne.s32.totalorder %s221, %s224
      %p233 = scmp.eq.s32.totalorder %s48, 1
      %p234 = por %p232, %p233
      %p235 = scmp.ne.s32.totalorder %s224, %s225
      %p236 = scmp.eq.s32.totalorder %s48, 0
      %p237 = por %p235, %p236
      %p238 = scmp.ne.s32.totalorder %s224, %s225
      %p239 = scmp.eq.s32.totalorder %s49, 1
      %p240 = por %p238, %p239
      %p242 = scmp.ne.s32.totalorder %s225, %s241
      %p243 = scmp.eq.s32.totalorder %s49, 0
      %p244 = por %p242, %p243
      %s245 = ssub.s32 %s51, %s58
      %p246 = scmp.eq.s32.totalorder %s245, 0
      %s248 = sadd.s32 %s247, 1
      %s249 = scalar_select %p246, %s247, %s248
      %p252 = pneg %p246
      %p253 = scmp.eq.s32.totalorder %s43, 1
      %p254 = por %p252, %p253
      %p255 = scmp.ne.s32.totalorder %s247, %s250
      %p256 = scmp.eq.s32.totalorder %s43, 0
      %p257 = por %p255, %p256
      %p258 = scmp.ne.s32.totalorder %s247, %s250
      %p259 = scmp.eq.s32.totalorder %s48, 1
      %p260 = por %p258, %p259
      %p261 = scmp.ne.s32.totalorder %s250, %s251
      %p262 = scmp.eq.s32.totalorder %s48, 0
      %p263 = por %p261, %p262
      %p264 = scmp.ne.s32.totalorder %s250, %s251
      %p265 = scmp.eq.s32.totalorder %s49, 1
      %p266 = por %p264, %p265
      %p268 = scmp.ne.s32.totalorder %s251, %s267
      %p269 = scmp.eq.s32.totalorder %s49, 0
      %p270 = por %p268, %p269
      %s271 = ssub.s32 %s51, %s58
      %p272 = scmp.eq.s32.totalorder %s271, 0
      %s274 = sadd.s32 %s273, 1
      %s275 = scalar_select %p272, %s273, %s274
      %p278 = pneg %p272
      %p279 = scmp.eq.s32.totalorder %s43, 1
      %p280 = por %p278, %p279
      %p281 = scmp.ne.s32.totalorder %s273, %s276
      %p282 = scmp.eq.s32.totalorder %s43, 0
      %p283 = por %p281, %p282
      %p284 = scmp.ne.s32.totalorder %s273, %s276
      %p285 = scmp.eq.s32.totalorder %s48, 1
      %p286 = por %p284, %p285
      %p287 = scmp.ne.s32.totalorder %s276, %s277
      %p288 = scmp.eq.s32.totalorder %s48, 0
      %p289 = por %p287, %p288
      %p290 = scmp.ne.s32.totalorder %s276, %s277
      %p291 = scmp.eq.s32.totalorder %s49, 1
      %p292 = por %p290, %p291
      %p294 = scmp.ne.s32.totalorder %s277, %s293
      %p295 = scmp.eq.s32.totalorder %s49, 0
      %p296 = por %p294, %p295
      %s297 = ssub.s32 %s51, %s58
      %p298 = scmp.eq.s32.totalorder %s297, 0
      %s300 = sadd.s32 %s299, 1
      %s301 = scalar_select %p298, %s299, %s300
      %p304 = pneg %p298
      %p305 = scmp.eq.s32.totalorder %s43, 1
      %p306 = por %p304, %p305
      %p307 = scmp.ne.s32.totalorder %s299, %s302
      %p308 = scmp.eq.s32.totalorder %s43, 0
      %p309 = por %p307, %p308
      %p310 = scmp.ne.s32.totalorder %s299, %s302
      %p311 = scmp.eq.s32.totalorder %s48, 1
      %p312 = por %p310, %p311
      %p313 = scmp.ne.s32.totalorder %s302, %s303
      %p314 = scmp.eq.s32.totalorder %s48, 0
      %p315 = por %p313, %p314
      %p316 = scmp.ne.s32.totalorder %s302, %s303
      %p317 = scmp.eq.s32.totalorder %s49, 1
      %p318 = por %p316, %p317
      %p320 = scmp.ne.s32.totalorder %s303, %s319
      %p321 = scmp.eq.s32.totalorder %s49, 0
      %p322 = por %p320, %p321
      %s323 = ssub.s32 %s51, %s58
      %p324 = scmp.eq.s32.totalorder %s323, 0
      %s326 = sadd.s32 %s325, 1
      %s327 = scalar_select %p324, %s325, %s326
      %p330 = pneg %p324
      %p331 = scmp.eq.s32.totalorder %s43, 1
      %p332 = por %p330, %p331
      %p333 = scmp.ne.s32.totalorder %s325, %s328
      %p334 = scmp.eq.s32.totalorder %s43, 0
      %p335 = por %p333, %p334
      %p336 = scmp.ne.s32.totalorder %s325, %s328
      %p337 = scmp.eq.s32.totalorder %s48, 1
      %p338 = por %p336, %p337
      %p339 = scmp.ne.s32.totalorder %s328, %s329
      %p340 = scmp.eq.s32.totalorder %s48, 0
      %p341 = por %p339, %p340
      %p342 = scmp.ne.s32.totalorder %s328, %s329
      %p343 = scmp.eq.s32.totalorder %s49, 1
      %p344 = por %p342, %p343
      %p346 = scmp.ne.s32.totalorder %s329, %s345
      %p347 = scmp.eq.s32.totalorder %s49, 0
      %p348 = por %p346, %p347
      %s349 = ssub.s32 %s51, %s58
      %p350 = scmp.eq.s32.totalorder %s349, 0
      %s352 = sadd.s32 %s351, 1
      %s353 = scalar_select %p350, %s351, %s352
      %p356 = pneg %p350
      %p357 = scmp.eq.s32.totalorder %s43, 1
      %p358 = por %p356, %p357
      %p359 = scmp.ne.s32.totalorder %s351, %s354
      %p360 = scmp.eq.s32.totalorder %s43, 0
      %p361 = por %p359, %p360
      %p362 = scmp.ne.s32.totalorder %s351, %s354
      %p363 = scmp.eq.s32.totalorder %s48, 1
      %p364 = por %p362, %p363
      %p365 = scmp.ne.s32.totalorder %s354, %s355
      %p366 = scmp.eq.s32.totalorder %s48, 0
      %p367 = por %p365, %p366
      %p368 = scmp.ne.s32.totalorder %s354, %s355
      %p369 = scmp.eq.s32.totalorder %s49, 1
      %p370 = por %p368, %p369
      %p372 = scmp.ne.s32.totalorder %s355, %s371
      %p373 = scmp.eq.s32.totalorder %s49, 0
      %p374 = por %p372, %p373
      %s375 = ssub.s32 %s51, %s58
      %p376 = scmp.eq.s32.totalorder %s375, 0
      %s378 = sadd.s32 %s377, 1
      %s379 = scalar_select %p376, %s377, %s378
      %p382 = pneg %p376
      %p383 = scmp.eq.s32.totalorder %s43, 1
      %p384 = por %p382, %p383
      %p385 = scmp.ne.s32.totalorder %s377, %s380
      %p386 = scmp.eq.s32.totalorder %s43, 0
      %p387 = por %p385, %p386
      %p388 = scmp.ne.s32.totalorder %s377, %s380
      %p389 = scmp.eq.s32.totalorder %s48, 1
      %p390 = por %p388, %p389
      %p391 = scmp.ne.s32.totalorder %s380, %s381
      %p392 = scmp.eq.s32.totalorder %s48, 0
      %p393 = por %p391, %p392
      %p394 = scmp.ne.s32.totalorder %s380, %s381
      %p395 = scmp.eq.s32.totalorder %s49, 1
      %p396 = por %p394, %p395
      %p398 = scmp.ne.s32.totalorder %s381, %s397
      %p399 = scmp.eq.s32.totalorder %s49, 0
      %p400 = por %p398, %p399
      %s401 = ssub.s32 %s51, %s58
      %p402 = scmp.eq.s32.totalorder %s401, 0
      %s404 = sadd.s32 %s403, 1
      %s405 = scalar_select %p402, %s403, %s404
      %p408 = pneg %p402
      %p409 = scmp.eq.s32.totalorder %s43, 1
      %p410 = por %p408, %p409
      %p411 = scmp.ne.s32.totalorder %s403, %s406
      %p412 = scmp.eq.s32.totalorder %s43, 0
      %p413 = por %p411, %p412
      %p414 = scmp.ne.s32.totalorder %s403, %s406
      %p415 = scmp.eq.s32.totalorder %s48, 1
      %p416 = por %p414, %p415
      %p417 = scmp.ne.s32.totalorder %s406, %s407
      %p418 = scmp.eq.s32.totalorder %s48, 0
      %p419 = por %p417, %p418
      %p420 = scmp.ne.s32.totalorder %s406, %s407
      %p421 = scmp.eq.s32.totalorder %s49, 1
      %p422 = por %p420, %p421
      %p424 = scmp.ne.s32.totalorder %s407, %s423
      %p425 = scmp.eq.s32.totalorder %s49, 0
      %p426 = por %p424, %p425
      %s427 = ssub.s32 %s51, %s58
      %p428 = scmp.eq.s32.totalorder %s427, 0
      %s430 = sadd.s32 %s429, 1
      %s431 = scalar_select %p428, %s429, %s430
      %p434 = pneg %p428
      %p435 = scmp.eq.s32.totalorder %s43, 1
      %p436 = por %p434, %p435
      %p437 = scmp.ne.s32.totalorder %s429, %s432
      %p438 = scmp.eq.s32.totalorder %s43, 0
      %p439 = por %p437, %p438
      %p440 = scmp.ne.s32.totalorder %s429, %s432
      %p441 = scmp.eq.s32.totalorder %s48, 1
      %p442 = por %p440, %p441
      %p443 = scmp.ne.s32.totalorder %s432, %s433
      %p444 = scmp.eq.s32.totalorder %s48, 0
      %p445 = por %p443, %p444
      %p446 = scmp.ne.s32.totalorder %s432, %s433
      %p447 = scmp.eq.s32.totalorder %s49, 1
      %p448 = por %p446, %p447
      %p450 = scmp.ne.s32.totalorder %s433, %s449
      %p451 = scmp.eq.s32.totalorder %s49, 0
      %p452 = por %p450, %p451
      %s453 = ssub.s32 %s51, %s58
      %p454 = scmp.eq.s32.totalorder %s453, 0
      %s456 = sadd.s32 %s455, 1
      %s457 = scalar_select %p454, %s455, %s456
      %p460 = pneg %p454
      %p461 = scmp.eq.s32.totalorder %s43, 1
      %p462 = por %p460, %p461
      %p463 = scmp.ne.s32.totalorder %s455, %s458
      %p464 = scmp.eq.s32.totalorder %s43, 0
      %p465 = por %p463, %p464
      %p466 = scmp.ne.s32.totalorder %s455, %s458
      %p467 = scmp.eq.s32.totalorder %s48, 1
      %p468 = por %p466, %p467
      %p469 = scmp.ne.s32.totalorder %s458, %s459
      %p470 = scmp.eq.s32.totalorder %s48, 0
      %p471 = por %p469, %p470
      %p472 = scmp.ne.s32.totalorder %s458, %s459
      %p473 = scmp.eq.s32.totalorder %s49, 1
      %p474 = por %p472, %p473
      %p476 = scmp.ne.s32.totalorder %s459, %s475
      %p477 = scmp.eq.s32.totalorder %s49, 0
      %p478 = por %p476, %p477
      %s479 = ssub.s32 %s51, %s58
      %p480 = scmp.eq.s32.totalorder %s479, 0
      %s482 = sadd.s32 %s481, 1
      %s483 = scalar_select %p480, %s481, %s482
      %p486 = pneg %p480
      %p487 = scmp.eq.s32.totalorder %s43, 1
      %p488 = por %p486, %p487
      %p489 = scmp.ne.s32.totalorder %s481, %s484
      %p490 = scmp.eq.s32.totalorder %s43, 0
      %p491 = por %p489, %p490
      %p492 = scmp.ne.s32.totalorder %s481, %s484
      %p493 = scmp.eq.s32.totalorder %s48, 1
      %p494 = por %p492, %p493
      %p495 = scmp.ne.s32.totalorder %s484, %s485
      %p496 = scmp.eq.s32.totalorder %s48, 0
      %p497 = por %p495, %p496
      %p498 = scmp.ne.s32.totalorder %s484, %s485
      %p499 = scmp.eq.s32.totalorder %s49, 1
      %p500 = por %p498, %p499
      %p502 = scmp.ne.s32.totalorder %s485, %s501
      %p503 = scmp.eq.s32.totalorder %s49, 0
      %p504 = por %p502, %p503
      %s505 = ssub.s32 %s51, %s58
      %p506 = scmp.eq.s32.totalorder %s505, 0
      %s508 = sadd.s32 %s507, 1
      %s509 = scalar_select %p506, %s507, %s508
      %p512 = pneg %p506
      %p513 = scmp.eq.s32.totalorder %s43, 1
      %p514 = por %p512, %p513
      %p515 = scmp.ne.s32.totalorder %s507, %s510
      %p516 = scmp.eq.s32.totalorder %s43, 0
      %p517 = por %p515, %p516
      %p518 = scmp.ne.s32.totalorder %s507, %s510
      %p519 = scmp.eq.s32.totalorder %s48, 1
      %p520 = por %p518, %p519
      %p521 = scmp.ne.s32.totalorder %s510, %s511
      %p522 = scmp.eq.s32.totalorder %s48, 0
      %p523 = por %p521, %p522
      %p524 = scmp.ne.s32.totalorder %s510, %s511
      %p525 = scmp.eq.s32.totalorder %s49, 1
      %p526 = por %p524, %p525
      %p528 = scmp.ne.s32.totalorder %s511, %s527
      %p529 = scmp.eq.s32.totalorder %s49, 0
      %p530 = por %p528, %p529
      %s531 = ssub.s32 %s51, %s58
      %p532 = scmp.eq.s32.totalorder %s531, 0
      %s534 = sadd.s32 %s533, 1
      %s535 = scalar_select %p532, %s533, %s534
      %p538 = pneg %p532
      %p539 = scmp.eq.s32.totalorder %s43, 1
      %p540 = por %p538, %p539
      %p541 = scmp.ne.s32.totalorder %s533, %s536
      %p542 = scmp.eq.s32.totalorder %s43, 0
      %p543 = por %p541, %p542
      %p544 = scmp.ne.s32.totalorder %s533, %s536
      %p545 = scmp.eq.s32.totalorder %s48, 1
      %p546 = por %p544, %p545
      %p547 = scmp.ne.s32.totalorder %s536, %s537
      %p548 = scmp.eq.s32.totalorder %s48, 0
      %p549 = por %p547, %p548
      %p550 = scmp.ne.s32.totalorder %s536, %s537
      %p551 = scmp.eq.s32.totalorder %s49, 1
      %p552 = por %p550, %p551
      %p554 = scmp.ne.s32.totalorder %s537, %s553
      %p555 = scmp.eq.s32.totalorder %s49, 0
      %p556 = por %p554, %p555
      %s557 = ssub.s32 %s51, %s58
      %p558 = scmp.eq.s32.totalorder %s557, 0
      %s560 = sadd.s32 %s559, 1
      %s561 = scalar_select %p558, %s559, %s560
      %p564 = pneg %p558
      %p565 = scmp.eq.s32.totalorder %s43, 1
      %p566 = por %p564, %p565
      %p567 = scmp.ne.s32.totalorder %s559, %s562
      %p568 = scmp.eq.s32.totalorder %s43, 0
      %p569 = por %p567, %p568
      %p570 = scmp.ne.s32.totalorder %s559, %s562
      %p571 = scmp.eq.s32.totalorder %s48, 1
      %p572 = por %p570, %p571
      %p573 = scmp.ne.s32.totalorder %s562, %s563
      %p574 = scmp.eq.s32.totalorder %s48, 0
      %p575 = por %p573, %p574
      %p576 = scmp.ne.s32.totalorder %s562, %s563
      %p577 = scmp.eq.s32.totalorder %s49, 1
      %p578 = por %p576, %p577
      %p580 = scmp.ne.s32.totalorder %s563, %s579
      %p581 = scmp.eq.s32.totalorder %s49, 0
      %p582 = por %p580, %p581
      %s584 = sadd.s32 %s583, 1
      %p587 = scmp.eq.s32.totalorder %s43, 1
      %p588 = scmp.ne.s32.totalorder %s583, %s585
      %p589 = scmp.eq.s32.totalorder %s43, 0
      %p590 = por %p588, %p589
      %p591 = scmp.ne.s32.totalorder %s583, %s585
      %p592 = scmp.eq.s32.totalorder %s48, 1
      %p593 = por %p591, %p592
      %p594 = scmp.ne.s32.totalorder %s585, %s586
      %p595 = scmp.eq.s32.totalorder %s48, 0
      %p596 = por %p594, %p595
      %p597 = scmp.ne.s32.totalorder %s585, %s586
      %p598 = scmp.eq.s32.totalorder %s49, 1
      %p599 = por %p597, %p598
      %p601 = scmp.ne.s32.totalorder %s586, %s600
      %p602 = scmp.eq.s32.totalorder %s49, 0
      %p603 = por %p601, %p602
      %s605 = sadd.s32 %s604, 1
      %p608 = scmp.eq.s32.totalorder %s43, 1
      %p609 = scmp.ne.s32.totalorder %s604, %s606
      %p610 = scmp.eq.s32.totalorder %s43, 0
      %p611 = por %p609, %p610
      %p612 = scmp.ne.s32.totalorder %s604, %s606
      %p613 = scmp.eq.s32.totalorder %s48, 1
      %p614 = por %p612, %p613
      %p615 = scmp.ne.s32.totalorder %s606, %s607
      %p616 = scmp.eq.s32.totalorder %s48, 0
      %p617 = por %p615, %p616
      %p618 = scmp.ne.s32.totalorder %s606, %s607
      %p619 = scmp.eq.s32.totalorder %s49, 1
      %p620 = por %p618, %p619
      %p622 = scmp.ne.s32.totalorder %s607, %s621
      %p623 = scmp.eq.s32.totalorder %s49, 0
      %p624 = por %p622, %p623
      %s625 = ssub.s32 %s50, %s62
      %p626 = scmp.eq.s32.totalorder %s625, 0
      %s628 = sadd.s32 %s627, 1
      %s629 = scalar_select %p626, %s627, %s628
      %p632 = pneg %p626
      %p633 = scmp.eq.s32.totalorder %s43, 1
      %p634 = por %p632, %p633
      %p635 = scmp.ne.s32.totalorder %s627, %s630
      %p636 = scmp.eq.s32.totalorder %s43, 0
      %p637 = por %p635, %p636
      %p638 = scmp.ne.s32.totalorder %s627, %s630
      %p639 = scmp.eq.s32.totalorder %s48, 1
      %p640 = por %p638, %p639
      %p641 = scmp.ne.s32.totalorder %s630, %s631
      %p642 = scmp.eq.s32.totalorder %s48, 0
      %p643 = por %p641, %p642
      %p644 = scmp.ne.s32.totalorder %s630, %s631
      %p645 = scmp.eq.s32.totalorder %s49, 1
      %p646 = por %p644, %p645
      %p648 = scmp.ne.s32.totalorder %s631, %s647
      %p649 = scmp.eq.s32.totalorder %s49, 0
      %p650 = por %p648, %p649
      %p651 = scmp.le.s32.totalorder 1, %s43
      %p652 = scmp.lt.s32.totalorder %s43, 3
      %p653 = pnand %p651, %p652
      %p654 = pneg %p653
      // Predicated region
      $region9: #{decoder_forward.1} parent=5 // pred_check
        _
      $region10: #{decoder_forward.1} parent=5 // pred_check_branch
        %656 = sbr.rel (%p653) target = $region12
      $region11: #{decoder_forward.1} parent=5 // pred_region
        %s657 = ssub.s32 %s43, 1
        // Predicated region
        $region13: #{decoder_forward.1} parent=11 // pred_check
          %p658 = pneg %p81
        $region14: #{decoder_forward.1} parent=11 // pred_check_branch
          %660 = sbr.rel (%p658) target = $region16
        $region15: #{decoder_forward.1} parent=11 // pred_region
          %s661 = smul.u32 2, %s52
          %p662 = scmp.lt.s32.totalorder %s661, 1
          %s663 = scalar_select %p662, %s661, 1
          %s664 = smul.addr %s663, 8
          %s665 = scalar_lea.vmem %s0, %s664
          %s666 = smul.u32 2, %s52
        $region16: #{decoder_forward.1} parent=11 // pred_fallthru
          _
        // Predicated region
        $region17: #{decoder_forward.1} parent=11 // pred_check
          %p667 = pneg %p107
        $region18: #{decoder_forward.1} parent=11 // pred_check_branch
          %669 = sbr.rel (%p667) target = $region20
        $region19: #{decoder_forward.1} parent=11 // pred_region
          %s670 = smul.u32 2, %s52
          %p671 = scmp.lt.s32.totalorder %s670, 1
          %s672 = scalar_select %p671, %s670, 1
          %s673 = smul.addr %s672, 2
          %s674 = smul.addr %s673, 8
          %s675 = scalar_lea.vmem %s1, %s674
          %s676 = smul.u32 2, %s52
        $region20: #{decoder_forward.1} parent=11 // pred_fallthru
          _
        // Predicated region
        $region21: #{decoder_forward.1} parent=11 // pred_check
          %p677 = pneg %p133
        $region22: #{decoder_forward.1} parent=11 // pred_check_branch
          %679 = sbr.rel (%p677) target = $region24
        $region23: #{decoder_forward.1} parent=11 // pred_region
          %s680 = smul.u32 2, %s52
          %s682 = ssub.s32 256, 256
          %683 = vsyncadd [#allocation5], %s682
          %s684 = smul.addr %s680, 128
          %s685 = scalar_lea.hbm %s2, %s684
          %s686 = sshll.u32 [#allocation4], 4
          %s687 = int_to_ptr.vmem [resolvable:$true] %s686
          %692 = dma.hbm_to_vmem [thread:$0]  %s685, 256, %s687, [#allocation5], 128, 128, 8
        $region24: #{decoder_forward.1} parent=11 // pred_fallthru
          _
        // Predicated region
        $region25: #{decoder_forward.1} parent=11 // pred_check
          %p693 = pneg %p159
        $region26: #{decoder_forward.1} parent=11 // pred_check_branch
          %695 = sbr.rel (%p693) target = $region28
        $region27: #{decoder_forward.1} parent=11 // pred_region
          %s696 = smul.u32 2, %s52
          %p697 = scmp.lt.s32.totalorder %s696, 1
          %s698 = scalar_select %p697, %s696, 1
          %s699 = scalar_lea.vmem %s3, %s698
          %s700 = smul.u32 2, %s52
        $region28: #{decoder_forward.1} parent=11 // pred_fallthru
          _
        // Predicated region
        $region29: #{decoder_forward.1} parent=11 // pred_check
          %p701 = pneg %p596
        $region30: #{decoder_forward.1} parent=11 // pred_check_branch
          %703 = sbr.rel (%p701) target = $region32
        $region31: #{decoder_forward.1} parent=11 // pred_region
          %s705 = ssub.s32 16, 16
          %706 = vsyncadd [#allocation17], %s705
          %s708 = sshll.u32 [#allocation18], 4
          %s709 = int_to_ptr.vmem [resolvable:$true] %s708
          %711 = dma.hbm_to_vmem [thread:$0]  %s20, 16, %s709, [#allocation17]
        $region32: #{decoder_forward.1} parent=11 // pred_fallthru
          _
        // Predicated region
        $region33: #{decoder_forward.1} parent=11 // pred_check
          %p712 = pneg %p617
        $region34: #{decoder_forward.1} parent=11 // pred_check_branch
          %714 = sbr.rel (%p712) target = $region36
        $region35: #{decoder_forward.1} parent=11 // pred_region
          %s716 = ssub.s32 16, 16
          %717 = vsyncadd [#allocation20], %s716
          %s719 = sshll.u32 [#allocation19], 4
          %s720 = int_to_ptr.vmem [resolvable:$true] %s719
          %722 = dma.hbm_to_vmem [thread:$0]  %s21, 16, %s720, [#allocation20]
        $region36: #{decoder_forward.1} parent=11 // pred_fallthru
          _
      $region12: #{decoder_forward.1} parent=5 // pred_fallthru
        _
      %p723 = scmp.lt.s32.totalorder %s43, 2
      // Predicated region
      $region37: #{decoder_forward.1} parent=5 // pred_check
        %p724 = pneg %p723
      $region38: #{decoder_forward.1} parent=5 // pred_check_branch
        %726 = sbr.rel (%p724) target = $region40
      $region39: #{decoder_forward.1} parent=5 // pred_region
        // Predicated region
        $region41: #{decoder_forward.1} parent=39 // pred_check
          %p727 = pneg %p179
        $region42: #{decoder_forward.1} parent=39 // pred_check_branch
          %729 = sbr.rel (%p727) target = $region44
        $region43: #{decoder_forward.1} parent=39 // pred_region
          %p730 = scmp.lt.s32.totalorder %s51, 1
          %s731 = scalar_select %p730, %s51, 1
          %s732 = smul.addr %s731, 4
          %s733 = smul.addr %s732, 4
          %s734 = scalar_lea.vmem %s4, %s733
        $region44: #{decoder_forward.1} parent=39 // pred_fallthru
          _
        // Predicated region
        $region45: #{decoder_forward.1} parent=39 // pred_check
          %p735 = pneg %p205
        $region46: #{decoder_forward.1} parent=39 // pred_check_branch
          %737 = sbr.rel (%p735) target = $region48
        $region47: #{decoder_forward.1} parent=39 // pred_region
          %s738 = sand.u32 %s43, 1
          %s739 = scalar_lea.sflag [#allocation8], %s738
          %s740 = sand.u32 %s195, 1
          %s741 = scalar_lea.vmem [#allocation7], %s740
          %s743 = ssub.s32 16, 16
          %744 = vsyncadd %s739, %s743
          %s745 = smul.addr %s51, 16
          %s746 = scalar_lea.hbm %s5, %s745
          %s748 = sshll.u32 %s741, 4
          %s749 = int_to_ptr.vmem [resolvable:$true] %s748
          %751 = dma.hbm_to_vmem [thread:$0]  %s746, 16, %s749, %s739
        $region48: #{decoder_forward.1} parent=39 // pred_fallthru
          _
        // Predicated region
        $region49: #{decoder_forward.1} parent=39 // pred_check
          %p752 = pneg %p231
        $region50: #{decoder_forward.1} parent=39 // pred_check_branch
          %754 = sbr.rel (%p752) target = $region52
        $region51: #{decoder_forward.1} parent=39 // pred_region
          %p755 = scmp.lt.s32.totalorder %s51, 1
          %s756 = scalar_select %p755, %s51, 1
          %s757 = smul.addr %s756, 4
          %s758 = smul.addr %s757, 4
          %s759 = scalar_lea.vmem %s6, %s758
        $region52: #{decoder_forward.1} parent=39 // pred_fallthru
          _
        // Predicated region
        $region53: #{decoder_forward.1} parent=39 // pred_check
          %p760 = pneg %p257
        $region54: #{decoder_forward.1} parent=39 // pred_check_branch
          %762 = sbr.rel (%p760) target = $region56
        $region55: #{decoder_forward.1} parent=39 // pred_region
          %s763 = sand.u32 %s43, 1
          %s764 = scalar_lea.sflag [#allocation8], %s763
          %s765 = sand.u32 %s247, 1
          %s766 = scalar_lea.vmem [#allocation9], %s765
          %s768 = ssub.s32 16, 16
          %769 = vsyncadd %s764, %s768
          %s770 = smul.addr %s51, 16
          %s771 = scalar_lea.hbm %s7, %s770
          %s773 = sshll.u32 %s766, 4
          %s774 = int_to_ptr.vmem [resolvable:$true] %s773
          %776 = dma.hbm_to_vmem [thread:$0]  %s771, 16, %s774, %s764
        $region56: #{decoder_forward.1} parent=39 // pred_fallthru
          _
        // Predicated region
        $region57: #{decoder_forward.1} parent=39 // pred_check
          %p777 = pneg %p283
        $region58: #{decoder_forward.1} parent=39 // pred_check_branch
          %779 = sbr.rel (%p777) target = $region60
        $region59: #{decoder_forward.1} parent=39 // pred_region
          %p780 = scmp.lt.s32.totalorder %s51, 1
          %s781 = scalar_select %p780, %s51, 1
          %s782 = smul.addr %s781, 4
          %s783 = smul.addr %s782, 4
          %s784 = scalar_lea.vmem %s8, %s783
        $region60: #{decoder_forward.1} parent=39 // pred_fallthru
          _
        // Predicated region
        $region61: #{decoder_forward.1} parent=39 // pred_check
          %p785 = pneg %p309
        $region62: #{decoder_forward.1} parent=39 // pred_check_branch
          %787 = sbr.rel (%p785) target = $region64
        $region63: #{decoder_forward.1} parent=39 // pred_region
          %s788 = sand.u32 %s43, 1
          %s789 = scalar_lea.sflag [#allocation11], %s788
          %s790 = sand.u32 %s299, 1
          %s791 = scalar_lea.vmem [#allocation10], %s790
          %s793 = ssub.s32 16, 16
          %794 = vsyncadd %s789, %s793
          %s795 = smul.addr %s51, 16
          %s796 = scalar_lea.hbm %s9, %s795
          %s798 = sshll.u32 %s791, 4
          %s799 = int_to_ptr.vmem [resolvable:$true] %s798
          %801 = dma.hbm_to_vmem [thread:$0]  %s796, 16, %s799, %s789
        $region64: #{decoder_forward.1} parent=39 // pred_fallthru
          _
        // Predicated region
        $region65: #{decoder_forward.1} parent=39 // pred_check
          %p802 = pneg %p335
        $region66: #{decoder_forward.1} parent=39 // pred_check_branch
          %804 = sbr.rel (%p802) target = $region68
        $region67: #{decoder_forward.1} parent=39 // pred_region
          %p805 = scmp.lt.s32.totalorder %s51, 1
          %s806 = scalar_select %p805, %s51, 1
          %s807 = smul.addr %s806, 4
          %s808 = smul.addr %s807, 4
          %s809 = scalar_lea.vmem %s10, %s808
        $region68: #{decoder_forward.1} parent=39 // pred_fallthru
          _
        // Predicated region
        $region69: #{decoder_forward.1} parent=39 // pred_check
          %p810 = pneg %p361
        $region70: #{decoder_forward.1} parent=39 // pred_check_branch
          %812 = sbr.rel (%p810) target = $region72
        $region71: #{decoder_forward.1} parent=39 // pred_region
          %s813 = sand.u32 %s43, 1
          %s814 = scalar_lea.sflag [#allocation11], %s813
          %s815 = sand.u32 %s351, 1
          %s816 = scalar_lea.vmem [#allocation12], %s815
          %s818 = ssub.s32 16, 16
          %819 = vsyncadd %s814, %s818
          %s820 = smul.addr %s51, 16
          %s821 = scalar_lea.hbm %s11, %s820
          %s823 = sshll.u32 %s816, 4
          %s824 = int_to_ptr.vmem [resolvable:$true] %s823
          %826 = dma.hbm_to_vmem [thread:$0]  %s821, 16, %s824, %s814
        $region72: #{decoder_forward.1} parent=39 // pred_fallthru
          _
        // Predicated region
        $region73: #{decoder_forward.1} parent=39 // pred_check
          %p827 = pneg %p387
        $region74: #{decoder_forward.1} parent=39 // pred_check_branch
          %829 = sbr.rel (%p827) target = $region76
        $region75: #{decoder_forward.1} parent=39 // pred_region
          %p830 = scmp.lt.s32.totalorder %s51, 1
          %s831 = scalar_select %p830, %s51, 1
          %s832 = smul.addr %s831, 4
          %s833 = smul.addr %s832, 4
          %s834 = scalar_lea.vmem %s12, %s833
        $region76: #{decoder_forward.1} parent=39 // pred_fallthru
          _
        // Predicated region
        $region77: #{decoder_forward.1} parent=39 // pred_check
          %p835 = pneg %p413
        $region78: #{decoder_forward.1} parent=39 // pred_check_branch
          %837 = sbr.rel (%p835) target = $region80
        $region79: #{decoder_forward.1} parent=39 // pred_region
          %s838 = sand.u32 %s43, 1
          %s839 = scalar_lea.sflag [#allocation14], %s838
          %s840 = sand.u32 %s403, 1
          %s841 = scalar_lea.vmem [#allocation13], %s840
          %s843 = ssub.s32 16, 16
          %844 = vsyncadd %s839, %s843
          %s845 = smul.addr %s51, 16
          %s846 = scalar_lea.hbm %s13, %s845
          %s848 = sshll.u32 %s841, 4
          %s849 = int_to_ptr.vmem [resolvable:$true] %s848
          %851 = dma.hbm_to_vmem [thread:$0]  %s846, 16, %s849, %s839
        $region80: #{decoder_forward.1} parent=39 // pred_fallthru
          _
        // Predicated region
        $region81: #{decoder_forward.1} parent=39 // pred_check
          %p852 = pneg %p439
        $region82: #{decoder_forward.1} parent=39 // pred_check_branch
          %854 = sbr.rel (%p852) target = $region84
        $region83: #{decoder_forward.1} parent=39 // pred_region
          %p855 = scmp.lt.s32.totalorder %s51, 1
          %s856 = scalar_select %p855, %s51, 1
          %s857 = smul.addr %s856, 4
          %s858 = smul.addr %s857, 4
          %s859 = scalar_lea.vmem %s14, %s858
        $region84: #{decoder_forward.1} parent=39 // pred_fallthru
          _
        // Predicated region
        $region85: #{decoder_forward.1} parent=39 // pred_check
          %p860 = pneg %p465
        $region86: #{decoder_forward.1} parent=39 // pred_check_branch
          %862 = sbr.rel (%p860) target = $region88
        $region87: #{decoder_forward.1} parent=39 // pred_region
          %s863 = sand.u32 %s43, 1
          %s864 = scalar_lea.sflag [#allocation14], %s863
          %s865 = sand.u32 %s455, 1
          %s866 = scalar_lea.vmem [#allocation15], %s865
          %s868 = ssub.s32 16, 16
          %869 = vsyncadd %s864, %s868
          %s870 = smul.addr %s51, 16
          %s871 = scalar_lea.hbm %s15, %s870
          %s873 = sshll.u32 %s866, 4
          %s874 = int_to_ptr.vmem [resolvable:$true] %s873
          %876 = dma.hbm_to_vmem [thread:$0]  %s871, 16, %s874, %s864
        $region88: #{decoder_forward.1} parent=39 // pred_fallthru
          _
        // Predicated region
        $region89: #{decoder_forward.1} parent=39 // pred_check
          %p877 = pneg %p491
        $region90: #{decoder_forward.1} parent=39 // pred_check_branch
          %879 = sbr.rel (%p877) target = $region92
        $region91: #{decoder_forward.1} parent=39 // pred_region
          %p880 = scmp.lt.s32.totalorder %s51, 1
          %s881 = scalar_select %p880, %s51, 1
          %s882 = smul.addr %s881, 8
          %s883 = smul.addr %s882, 4
          %s884 = scalar_lea.vmem %s16, %s883
        $region92: #{decoder_forward.1} parent=39 // pred_fallthru
          _
        // Predicated region
        $region93: #{decoder_forward.1} parent=39 // pred_check
          %p885 = pneg %p517
        $region94: #{decoder_forward.1} parent=39 // pred_check_branch
          %887 = sbr.rel (%p885) target = $region96
        $region95: #{decoder_forward.1} parent=39 // pred_region
          %s888 = sand.u32 %s43, 1
          %s889 = scalar_lea.sflag [#allocation17], %s888
          %s890 = sand.u32 %s507, 1
          %s891 = scalar_lea.vmem [#allocation16], %s890
          %s893 = ssub.s32 16, 16
          %894 = vsyncadd %s889, %s893
          %s895 = smul.addr %s51, 16
          %s896 = scalar_lea.hbm %s17, %s895
          %s898 = sshll.u32 %s891, 4
          %s899 = int_to_ptr.vmem [resolvable:$true] %s898
          %901 = dma.hbm_to_vmem [thread:$0]  %s896, 16, %s899, %s889
        $region96: #{decoder_forward.1} parent=39 // pred_fallthru
          _
        // Predicated region
        $region97: #{decoder_forward.1} parent=39 // pred_check
          %p902 = pneg %p543
        $region98: #{decoder_forward.1} parent=39 // pred_check_branch
          %904 = sbr.rel (%p902) target = $region100
        $region99: #{decoder_forward.1} parent=39 // pred_region
          %p905 = scmp.lt.s32.totalorder %s51, 1
          %s906 = scalar_select %p905, %s51, 1
          %s907 = smul.addr %s906, 4
          %s908 = scalar_lea.vmem %s18, %s907
        $region100: #{decoder_forward.1} parent=39 // pred_fallthru
          _
        // Predicated region
        $region101: #{decoder_forward.1} parent=39 // pred_check
          %p909 = pneg %p569
        $region102: #{decoder_forward.1} parent=39 // pred_check_branch
          %911 = sbr.rel (%p909) target = $region104
        $region103: #{decoder_forward.1} parent=39 // pred_region
          %p912 = scmp.lt.s32.totalorder %s51, 1
          %s913 = scalar_select %p912, %s51, 1
          %s914 = smul.addr %s913, 4
          %s915 = scalar_lea.vmem %s19, %s914
        $region104: #{decoder_forward.1} parent=39 // pred_fallthru
          _
      $region40: #{decoder_forward.1} parent=5 // pred_fallthru
        _
      %p916 = scmp.le.s32.totalorder 1, %s43
      %p917 = scmp.lt.s32.totalorder %s43, 3
      %p918 = pnand %p916, %p917
      %p919 = pneg %p918
      // Predicated region
      $region105: #{decoder_forward.1} parent=5 // pred_check
        _
      $region106: #{decoder_forward.1} parent=5 // pred_check_branch
        %921 = sbr.rel (%p918) target = $region108
      $region107: #{decoder_forward.1} parent=5 // pred_region
        %s922 = ssub.s32 %s43, 1
        // Predicated region
        $region109: #{decoder_forward.1} parent=107 // pred_check
          %p923 = pneg %p133
        $region110: #{decoder_forward.1} parent=107 // pred_check_branch
          %925 = sbr.rel (%p923) target = $region112
        $region111: #{decoder_forward.1} parent=107 // pred_region
          %926 = dma.done [#allocation5], 256
        $region112: #{decoder_forward.1} parent=107 // pred_fallthru
          _
        %s927 = sand.u32 %s48, 1
        %s928 = scalar_lea.sflag [#allocation8], %s927
        %s929 = sand.u32 %s198, 1
        %s930 = scalar_lea.vmem [#allocation7], %s929
        // Predicated region
        $region113: #{decoder_forward.1} parent=107 // pred_check
          %p931 = pneg %p211
        $region114: #{decoder_forward.1} parent=107 // pred_check_branch
          %933 = sbr.rel (%p931) target = $region116
        $region115: #{decoder_forward.1} parent=107 // pred_region
          %934 = dma.done %s928, 16
        $region116: #{decoder_forward.1} parent=107 // pred_fallthru
          _
        %s935 = sand.u32 %s48, 1
        %s936 = scalar_lea.sflag [#allocation8], %s935
        %s937 = sand.u32 %s250, 1
        %s938 = scalar_lea.vmem [#allocation9], %s937
        // Predicated region
        $region117: #{decoder_forward.1} parent=107 // pred_check
          %p939 = pneg %p263
        $region118: #{decoder_forward.1} parent=107 // pred_check_branch
          %941 = sbr.rel (%p939) target = $region120
        $region119: #{decoder_forward.1} parent=107 // pred_region
          %942 = dma.done %s936, 16
        $region120: #{decoder_forward.1} parent=107 // pred_fallthru
          _
        %s943 = sand.u32 %s48, 1
        %s944 = scalar_lea.sflag [#allocation11], %s943
        %s945 = sand.u32 %s302, 1
        %s946 = scalar_lea.vmem [#allocation10], %s945
        // Predicated region
        $region121: #{decoder_forward.1} parent=107 // pred_check
          %p947 = pneg %p315
        $region122: #{decoder_forward.1} parent=107 // pred_check_branch
          %949 = sbr.rel (%p947) target = $region124
        $region123: #{decoder_forward.1} parent=107 // pred_region
          %950 = dma.done %s944, 16
        $region124: #{decoder_forward.1} parent=107 // pred_fallthru
          _
        %s951 = sand.u32 %s48, 1
        %s952 = scalar_lea.sflag [#allocation11], %s951
        %s953 = sand.u32 %s354, 1
        %s954 = scalar_lea.vmem [#allocation12], %s953
        // Predicated region
        $region125: #{decoder_forward.1} parent=107 // pred_check
          %p955 = pneg %p367
        $region126: #{decoder_forward.1} parent=107 // pred_check_branch
          %957 = sbr.rel (%p955) target = $region128
        $region127: #{decoder_forward.1} parent=107 // pred_region
          %958 = dma.done %s952, 16
        $region128: #{decoder_forward.1} parent=107 // pred_fallthru
          _
        %s959 = sand.u32 %s48, 1
        %s960 = scalar_lea.sflag [#allocation14], %s959
        %s961 = sand.u32 %s406, 1
        %s962 = scalar_lea.vmem [#allocation13], %s961
        // Predicated region
        $region129: #{decoder_forward.1} parent=107 // pred_check
          %p963 = pneg %p419
        $region130: #{decoder_forward.1} parent=107 // pred_check_branch
          %965 = sbr.rel (%p963) target = $region132
        $region131: #{decoder_forward.1} parent=107 // pred_region
          %966 = dma.done %s960, 16
        $region132: #{decoder_forward.1} parent=107 // pred_fallthru
          _
        %s967 = sand.u32 %s48, 1
        %s968 = scalar_lea.sflag [#allocation14], %s967
        %s969 = sand.u32 %s458, 1
        %s970 = scalar_lea.vmem [#allocation15], %s969
        // Predicated region
        $region133: #{decoder_forward.1} parent=107 // pred_check
          %p971 = pneg %p471
        $region134: #{decoder_forward.1} parent=107 // pred_check_branch
          %973 = sbr.rel (%p971) target = $region136
        $region135: #{decoder_forward.1} parent=107 // pred_region
          %974 = dma.done %s968, 16
        $region136: #{decoder_forward.1} parent=107 // pred_fallthru
          _
        %s975 = sand.u32 %s48, 1
        %s976 = scalar_lea.sflag [#allocation17], %s975
        %s977 = sand.u32 %s510, 1
        %s978 = scalar_lea.vmem [#allocation16], %s977
        // Predicated region
        $region137: #{decoder_forward.1} parent=107 // pred_check
          %p979 = pneg %p523
        $region138: #{decoder_forward.1} parent=107 // pred_check_branch
          %981 = sbr.rel (%p979) target = $region140
        $region139: #{decoder_forward.1} parent=107 // pred_region
          %982 = dma.done %s976, 16
        $region140: #{decoder_forward.1} parent=107 // pred_fallthru
          _
        // Predicated region
        $region141: #{decoder_forward.1} parent=107 // pred_check
          %p983 = pneg %p596
        $region142: #{decoder_forward.1} parent=107 // pred_check_branch
          %985 = sbr.rel (%p983) target = $region144
        $region143: #{decoder_forward.1} parent=107 // pred_region
          %986 = dma.done [#allocation17], 16
        $region144: #{decoder_forward.1} parent=107 // pred_fallthru
          _
        // Predicated region
        $region145: #{decoder_forward.1} parent=107 // pred_check
          %p987 = pneg %p617
        $region146: #{decoder_forward.1} parent=107 // pred_check_branch
          %989 = sbr.rel (%p987) target = $region148
        $region147: #{decoder_forward.1} parent=107 // pred_region
          %990 = dma.done [#allocation20], 16
        $region148: #{decoder_forward.1} parent=107 // pred_fallthru
          _
        %s991 = smul.u32 2, %s52
        %p992 = scmp.lt.s32.totalorder %s991, 1
        %s993 = scalar_select %p992, %s991, 1
        %s994 = smul.addr %s993, 8
        %s995 = scalar_lea.vmem %s0, %s994
        %p996 = pneg %p81
        %p997 = pneg %p78
        %s998 = smul.u32 2, %s52
        %p999 = scmp.lt.s32.totalorder %s998, 1
        %s1000 = scalar_select %p999, %s998, 1
        %s1001 = smul.addr %s1000, 2
        %s1002 = smul.addr %s1001, 8
        %s1003 = scalar_lea.vmem %s1, %s1002
        %p1004 = pneg %p107
        %p1005 = pneg %p104
        %p1006 = pneg %p133
        %p1007 = pneg %p130
        %s1008 = smul.u32 2, %s52
        %p1009 = scmp.lt.s32.totalorder %s1008, 1
        %s1010 = scalar_select %p1009, %s1008, 1
        %s1011 = scalar_lea.vmem %s3, %s1010
        %p1012 = pneg %p159
        %p1013 = pneg %p156
        %p1014 = scmp.lt.s32.totalorder %s53, 1
        %s1015 = scalar_select %p1014, %s53, 1
        %s1016 = smul.addr %s1015, 4
        %s1017 = smul.addr %s1016, 4
        %s1018 = scalar_lea.vmem %s4, %s1017
        %p1019 = pneg %p185
        %p1020 = pneg %p182
        %s1021 = sand.u32 %s48, 1
        %s1022 = scalar_lea.sflag [#allocation8], %s1021
        %s1023 = sand.u32 %s198, 1
        %s1024 = scalar_lea.vmem [#allocation7], %s1023
        %p1025 = pneg %p211
        %p1026 = pneg %p208
        %p1027 = scmp.lt.s32.totalorder %s53, 1
        %s1028 = scalar_select %p1027, %s53, 1
        %s1029 = smul.addr %s1028, 4
        %s1030 = smul.addr %s1029, 4
        %s1031 = scalar_lea.vmem %s6, %s1030
        %p1032 = pneg %p237
        %p1033 = pneg %p234
        %s1034 = sand.u32 %s48, 1
        %s1035 = scalar_lea.sflag [#allocation8], %s1034
        %s1036 = sand.u32 %s250, 1
        %s1037 = scalar_lea.vmem [#allocation9], %s1036
        %p1038 = pneg %p263
        %p1039 = pneg %p260
        %p1040 = scmp.lt.s32.totalorder %s53, 1
        %s1041 = scalar_select %p1040, %s53, 1
        %s1042 = smul.addr %s1041, 4
        %s1043 = smul.addr %s1042, 4
        %s1044 = scalar_lea.vmem %s8, %s1043
        %p1045 = pneg %p289
        %p1046 = pneg %p286
        %s1047 = sand.u32 %s48, 1
        %s1048 = scalar_lea.sflag [#allocation11], %s1047
        %s1049 = sand.u32 %s302, 1
        %s1050 = scalar_lea.vmem [#allocation10], %s1049
        %p1051 = pneg %p315
        %p1052 = pneg %p312
        %p1053 = scmp.lt.s32.totalorder %s53, 1
        %s1054 = scalar_select %p1053, %s53, 1
        %s1055 = smul.addr %s1054, 4
        %s1056 = smul.addr %s1055, 4
        %s1057 = scalar_lea.vmem %s10, %s1056
        %p1058 = pneg %p341
        %p1059 = pneg %p338
        %s1060 = sand.u32 %s48, 1
        %s1061 = scalar_lea.sflag [#allocation11], %s1060
        %s1062 = sand.u32 %s354, 1
        %s1063 = scalar_lea.vmem [#allocation12], %s1062
        %p1064 = pneg %p367
        %p1065 = pneg %p364
        %p1066 = scmp.lt.s32.totalorder %s53, 1
        %s1067 = scalar_select %p1066, %s53, 1
        %s1068 = smul.addr %s1067, 4
        %s1069 = smul.addr %s1068, 4
        %s1070 = scalar_lea.vmem %s12, %s1069
        %p1071 = pneg %p393
        %p1072 = pneg %p390
        %s1073 = sand.u32 %s48, 1
        %s1074 = scalar_lea.sflag [#allocation14], %s1073
        %s1075 = sand.u32 %s406, 1
        %s1076 = scalar_lea.vmem [#allocation13], %s1075
        %p1077 = pneg %p419
        %p1078 = pneg %p416
        %p1079 = scmp.lt.s32.totalorder %s53, 1
        %s1080 = scalar_select %p1079, %s53, 1
        %s1081 = smul.addr %s1080, 4
        %s1082 = smul.addr %s1081, 4
        %s1083 = scalar_lea.vmem %s14, %s1082
        %p1084 = pneg %p445
        %p1085 = pneg %p442
        %s1086 = sand.u32 %s48, 1
        %s1087 = scalar_lea.sflag [#allocation14], %s1086
        %s1088 = sand.u32 %s458, 1
        %s1089 = scalar_lea.vmem [#allocation15], %s1088
        %p1090 = pneg %p471
        %p1091 = pneg %p468
        %p1092 = scmp.lt.s32.totalorder %s53, 1
        %s1093 = scalar_select %p1092, %s53, 1
        %s1094 = smul.addr %s1093, 8
        %s1095 = smul.addr %s1094, 4
        %s1096 = scalar_lea.vmem %s16, %s1095
        %p1097 = pneg %p497
        %p1098 = pneg %p494
        %s1099 = sand.u32 %s48, 1
        %s1100 = scalar_lea.sflag [#allocation17], %s1099
        %s1101 = sand.u32 %s510, 1
        %s1102 = scalar_lea.vmem [#allocation16], %s1101
        %p1103 = pneg %p523
        %p1104 = pneg %p520
        %p1105 = scmp.lt.s32.totalorder %s53, 1
        %s1106 = scalar_select %p1105, %s53, 1
        %s1107 = smul.addr %s1106, 4
        %s1108 = scalar_lea.vmem %s18, %s1107
        %p1109 = pneg %p549
        %p1110 = pneg %p546
        %p1111 = scmp.lt.s32.totalorder %s53, 1
        %s1112 = scalar_select %p1111, %s53, 1
        %s1113 = smul.addr %s1112, 4
        %s1114 = scalar_lea.vmem %s19, %s1113
        %p1115 = pneg %p575
        %p1116 = pneg %p572
        %p1117 = pneg %p596
        %p1118 = pneg %p593
        %p1119 = pneg %p617
        %p1120 = pneg %p614
        %p1121 = pneg %p643
        %p1122 = pneg %p640
        %s1123 = smul.u32 2, %s52
        %p1124 = scmp.lt.s32.totalorder %s1123, 1
        %s1125 = scalar_select %p1124, %s1123, 1
        %s1126 = smul.addr %s1125, 8
        %s1127 = scalar_lea.vmem %s0, %s1126
        %s1128 = smul.u32 2, %s52
        %s1129 = smul.u32 2, %s52
        %p1130 = scmp.lt.s32.totalorder %s1129, 1
        %s1131 = scalar_select %p1130, %s1129, 1
        %s1132 = smul.addr %s1131, 2
        %s1133 = smul.addr %s1132, 8
        %s1134 = scalar_lea.vmem %s1, %s1133
        %s1135 = smul.u32 2, %s52
        %s1136 = smul.u32 2, %s52
        %s1137 = smul.u32 2, %s52
        %p1138 = scmp.lt.s32.totalorder %s1137, 1
        %s1139 = scalar_select %p1138, %s1137, 1
        %s1140 = scalar_lea.vmem %s3, %s1139
        %s1141 = smul.u32 2, %s52
        %p1142 = scmp.lt.s32.totalorder %s53, 1
        %s1143 = scalar_select %p1142, %s53, 1
        %s1144 = smul.addr %s1143, 4
        %s1145 = smul.addr %s1144, 4
        %s1146 = scalar_lea.vmem %s4, %s1145
        %p1147 = scmp.lt.s32.totalorder %s53, 1
        %s1148 = scalar_select %p1147, %s53, 1
        %s1149 = smul.addr %s1148, 4
        %s1150 = smul.addr %s1149, 4
        %s1151 = scalar_lea.vmem %s6, %s1150
        %p1152 = scmp.lt.s32.totalorder %s53, 1
        %s1153 = scalar_select %p1152, %s53, 1
        %s1154 = smul.addr %s1153, 4
        %s1155 = smul.addr %s1154, 4
        %s1156 = scalar_lea.vmem %s8, %s1155
        %p1157 = scmp.lt.s32.totalorder %s53, 1
        %s1158 = scalar_select %p1157, %s53, 1
        %s1159 = smul.addr %s1158, 4
        %s1160 = smul.addr %s1159, 4
        %s1161 = scalar_lea.vmem %s10, %s1160
        %p1162 = scmp.lt.s32.totalorder %s53, 1
        %s1163 = scalar_select %p1162, %s53, 1
        %s1164 = smul.addr %s1163, 4
        %s1165 = smul.addr %s1164, 4
        %s1166 = scalar_lea.vmem %s12, %s1165
        %p1167 = scmp.lt.s32.totalorder %s53, 1
        %s1168 = scalar_select %p1167, %s53, 1
        %s1169 = smul.addr %s1168, 4
        %s1170 = smul.addr %s1169, 4
        %s1171 = scalar_lea.vmem %s14, %s1170
        %p1172 = scmp.lt.s32.totalorder %s53, 1
        %s1173 = scalar_select %p1172, %s53, 1
        %s1174 = smul.addr %s1173, 8
        %s1175 = smul.addr %s1174, 4
        %s1176 = scalar_lea.vmem %s16, %s1175
        %p1177 = scmp.lt.s32.totalorder %s53, 1
        %s1178 = scalar_select %p1177, %s53, 1
        %s1179 = smul.addr %s1178, 4
        %s1180 = scalar_lea.vmem %s18, %s1179
        %p1181 = scmp.lt.s32.totalorder %s53, 1
        %s1182 = scalar_select %p1181, %s53, 1
        %s1183 = smul.addr %s1182, 4
        %s1184 = scalar_lea.vmem %s19, %s1183
        %s1185 = smul.u32 2, %s52
        %p1187 = scmp.eq.s32.totalorder %s53, 0
        // Predicated region
        $region149: #{decoder_forward.1} parent=107 // pred_check
          %p1188 = pneg %p1187
        $region150: #{decoder_forward.1} parent=107 // pred_check_branch
          %1190 = sbr.rel (%p1188) target = $region152
        $region151: #{decoder_forward.1} parent=107 // pred_region
          %v1191 = vld [vmem:[%s1127] sm:$0xff]
          %vm1192 = vcmask 261120
          %1193 = vst.msk [vmem:[#allocation2] sm:$0xff] %vm1192, %v1191
          %s1194 = scalar_lea.vmem %s1127, 8
          %v1195 = vld [vmem:[%s1194] sm:$0xff]
          %1196 = vst.msk [vmem:[#allocation2 + $0x8] sm:$0xff] %vm1192, %v1195
        $region152: #{decoder_forward.1} parent=107 // pred_fallthru
          _
        %v1197 = vld [vmem:[#allocation4] sm:$0xff]
        %v1198 = vld [vmem:[#allocation4 + $0x8] sm:$0xff]
        %vm1199 = vcmp.eq.f32.partialorder %v1197, 0.0
        %vm1200 = vcmp.eq.f32.partialorder %v1198, 0.0
        %v1201 = vsel %vm1199, -1e+09, 0.0
        %v1202 = vsel %vm1200, -1e+09, 0.0
        %v1203 = vld [vmem:[%s1140] sm:$0x1]
        %v1204 = vld [vmem:[%s1140 + $0x1] sm:$0x1]
        %vm1205 = vcmp.eq.f32.partialorder %v1203, 0.0
        %vm1206 = vcmp.eq.f32.partialorder %v1204, 0.0
        %v1207 = vsel %vm1205, -1e+09, 0.0
        %v1208 = vsel %vm1206, -1e+09, 0.0
        %v1209 = vld [vmem:[#allocation2] sm:$0xff]
        %v1210 = vld [vmem:[#allocation2 + $0x8] sm:$0xff]
        %v1211 = vld [vmem:[%s1180] sm:$0x1]
        %v1212 = vld [vmem:[%s1184] sm:$0x1]
        %vm1213 = vcmask 261120
        %v1214 = vsel %vm1213, %v1209, 0.0
        %1215 = vadd.xlane.f32.xlu0 %v1214
        %v1216 = vpop.xlane.xlu0 %1215
        %v1217 = vsel %vm1213, %v1210, 0.0
        %1218 = vadd.xlane.f32.xlu0 %v1217
        %v1219 = vpop.xlane.xlu0 %1218
        %v1220 = vrcp.pop 32.0
        %v1221 = vmul.f32 %v1216, %v1220
        %v1222 = vmul.f32 %v1219, %v1220
        %v1223 = vsub.f32 %v1209, %v1221
        %v1224 = vsub.f32 %v1210, %v1222
        %v1225 = vmul.f32 %v1223, %v1223
        %v1226 = vmul.f32 %v1224, %v1224
        %v1227 = vsel %vm1213, %v1225, 0.0
        %1228 = vadd.xlane.f32.xlu0 %v1227
        %v1229 = vpop.xlane.xlu0 %1228
        %v1230 = vsel %vm1213, %v1226, 0.0
        %1231 = vadd.xlane.f32.xlu0 %v1230
        %v1232 = vpop.xlane.xlu0 %1231
        %v1233 = vmul.f32 %v1229, 0.032258064
        %v1234 = vmul.f32 %v1232, 0.032258064
        %v1235 = vrsqrt.pop %v1233
        %v1236 = vmul.f32 %v1233, %v1235
        %vm1237 = vcmp.eq.f32.partialorder %v1233, inf
        %v1238 = vsel %vm1237, %v1233, %v1236
        %vm1239 = vcmp.eq.f32.partialorder %v1233, 0.0
        %v1240 = vand.u32 %v1233, 2147483648
        %v1241 = vsel %vm1239, %v1240, %v1238
        %v1242 = vrsqrt.pop %v1234
        %v1243 = vmul.f32 %v1234, %v1242
        %vm1244 = vcmp.eq.f32.partialorder %v1234, inf
        %v1245 = vsel %vm1244, %v1234, %v1243
        %vm1246 = vcmp.eq.f32.partialorder %v1234, 0.0
        %v1247 = vand.u32 %v1234, 2147483648
        %v1248 = vsel %vm1246, %v1247, %v1245
        %v1249 = vadd.f32 %v1241, 1e-06
        %v1250 = vadd.f32 %v1248, 1e-06
        %v1251 = vrcp.pop %v1249
        %v1252 = vrcp.pop %v1250
        %v1253 = vmul.f32 %v1223, %v1251
        %v1254 = vmul.f32 %v1224, %v1252
        %v1255 = vlaneseq
        %v1256 = vshrl.u32 %v1255, 7
        %v1257 = vsub.s32 0, %v1256
        %v1258 = vrot.slane %v1211, %v1257
        %v1259 = vmul.f32 %v1258, %v1253
        %v1260 = vmul.f32 %v1258, %v1254
        %v1261 = vlaneseq
        %v1262 = vshrl.u32 %v1261, 7
        %v1263 = vsub.s32 0, %v1262
        %v1264 = vrot.slane %v1212, %v1263
        %v1265 = vadd.f32 %v1259, %v1264
        %v1266 = vadd.f32 %v1260, %v1264
        %v1267 = vpack.c.bf16 %v1266, %v1265
        %v1268 = vld [vmem:[%s1146] sm:$0xf]
        %v1269 = vld [vmem:[%s1146 + $0x4] sm:$0xf]
        %v1270 = vld [vmem:[%s1146 + $0x8] sm:$0xf]
        %v1271 = vld [vmem:[%s1146 + $0xc] sm:$0xf]
        %v1272 = vld [vmem:[%s930] sm:$0x1]
        %v1274 = vlaneseq
        %v1275 = vshrl.u32 %v1274, 7
        %v1276 = vsub.s32 0, %v1275
        %v1277 = vrot.slane %v1272, %v1276
        %v1283 = vunpack.c.l.b16 %v1268
        %v1284 = vunpack.c.l.b16 %v1269
        %v1285 = vunpack.c.l.b16 %v1270
        %v1286 = vunpack.c.l.b16 %v1271
        %v1287 = vpack.c.b16 %v1284, %v1283
        %v1288 = vpack.c.b16 %v1286, %v1285
        %v1292 = vsel %vm1213, %v1267, 0
        %1294 = vmatprep.subr.bf16.mxu0 0
        %1295 = vmatpush1.bf16.msra.mxu0 0
        %1296 = vmatprep.subr.bf16.mxu0 0
        %1297 = vmatpush1.bf16.msra.mxu0 0
        %1298 = vmatprep.subr.bf16.mxu0 0
        %1299 = vmatpush1.bf16.msra.mxu0 0
        %1300 = vmatprep.subr.bf16.mxu0 0
        %1301 = vmatpush1.bf16.msra.mxu0 0
        %1302 = vmatprep.subr.bf16.mxu0 0
        %1303 = vmatpush1.bf16.msra.mxu0 0
        %1304 = vmatprep.subr.bf16.mxu0 0
        %1305 = vmatpush1.bf16.msra.mxu0 0
        %1306 = vmatprep.subr.bf16.mxu0 0
        %1307 = vmatpush1.bf16.msra.mxu0 %v1288
        %1308 = vmatprep.subr.bf16.mxu0 0
        %1309 = vmatpush1.bf16.msra.mxu0 %v1287
        %1310 = vmatprep.subr.bf16.mxu0 0
        %1311 = vmatpush2.bf16.msra.mxu0 0
        %1312 = vmatprep.subr.bf16.mxu0 0
        %1313 = vmatpush2.bf16.msra.mxu0 0
        %1314 = vmatprep.subr.bf16.mxu0 0
        %1315 = vmatpush2.bf16.msra.mxu0 0
        %1316 = vmatprep.subr.bf16.mxu0 0
        %1317 = vmatpush2.bf16.msra.mxu0 0
        %1318 = vmatprep.subr.bf16.mxu0 0
        %1319 = vmatpush2.bf16.msra.mxu0 0
        %1320 = vmatprep.subr.bf16.mxu0 0
        %1321 = vmatpush2.bf16.msra.mxu0 0
        %1322 = vmatprep.subr.bf16.mxu0 0
        %1323 = vmatpush2.bf16.msra.mxu0 0
        %1324 = vmatprep.subr.bf16.mxu0 0
        %1325 = vmatpush2.bf16.msra.mxu0 0
        %1326 = vmatprep.mubr.bf16.mxu0 0
        %1327 = vmatmul.mubr.bf16.gmra.mxu0 %v1292
        %v1328 = vpop.f32.mrf.mxu0
        %v1329 = vadd.f32 %v1277, %v1328
        %v1330 = vpop.f32.mrf.mxu0
        %v1331 = vpop.f32.mrf.mxu0
        %v1332 = vadd.f32 %v1277, %v1331
        %v1333 = vpop.f32.mrf.mxu0
        %1334 = vdwg.mxu0
        %v1335 = vpack.c.bf16 %v1332, %v1329
        %v1336 = vld [vmem:[%s1151] sm:$0xf]
        %v1337 = vld [vmem:[%s1151 + $0x4] sm:$0xf]
        %v1338 = vld [vmem:[%s1151 + $0x8] sm:$0xf]
        %v1339 = vld [vmem:[%s1151 + $0xc] sm:$0xf]
        %v1340 = vld [vmem:[%s938] sm:$0x1]
        %v1341 = vpack.c.bf16 %v1329, %v1329
        %1343 = vrot.lane.b32.xlu0 %v1335, 96
        %v1344 = vpop.permute.xlu0 %1343
        %vm1345 = vcmask 64512
        %v1347 = vsel %vm1345, %v1341, 0
        %v1350 = vsel %vm1345, %v1344, 0
        %1352 = vmatprep.subr.bf16.mxu0 0
        %1353 = vmatpush1.bf16.xpose.msra.mxu0 0
        %1354 = vmatprep.subr.bf16.mxu0 0
        %1355 = vmatpush1.bf16.xpose.msra.mxu0 0
        %1356 = vmatprep.subr.bf16.mxu0 0
        %1357 = vmatpush1.bf16.xpose.msra.mxu0 0
        %1358 = vmatprep.subr.bf16.mxu0 0
        %1359 = vmatpush1.bf16.xpose.msra.mxu0 0
        %1360 = vmatprep.subr.bf16.mxu0 0
        %1361 = vmatpush1.bf16.xpose.msra.mxu0 0
        %1362 = vmatprep.subr.bf16.mxu0 0
        %1363 = vmatpush1.bf16.xpose.msra.mxu0 0
        %1364 = vmatprep.subr.bf16.mxu0 0
        %1365 = vmatpush1.bf16.xpose.msra.mxu0 0
        %1366 = vmatprep.subr.bf16.mxu0 0
        %1367 = vmatpush1.bf16.xpose.msra.mxu0 %v1350
        %1368 = vmatprep.subr.bf16.mxu0 0
        %1369 = vmatpush2.bf16.xpose.msra.mxu0 0
        %1370 = vmatprep.subr.bf16.mxu0 0
        %1371 = vmatpush2.bf16.xpose.msra.mxu0 0
        %1372 = vmatprep.subr.bf16.mxu0 0
        %1373 = vmatpush2.bf16.xpose.msra.mxu0 0
        %1374 = vmatprep.subr.bf16.mxu0 0
        %1375 = vmatpush2.bf16.xpose.msra.mxu0 0
        %1376 = vmatprep.subr.bf16.mxu0 0
        %1377 = vmatpush2.bf16.xpose.msra.mxu0 0
        %1378 = vmatprep.subr.bf16.mxu0 0
        %1379 = vmatpush2.bf16.xpose.msra.mxu0 0
        %1380 = vmatprep.subr.bf16.mxu0 0
        %1381 = vmatpush2.bf16.xpose.msra.mxu0 0
        %1382 = vmatprep.subr.bf16.mxu0 0
        %1383 = vmatpush2.bf16.xpose.msra.mxu0 0
        %1384 = vmatprep.mubr.bf16.mxu0 0
        %1385 = vmatmul.mubr.bf16.gmra.mxu0 %v1347
        %v1386 = vpop.f32.mrf.mxu0
        %v1387 = vadd.f32 %v1201, %v1386
        %v1388 = vpop.f32.mrf.mxu0
        %v1389 = vpop.f32.mrf.mxu0
        %v1390 = vpop.f32.mrf.mxu0
        %1391 = vdwg.mxu0
        %v1392 = vsel %vm1345, %v1387, -inf
        %1393 = vmax.xlane.f32.xlu0 %v1392
        %v1394 = vpop.xlane.xlu0 %1393
        %v1395 = vsub.f32 %v1387, %v1394
        %v1396 = vmul.f32 %v1395, 1.442695
        %v1397 = vpow.pop %v1396
        %v1398 = vsel %vm1345, %v1397, 0.0
        %1399 = vadd.xlane.f32.xlu0 %v1398
        %v1400 = vpop.xlane.xlu0 %1399
        %v1401 = vrcp.pop %v1400
        %v1402 = vmul.f32 %v1397, %v1401
        %v1403 = vpack.c.bf16 %v1402, %v1402
        %1404 = vrot.lane.b32.xlu0 %v1335, 64
        %v1405 = vpop.permute.xlu0 %1404
        %v1407 = vsel %vm1345, %v1403, 0
        %vm1409 = vcmask 1043456
        %v1411 = vsel %vm1409, %v1405, 0
        %1413 = vmatprep.subr.bf16.mxu0 0
        %1414 = vmatpush1.bf16.msra.mxu0 0
        %1415 = vmatprep.subr.bf16.mxu0 0
        %1416 = vmatpush1.bf16.msra.mxu0 0
        %1417 = vmatprep.subr.bf16.mxu0 0
        %1418 = vmatpush1.bf16.msra.mxu0 0
        %1419 = vmatprep.subr.bf16.mxu0 0
        %1420 = vmatpush1.bf16.msra.mxu0 0
        %1421 = vmatprep.subr.bf16.mxu0 0
        %1422 = vmatpush1.bf16.msra.mxu0 0
        %1423 = vmatprep.subr.bf16.mxu0 0
        %1424 = vmatpush1.bf16.msra.mxu0 0
        %1425 = vmatprep.subr.bf16.mxu0 0
        %1426 = vmatpush1.bf16.msra.mxu0 0
        %1427 = vmatprep.subr.bf16.mxu0 0
        %1428 = vmatpush1.bf16.msra.mxu0 %v1411
        %1429 = vmatprep.subr.bf16.mxu0 0
        %1430 = vmatpush2.bf16.msra.mxu0 0
        %1431 = vmatprep.subr.bf16.mxu0 0
        %1432 = vmatpush2.bf16.msra.mxu0 0
        %1433 = vmatprep.subr.bf16.mxu0 0
        %1434 = vmatpush2.bf16.msra.mxu0 0
        %1435 = vmatprep.subr.bf16.mxu0 0
        %1436 = vmatpush2.bf16.msra.mxu0 0
        %1437 = vmatprep.subr.bf16.mxu0 0
        %1438 = vmatpush2.bf16.msra.mxu0 0
        %1439 = vmatprep.subr.bf16.mxu0 0
        %1440 = vmatpush2.bf16.msra.mxu0 0
        %1441 = vmatprep.subr.bf16.mxu0 0
        %1442 = vmatpush2.bf16.msra.mxu0 0
        %1443 = vmatprep.subr.bf16.mxu0 0
        %1444 = vmatpush2.bf16.msra.mxu0 0
        %1445 = vmatprep.mubr.bf16.mxu0 0
        %1446 = vmatmul.mubr.bf16.gmra.mxu0 %v1407
        %v1447 = vpop.f32.mrf.mxu0
        %v1448 = vadd.f32 0.0, %v1447
        %v1449 = vpop.f32.mrf.mxu0
        %v1450 = vpop.f32.mrf.mxu0
        %v1451 = vpop.f32.mrf.mxu0
        %1452 = vdwg.mxu0
        %1453 = vst.msk [vmem:[#allocation3] sm:$0xff] %vm1345, %v1448
        %1455 = vrot.lane.b32.xlu0 %v1341, 120
        %v1456 = vpop.permute.xlu0 %1455
        %1457 = vrot.lane.b32.xlu0 %v1335, 88
        %v1458 = vpop.permute.xlu0 %1457
        %v1460 = vsel %vm1345, %v1456, 0
        %v1463 = vsel %vm1345, %v1458, 0
        %1465 = vmatprep.subr.bf16.mxu0 0
        %1466 = vmatpush1.bf16.xpose.msra.mxu0 0
        %1467 = vmatprep.subr.bf16.mxu0 0
        %1468 = vmatpush1.bf16.xpose.msra.mxu0 0
        %1469 = vmatprep.subr.bf16.mxu0 0
        %1470 = vmatpush1.bf16.xpose.msra.mxu0 0
        %1471 = vmatprep.subr.bf16.mxu0 0
        %1472 = vmatpush1.bf16.xpose.msra.mxu0 0
        %1473 = vmatprep.subr.bf16.mxu0 0
        %1474 = vmatpush1.bf16.xpose.msra.mxu0 0
        %1475 = vmatprep.subr.bf16.mxu0 0
        %1476 = vmatpush1.bf16.xpose.msra.mxu0 0
        %1477 = vmatprep.subr.bf16.mxu0 0
        %1478 = vmatpush1.bf16.xpose.msra.mxu0 0
        %1479 = vmatprep.subr.bf16.mxu0 0
        %1480 = vmatpush1.bf16.xpose.msra.mxu0 %v1463
        %1481 = vmatprep.subr.bf16.mxu0 0
        %1482 = vmatpush2.bf16.xpose.msra.mxu0 0
        %1483 = vmatprep.subr.bf16.mxu0 0
        %1484 = vmatpush2.bf16.xpose.msra.mxu0 0
        %1485 = vmatprep.subr.bf16.mxu0 0
        %1486 = vmatpush2.bf16.xpose.msra.mxu0 0
        %1487 = vmatprep.subr.bf16.mxu0 0
        %1488 = vmatpush2.bf16.xpose.msra.mxu0 0
        %1489 = vmatprep.subr.bf16.mxu0 0
        %1490 = vmatpush2.bf16.xpose.msra.mxu0 0
        %1491 = vmatprep.subr.bf16.mxu0 0
        %1492 = vmatpush2.bf16.xpose.msra.mxu0 0
        %1493 = vmatprep.subr.bf16.mxu0 0
        %1494 = vmatpush2.bf16.xpose.msra.mxu0 0
        %1495 = vmatprep.subr.bf16.mxu0 0
        %1496 = vmatpush2.bf16.xpose.msra.mxu0 0
        %1497 = vmatprep.mubr.bf16.mxu0 0
        %1498 = vmatmul.mubr.bf16.gmra.mxu0 %v1460
        %v1499 = vpop.f32.mrf.mxu0
        %v1500 = vadd.f32 %v1201, %v1499
        %v1501 = vpop.f32.mrf.mxu0
        %v1502 = vpop.f32.mrf.mxu0
        %v1503 = vpop.f32.mrf.mxu0
        %1504 = vdwg.mxu0
        %v1505 = vsel %vm1345, %v1500, -inf
        %1506 = vmax.xlane.f32.xlu0 %v1505
        %v1507 = vpop.xlane.xlu0 %1506
        %v1508 = vsub.f32 %v1500, %v1507
        %v1509 = vmul.f32 %v1508, 1.442695
        %v1510 = vpow.pop %v1509
        %v1511 = vsel %vm1345, %v1510, 0.0
        %1512 = vadd.xlane.f32.xlu0 %v1511
        %v1513 = vpop.xlane.xlu0 %1512
        %v1514 = vrcp.pop %v1513
        %v1515 = vmul.f32 %v1510, %v1514
        %v1516 = vpack.c.bf16 %v1515, %v1515
        %1517 = vrot.lane.b32.xlu0 %v1335, 56
        %v1518 = vpop.permute.xlu0 %1517
        %v1520 = vsel %vm1345, %v1516, 0
        %v1523 = vsel %vm1409, %v1518, 0
        %1525 = vmatprep.subr.bf16.mxu0 0
        %1526 = vmatpush1.bf16.msra.mxu0 0
        %1527 = vmatprep.subr.bf16.mxu0 0
        %1528 = vmatpush1.bf16.msra.mxu0 0
        %1529 = vmatprep.subr.bf16.mxu0 0
        %1530 = vmatpush1.bf16.msra.mxu0 0
        %1531 = vmatprep.subr.bf16.mxu0 0
        %1532 = vmatpush1.bf16.msra.mxu0 0
        %1533 = vmatprep.subr.bf16.mxu0 0
        %1534 = vmatpush1.bf16.msra.mxu0 0
        %1535 = vmatprep.subr.bf16.mxu0 0
        %1536 = vmatpush1.bf16.msra.mxu0 0
        %1537 = vmatprep.subr.bf16.mxu0 0
        %1538 = vmatpush1.bf16.msra.mxu0 0
        %1539 = vmatprep.subr.bf16.mxu0 0
        %1540 = vmatpush1.bf16.msra.mxu0 %v1523
        %1541 = vmatprep.subr.bf16.mxu0 0
        %1542 = vmatpush2.bf16.msra.mxu0 0
        %1543 = vmatprep.subr.bf16.mxu0 0
        %1544 = vmatpush2.bf16.msra.mxu0 0
        %1545 = vmatprep.subr.bf16.mxu0 0
        %1546 = vmatpush2.bf16.msra.mxu0 0
        %1547 = vmatprep.subr.bf16.mxu0 0
        %1548 = vmatpush2.bf16.msra.mxu0 0
        %1549 = vmatprep.subr.bf16.mxu0 0
        %1550 = vmatpush2.bf16.msra.mxu0 0
        %1551 = vmatprep.subr.bf16.mxu0 0
        %1552 = vmatpush2.bf16.msra.mxu0 0
        %1553 = vmatprep.subr.bf16.mxu0 0
        %1554 = vmatpush2.bf16.msra.mxu0 0
        %1555 = vmatprep.subr.bf16.mxu0 0
        %1556 = vmatpush2.bf16.msra.mxu0 0
        %1557 = vmatprep.mubr.bf16.mxu0 0
        %1558 = vmatmul.mubr.bf16.gmra.mxu0 %v1520
        %v1559 = vpop.f32.mrf.mxu0
        %v1560 = vadd.f32 0.0, %v1559
        %v1561 = vpop.f32.mrf.mxu0
        %v1562 = vpop.f32.mrf.mxu0
        %v1563 = vpop.f32.mrf.mxu0
        %1564 = vdwg.mxu0
        %1566 = vrot.lane.b32.xlu0 %v1560, 8
        %v1567 = vpop.permute.xlu0 %1566
        %vm1569 = vcmask 130112
        %1570 = vst.msk [vmem:[#allocation3] sm:$0xff] %vm1569, %v1567
        %1571 = vrot.lane.b32.xlu0 %v1341, 112
        %v1572 = vpop.permute.xlu0 %1571
        %1573 = vrot.lane.b32.xlu0 %v1335, 80
        %v1574 = vpop.permute.xlu0 %1573
        %v1576 = vsel %vm1345, %v1572, 0
        %v1579 = vsel %vm1345, %v1574, 0
        %1581 = vmatprep.subr.bf16.mxu0 0
        %1582 = vmatpush1.bf16.xpose.msra.mxu0 0
        %1583 = vmatprep.subr.bf16.mxu0 0
        %1584 = vmatpush1.bf16.xpose.msra.mxu0 0
        %1585 = vmatprep.subr.bf16.mxu0 0
        %1586 = vmatpush1.bf16.xpose.msra.mxu0 0
        %1587 = vmatprep.subr.bf16.mxu0 0
        %1588 = vmatpush1.bf16.xpose.msra.mxu0 0
        %1589 = vmatprep.subr.bf16.mxu0 0
        %1590 = vmatpush1.bf16.xpose.msra.mxu0 0
        %1591 = vmatprep.subr.bf16.mxu0 0
        %1592 = vmatpush1.bf16.xpose.msra.mxu0 0
        %1593 = vmatprep.subr.bf16.mxu0 0
        %1594 = vmatpush1.bf16.xpose.msra.mxu0 0
        %1595 = vmatprep.subr.bf16.mxu0 0
        %1596 = vmatpush1.bf16.xpose.msra.mxu0 %v1579
        %1597 = vmatprep.subr.bf16.mxu0 0
        %1598 = vmatpush2.bf16.xpose.msra.mxu0 0
        %1599 = vmatprep.subr.bf16.mxu0 0
        %1600 = vmatpush2.bf16.xpose.msra.mxu0 0
        %1601 = vmatprep.subr.bf16.mxu0 0
        %1602 = vmatpush2.bf16.xpose.msra.mxu0 0
        %1603 = vmatprep.subr.bf16.mxu0 0
        %1604 = vmatpush2.bf16.xpose.msra.mxu0 0
        %1605 = vmatprep.subr.bf16.mxu0 0
        %1606 = vmatpush2.bf16.xpose.msra.mxu0 0
        %1607 = vmatprep.subr.bf16.mxu0 0
        %1608 = vmatpush2.bf16.xpose.msra.mxu0 0
        %1609 = vmatprep.subr.bf16.mxu0 0
        %1610 = vmatpush2.bf16.xpose.msra.mxu0 0
        %1611 = vmatprep.subr.bf16.mxu0 0
        %1612 = vmatpush2.bf16.xpose.msra.mxu0 0
        %1613 = vmatprep.mubr.bf16.mxu0 0
        %1614 = vmatmul.mubr.bf16.gmra.mxu0 %v1576
        %v1615 = vpop.f32.mrf.mxu0
        %v1616 = vadd.f32 %v1201, %v1615
        %v1617 = vpop.f32.mrf.mxu0
        %v1618 = vpop.f32.mrf.mxu0
        %v1619 = vpop.f32.mrf.mxu0
        %1620 = vdwg.mxu0
        %v1621 = vsel %vm1345, %v1616, -inf
        %1622 = vmax.xlane.f32.xlu0 %v1621
        %v1623 = vpop.xlane.xlu0 %1622
        %v1624 = vsub.f32 %v1616, %v1623
        %v1625 = vmul.f32 %v1624, 1.442695
        %v1626 = vpow.pop %v1625
        %v1627 = vsel %vm1345, %v1626, 0.0
        %1628 = vadd.xlane.f32.xlu0 %v1627
        %v1629 = vpop.xlane.xlu0 %1628
        %v1630 = vrcp.pop %v1629
        %v1631 = vmul.f32 %v1626, %v1630
        %v1632 = vpack.c.bf16 %v1631, %v1631
        %1633 = vrot.lane.b32.xlu0 %v1335, 48
        %v1634 = vpop.permute.xlu0 %1633
        %v1636 = vsel %vm1345, %v1632, 0
        %v1639 = vsel %vm1409, %v1634, 0
        %1641 = vmatprep.subr.bf16.mxu0 0
        %1642 = vmatpush1.bf16.msra.mxu0 0
        %1643 = vmatprep.subr.bf16.mxu0 0
        %1644 = vmatpush1.bf16.msra.mxu0 0
        %1645 = vmatprep.subr.bf16.mxu0 0
        %1646 = vmatpush1.bf16.msra.mxu0 0
        %1647 = vmatprep.subr.bf16.mxu0 0
        %1648 = vmatpush1.bf16.msra.mxu0 0
        %1649 = vmatprep.subr.bf16.mxu0 0
        %1650 = vmatpush1.bf16.msra.mxu0 0
        %1651 = vmatprep.subr.bf16.mxu0 0
        %1652 = vmatpush1.bf16.msra.mxu0 0
        %1653 = vmatprep.subr.bf16.mxu0 0
        %1654 = vmatpush1.bf16.msra.mxu0 0
        %1655 = vmatprep.subr.bf16.mxu0 0
        %1656 = vmatpush1.bf16.msra.mxu0 %v1639
        %1657 = vmatprep.subr.bf16.mxu0 0
        %1658 = vmatpush2.bf16.msra.mxu0 0
        %1659 = vmatprep.subr.bf16.mxu0 0
        %1660 = vmatpush2.bf16.msra.mxu0 0
        %1661 = vmatprep.subr.bf16.mxu0 0
        %1662 = vmatpush2.bf16.msra.mxu0 0
        %1663 = vmatprep.subr.bf16.mxu0 0
        %1664 = vmatpush2.bf16.msra.mxu0 0
        %1665 = vmatprep.subr.bf16.mxu0 0
        %1666 = vmatpush2.bf16.msra.mxu0 0
        %1667 = vmatprep.subr.bf16.mxu0 0
        %1668 = vmatpush2.bf16.msra.mxu0 0
        %1669 = vmatprep.subr.bf16.mxu0 0
        %1670 = vmatpush2.bf16.msra.mxu0 0
        %1671 = vmatprep.subr.bf16.mxu0 0
        %1672 = vmatpush2.bf16.msra.mxu0 0
        %1673 = vmatprep.mubr.bf16.mxu0 0
        %1674 = vmatmul.mubr.bf16.gmra.mxu0 %v1636
        %v1675 = vpop.f32.mrf.mxu0
        %v1676 = vadd.f32 0.0, %v1675
        %v1677 = vpop.f32.mrf.mxu0
        %v1678 = vpop.f32.mrf.mxu0
        %v1679 = vpop.f32.mrf.mxu0
        %1680 = vdwg.mxu0
        %1682 = vrot.lane.b32.xlu0 %v1676, 16
        %v1683 = vpop.permute.xlu0 %1682
        %vm1685 = vcmask 195712
        %1686 = vst.msk [vmem:[#allocation3] sm:$0xff] %vm1685, %v1683
        %1687 = vrot.lane.b32.xlu0 %v1341, 104
        %v1688 = vpop.permute.xlu0 %1687
        %1689 = vrot.lane.b32.xlu0 %v1335, 72
        %v1690 = vpop.permute.xlu0 %1689
        %v1692 = vsel %vm1345, %v1688, 0
        %v1695 = vsel %vm1345, %v1690, 0
        %1697 = vmatprep.subr.bf16.mxu0 0
        %1698 = vmatpush1.bf16.xpose.msra.mxu0 0
        %1699 = vmatprep.subr.bf16.mxu0 0
        %1700 = vmatpush1.bf16.xpose.msra.mxu0 0
        %1701 = vmatprep.subr.bf16.mxu0 0
        %1702 = vmatpush1.bf16.xpose.msra.mxu0 0
        %1703 = vmatprep.subr.bf16.mxu0 0
        %1704 = vmatpush1.bf16.xpose.msra.mxu0 0
        %1705 = vmatprep.subr.bf16.mxu0 0
        %1706 = vmatpush1.bf16.xpose.msra.mxu0 0
        %1707 = vmatprep.subr.bf16.mxu0 0
        %1708 = vmatpush1.bf16.xpose.msra.mxu0 0
        %1709 = vmatprep.subr.bf16.mxu0 0
        %1710 = vmatpush1.bf16.xpose.msra.mxu0 0
        %1711 = vmatprep.subr.bf16.mxu0 0
        %1712 = vmatpush1.bf16.xpose.msra.mxu0 %v1695
        %1713 = vmatprep.subr.bf16.mxu0 0
        %1714 = vmatpush2.bf16.xpose.msra.mxu0 0
        %1715 = vmatprep.subr.bf16.mxu0 0
        %1716 = vmatpush2.bf16.xpose.msra.mxu0 0
        %1717 = vmatprep.subr.bf16.mxu0 0
        %1718 = vmatpush2.bf16.xpose.msra.mxu0 0
        %1719 = vmatprep.subr.bf16.mxu0 0
        %1720 = vmatpush2.bf16.xpose.msra.mxu0 0
        %1721 = vmatprep.subr.bf16.mxu0 0
        %1722 = vmatpush2.bf16.xpose.msra.mxu0 0
        %1723 = vmatprep.subr.bf16.mxu0 0
        %1724 = vmatpush2.bf16.xpose.msra.mxu0 0
        %1725 = vmatprep.subr.bf16.mxu0 0
        %1726 = vmatpush2.bf16.xpose.msra.mxu0 0
        %1727 = vmatprep.subr.bf16.mxu0 0
        %1728 = vmatpush2.bf16.xpose.msra.mxu0 0
        %1729 = vmatprep.mubr.bf16.mxu0 0
        %1730 = vmatmul.mubr.bf16.gmra.mxu0 %v1692
        %v1731 = vpop.f32.mrf.mxu0
        %v1732 = vadd.f32 %v1201, %v1731
        %v1733 = vpop.f32.mrf.mxu0
        %v1734 = vpop.f32.mrf.mxu0
        %v1735 = vpop.f32.mrf.mxu0
        %1736 = vdwg.mxu0
        %v1737 = vsel %vm1345, %v1732, -inf
        %1738 = vmax.xlane.f32.xlu0 %v1737
        %v1739 = vpop.xlane.xlu0 %1738
        %v1740 = vsub.f32 %v1732, %v1739
        %v1741 = vmul.f32 %v1740, 1.442695
        %v1742 = vpow.pop %v1741
        %v1743 = vsel %vm1345, %v1742, 0.0
        %1744 = vadd.xlane.f32.xlu0 %v1743
        %v1745 = vpop.xlane.xlu0 %1744
        %v1746 = vrcp.pop %v1745
        %v1747 = vmul.f32 %v1742, %v1746
        %v1748 = vpack.c.bf16 %v1747, %v1747
        %1749 = vrot.lane.b32.xlu0 %v1335, 40
        %v1750 = vpop.permute.xlu0 %1749
        %v1752 = vsel %vm1345, %v1748, 0
        %v1755 = vsel %vm1409, %v1750, 0
        %1757 = vmatprep.subr.bf16.mxu0 0
        %1758 = vmatpush1.bf16.msra.mxu0 0
        %1759 = vmatprep.subr.bf16.mxu0 0
        %1760 = vmatpush1.bf16.msra.mxu0 0
        %1761 = vmatprep.subr.bf16.mxu0 0
        %1762 = vmatpush1.bf16.msra.mxu0 0
        %1763 = vmatprep.subr.bf16.mxu0 0
        %1764 = vmatpush1.bf16.msra.mxu0 0
        %1765 = vmatprep.subr.bf16.mxu0 0
        %1766 = vmatpush1.bf16.msra.mxu0 0
        %1767 = vmatprep.subr.bf16.mxu0 0
        %1768 = vmatpush1.bf16.msra.mxu0 0
        %1769 = vmatprep.subr.bf16.mxu0 0
        %1770 = vmatpush1.bf16.msra.mxu0 0
        %1771 = vmatprep.subr.bf16.mxu0 0
        %1772 = vmatpush1.bf16.msra.mxu0 %v1755
        %1773 = vmatprep.subr.bf16.mxu0 0
        %1774 = vmatpush2.bf16.msra.mxu0 0
        %1775 = vmatprep.subr.bf16.mxu0 0
        %1776 = vmatpush2.bf16.msra.mxu0 0
        %1777 = vmatprep.subr.bf16.mxu0 0
        %1778 = vmatpush2.bf16.msra.mxu0 0
        %1779 = vmatprep.subr.bf16.mxu0 0
        %1780 = vmatpush2.bf16.msra.mxu0 0
        %1781 = vmatprep.subr.bf16.mxu0 0
        %1782 = vmatpush2.bf16.msra.mxu0 0
        %1783 = vmatprep.subr.bf16.mxu0 0
        %1784 = vmatpush2.bf16.msra.mxu0 0
        %1785 = vmatprep.subr.bf16.mxu0 0
        %1786 = vmatpush2.bf16.msra.mxu0 0
        %1787 = vmatprep.subr.bf16.mxu0 0
        %1788 = vmatpush2.bf16.msra.mxu0 0
        %1789 = vmatprep.mubr.bf16.mxu0 0
        %1790 = vmatmul.mubr.bf16.gmra.mxu0 %v1752
        %v1791 = vpop.f32.mrf.mxu0
        %v1792 = vadd.f32 0.0, %v1791
        %v1793 = vpop.f32.mrf.mxu0
        %v1794 = vpop.f32.mrf.mxu0
        %v1795 = vpop.f32.mrf.mxu0
        %1796 = vdwg.mxu0
        %1798 = vrot.lane.b32.xlu0 %v1792, 24
        %v1799 = vpop.permute.xlu0 %1798
        %vm1801 = vcmask 261312
        %1802 = vst.msk [vmem:[#allocation3] sm:$0xff] %vm1801, %v1799
        %v1803 = vpack.c.bf16 %v1332, %v1332
        %v1804 = vrot.slane %v1335, 4
        %1805 = vrot.lane.b32.xlu0 %v1804, 96
        %v1806 = vpop.permute.xlu0 %1805
        %v1808 = vsel %vm1345, %v1803, 0
        %v1811 = vsel %vm1345, %v1806, 0
        %1813 = vmatprep.subr.bf16.mxu0 0
        %1814 = vmatpush1.bf16.xpose.msra.mxu0 0
        %1815 = vmatprep.subr.bf16.mxu0 0
        %1816 = vmatpush1.bf16.xpose.msra.mxu0 0
        %1817 = vmatprep.subr.bf16.mxu0 0
        %1818 = vmatpush1.bf16.xpose.msra.mxu0 0
        %1819 = vmatprep.subr.bf16.mxu0 0
        %1820 = vmatpush1.bf16.xpose.msra.mxu0 0
        %1821 = vmatprep.subr.bf16.mxu0 0
        %1822 = vmatpush1.bf16.xpose.msra.mxu0 0
        %1823 = vmatprep.subr.bf16.mxu0 0
        %1824 = vmatpush1.bf16.xpose.msra.mxu0 0
        %1825 = vmatprep.subr.bf16.mxu0 0
        %1826 = vmatpush1.bf16.xpose.msra.mxu0 0
        %1827 = vmatprep.subr.bf16.mxu0 0
        %1828 = vmatpush1.bf16.xpose.msra.mxu0 %v1811
        %1829 = vmatprep.subr.bf16.mxu0 0
        %1830 = vmatpush2.bf16.xpose.msra.mxu0 0
        %1831 = vmatprep.subr.bf16.mxu0 0
        %1832 = vmatpush2.bf16.xpose.msra.mxu0 0
        %1833 = vmatprep.subr.bf16.mxu0 0
        %1834 = vmatpush2.bf16.xpose.msra.mxu0 0
        %1835 = vmatprep.subr.bf16.mxu0 0
        %1836 = vmatpush2.bf16.xpose.msra.mxu0 0
        %1837 = vmatprep.subr.bf16.mxu0 0
        %1838 = vmatpush2.bf16.xpose.msra.mxu0 0
        %1839 = vmatprep.subr.bf16.mxu0 0
        %1840 = vmatpush2.bf16.xpose.msra.mxu0 0
        %1841 = vmatprep.subr.bf16.mxu0 0
        %1842 = vmatpush2.bf16.xpose.msra.mxu0 0
        %1843 = vmatprep.subr.bf16.mxu0 0
        %1844 = vmatpush2.bf16.xpose.msra.mxu0 0
        %1845 = vmatprep.mubr.bf16.mxu0 0
        %1846 = vmatmul.mubr.bf16.gmra.mxu0 %v1808
        %v1847 = vpop.f32.mrf.mxu0
        %v1848 = vadd.f32 %v1202, %v1847
        %v1849 = vpop.f32.mrf.mxu0
        %v1850 = vpop.f32.mrf.mxu0
        %v1851 = vpop.f32.mrf.mxu0
        %1852 = vdwg.mxu0
        %v1853 = vsel %vm1345, %v1848, -inf
        %1854 = vmax.xlane.f32.xlu0 %v1853
        %v1855 = vpop.xlane.xlu0 %1854
        %v1856 = vsub.f32 %v1848, %v1855
        %v1857 = vmul.f32 %v1856, 1.442695
        %v1858 = vpow.pop %v1857
        %v1859 = vsel %vm1345, %v1858, 0.0
        %1860 = vadd.xlane.f32.xlu0 %v1859
        %v1861 = vpop.xlane.xlu0 %1860
        %v1862 = vrcp.pop %v1861
        %v1863 = vmul.f32 %v1858, %v1862
        %v1864 = vpack.c.bf16 %v1863, %v1863
        %1865 = vrot.lane.b32.xlu0 %v1804, 64
        %v1866 = vpop.permute.xlu0 %1865
        %v1868 = vsel %vm1345, %v1864, 0
        %v1871 = vsel %vm1409, %v1866, 0
        %1873 = vmatprep.subr.bf16.mxu0 0
        %1874 = vmatpush1.bf16.msra.mxu0 0
        %1875 = vmatprep.subr.bf16.mxu0 0
        %1876 = vmatpush1.bf16.msra.mxu0 0
        %1877 = vmatprep.subr.bf16.mxu0 0
        %1878 = vmatpush1.bf16.msra.mxu0 0
        %1879 = vmatprep.subr.bf16.mxu0 0
        %1880 = vmatpush1.bf16.msra.mxu0 0
        %1881 = vmatprep.subr.bf16.mxu0 0
        %1882 = vmatpush1.bf16.msra.mxu0 0
        %1883 = vmatprep.subr.bf16.mxu0 0
        %1884 = vmatpush1.bf16.msra.mxu0 0
        %1885 = vmatprep.subr.bf16.mxu0 0
        %1886 = vmatpush1.bf16.msra.mxu0 0
        %1887 = vmatprep.subr.bf16.mxu0 0
        %1888 = vmatpush1.bf16.msra.mxu0 %v1871
        %1889 = vmatprep.subr.bf16.mxu0 0
        %1890 = vmatpush2.bf16.msra.mxu0 0
        %1891 = vmatprep.subr.bf16.mxu0 0
        %1892 = vmatpush2.bf16.msra.mxu0 0
        %1893 = vmatprep.subr.bf16.mxu0 0
        %1894 = vmatpush2.bf16.msra.mxu0 0
        %1895 = vmatprep.subr.bf16.mxu0 0
        %1896 = vmatpush2.bf16.msra.mxu0 0
        %1897 = vmatprep.subr.bf16.mxu0 0
        %1898 = vmatpush2.bf16.msra.mxu0 0
        %1899 = vmatprep.subr.bf16.mxu0 0
        %1900 = vmatpush2.bf16.msra.mxu0 0
        %1901 = vmatprep.subr.bf16.mxu0 0
        %1902 = vmatpush2.bf16.msra.mxu0 0
        %1903 = vmatprep.subr.bf16.mxu0 0
        %1904 = vmatpush2.bf16.msra.mxu0 0
        %1905 = vmatprep.mubr.bf16.mxu0 0
        %1906 = vmatmul.mubr.bf16.gmra.mxu0 %v1868
        %v1907 = vpop.f32.mrf.mxu0
        %v1908 = vadd.f32 0.0, %v1907
        %v1909 = vpop.f32.mrf.mxu0
        %v1910 = vpop.f32.mrf.mxu0
        %v1911 = vpop.f32.mrf.mxu0
        %1912 = vdwg.mxu0
        %1913 = vst.msk [vmem:[#allocation3 + $0x8] sm:$0xff] %vm1345, %v1908
        %1915 = vrot.lane.b32.xlu0 %v1803, 120
        %v1916 = vpop.permute.xlu0 %1915
        %1917 = vrot.lane.b32.xlu0 %v1804, 88
        %v1918 = vpop.permute.xlu0 %1917
        %v1920 = vsel %vm1345, %v1916, 0
        %v1923 = vsel %vm1345, %v1918, 0
        %1925 = vmatprep.subr.bf16.mxu0 0
        %1926 = vmatpush1.bf16.xpose.msra.mxu0 0
        %1927 = vmatprep.subr.bf16.mxu0 0
        %1928 = vmatpush1.bf16.xpose.msra.mxu0 0
        %1929 = vmatprep.subr.bf16.mxu0 0
        %1930 = vmatpush1.bf16.xpose.msra.mxu0 0
        %1931 = vmatprep.subr.bf16.mxu0 0
        %1932 = vmatpush1.bf16.xpose.msra.mxu0 0
        %1933 = vmatprep.subr.bf16.mxu0 0
        %1934 = vmatpush1.bf16.xpose.msra.mxu0 0
        %1935 = vmatprep.subr.bf16.mxu0 0
        %1936 = vmatpush1.bf16.xpose.msra.mxu0 0
        %1937 = vmatprep.subr.bf16.mxu0 0
        %1938 = vmatpush1.bf16.xpose.msra.mxu0 0
        %1939 = vmatprep.subr.bf16.mxu0 0
        %1940 = vmatpush1.bf16.xpose.msra.mxu0 %v1923
        %1941 = vmatprep.subr.bf16.mxu0 0
        %1942 = vmatpush2.bf16.xpose.msra.mxu0 0
        %1943 = vmatprep.subr.bf16.mxu0 0
        %1944 = vmatpush2.bf16.xpose.msra.mxu0 0
        %1945 = vmatprep.subr.bf16.mxu0 0
        %1946 = vmatpush2.bf16.xpose.msra.mxu0 0
        %1947 = vmatprep.subr.bf16.mxu0 0
        %1948 = vmatpush2.bf16.xpose.msra.mxu0 0
        %1949 = vmatprep.subr.bf16.mxu0 0
        %1950 = vmatpush2.bf16.xpose.msra.mxu0 0
        %1951 = vmatprep.subr.bf16.mxu0 0
        %1952 = vmatpush2.bf16.xpose.msra.mxu0 0
        %1953 = vmatprep.subr.bf16.mxu0 0
        %1954 = vmatpush2.bf16.xpose.msra.mxu0 0
        %1955 = vmatprep.subr.bf16.mxu0 0
        %1956 = vmatpush2.bf16.xpose.msra.mxu0 0
        %1957 = vmatprep.mubr.bf16.mxu0 0
        %1958 = vmatmul.mubr.bf16.gmra.mxu0 %v1920
        %v1959 = vpop.f32.mrf.mxu0
        %v1960 = vadd.f32 %v1202, %v1959
        %v1961 = vpop.f32.mrf.mxu0
        %v1962 = vpop.f32.mrf.mxu0
        %v1963 = vpop.f32.mrf.mxu0
        %1964 = vdwg.mxu0
        %v1965 = vsel %vm1345, %v1960, -inf
        %1966 = vmax.xlane.f32.xlu0 %v1965
        %v1967 = vpop.xlane.xlu0 %1966
        %v1968 = vsub.f32 %v1960, %v1967
        %v1969 = vmul.f32 %v1968, 1.442695
        %v1970 = vpow.pop %v1969
        %v1971 = vsel %vm1345, %v1970, 0.0
        %1972 = vadd.xlane.f32.xlu0 %v1971
        %v1973 = vpop.xlane.xlu0 %1972
        %v1974 = vrcp.pop %v1973
        %v1975 = vmul.f32 %v1970, %v1974
        %v1976 = vpack.c.bf16 %v1975, %v1975
        %1977 = vrot.lane.b32.xlu0 %v1804, 56
        %v1978 = vpop.permute.xlu0 %1977
        %v1980 = vsel %vm1345, %v1976, 0
        %v1983 = vsel %vm1409, %v1978, 0
        %1985 = vmatprep.subr.bf16.mxu0 0
        %1986 = vmatpush1.bf16.msra.mxu0 0
        %1987 = vmatprep.subr.bf16.mxu0 0
        %1988 = vmatpush1.bf16.msra.mxu0 0
        %1989 = vmatprep.subr.bf16.mxu0 0
        %1990 = vmatpush1.bf16.msra.mxu0 0
        %1991 = vmatprep.subr.bf16.mxu0 0
        %1992 = vmatpush1.bf16.msra.mxu0 0
        %1993 = vmatprep.subr.bf16.mxu0 0
        %1994 = vmatpush1.bf16.msra.mxu0 0
        %1995 = vmatprep.subr.bf16.mxu0 0
        %1996 = vmatpush1.bf16.msra.mxu0 0
        %1997 = vmatprep.subr.bf16.mxu0 0
        %1998 = vmatpush1.bf16.msra.mxu0 0
        %1999 = vmatprep.subr.bf16.mxu0 0
        %2000 = vmatpush1.bf16.msra.mxu0 %v1983
        %2001 = vmatprep.subr.bf16.mxu0 0
        %2002 = vmatpush2.bf16.msra.mxu0 0
        %2003 = vmatprep.subr.bf16.mxu0 0
        %2004 = vmatpush2.bf16.msra.mxu0 0
        %2005 = vmatprep.subr.bf16.mxu0 0
        %2006 = vmatpush2.bf16.msra.mxu0 0
        %2007 = vmatprep.subr.bf16.mxu0 0
        %2008 = vmatpush2.bf16.msra.mxu0 0
        %2009 = vmatprep.subr.bf16.mxu0 0
        %2010 = vmatpush2.bf16.msra.mxu0 0
        %2011 = vmatprep.subr.bf16.mxu0 0
        %2012 = vmatpush2.bf16.msra.mxu0 0
        %2013 = vmatprep.subr.bf16.mxu0 0
        %2014 = vmatpush2.bf16.msra.mxu0 0
        %2015 = vmatprep.subr.bf16.mxu0 0
        %2016 = vmatpush2.bf16.msra.mxu0 0
        %2017 = vmatprep.mubr.bf16.mxu0 0
        %2018 = vmatmul.mubr.bf16.gmra.mxu0 %v1980
        %v2019 = vpop.f32.mrf.mxu0
        %v2020 = vadd.f32 0.0, %v2019
        %v2021 = vpop.f32.mrf.mxu0
        %v2022 = vpop.f32.mrf.mxu0
        %v2023 = vpop.f32.mrf.mxu0
        %2024 = vdwg.mxu0
        %2026 = vrot.lane.b32.xlu0 %v2020, 8
        %v2027 = vpop.permute.xlu0 %2026
        %2029 = vst.msk [vmem:[#allocation3 + $0x8] sm:$0xff] %vm1569, %v2027
        %2030 = vrot.lane.b32.xlu0 %v1803, 112
        %v2031 = vpop.permute.xlu0 %2030
        %2032 = vrot.lane.b32.xlu0 %v1804, 80
        %v2033 = vpop.permute.xlu0 %2032
        %v2035 = vsel %vm1345, %v2031, 0
        %v2038 = vsel %vm1345, %v2033, 0
        %2040 = vmatprep.subr.bf16.mxu0 0
        %2041 = vmatpush1.bf16.xpose.msra.mxu0 0
        %2042 = vmatprep.subr.bf16.mxu0 0
        %2043 = vmatpush1.bf16.xpose.msra.mxu0 0
        %2044 = vmatprep.subr.bf16.mxu0 0
        %2045 = vmatpush1.bf16.xpose.msra.mxu0 0
        %2046 = vmatprep.subr.bf16.mxu0 0
        %2047 = vmatpush1.bf16.xpose.msra.mxu0 0
        %2048 = vmatprep.subr.bf16.mxu0 0
        %2049 = vmatpush1.bf16.xpose.msra.mxu0 0
        %2050 = vmatprep.subr.bf16.mxu0 0
        %2051 = vmatpush1.bf16.xpose.msra.mxu0 0
        %2052 = vmatprep.subr.bf16.mxu0 0
        %2053 = vmatpush1.bf16.xpose.msra.mxu0 0
        %2054 = vmatprep.subr.bf16.mxu0 0
        %2055 = vmatpush1.bf16.xpose.msra.mxu0 %v2038
        %2056 = vmatprep.subr.bf16.mxu0 0
        %2057 = vmatpush2.bf16.xpose.msra.mxu0 0
        %2058 = vmatprep.subr.bf16.mxu0 0
        %2059 = vmatpush2.bf16.xpose.msra.mxu0 0
        %2060 = vmatprep.subr.bf16.mxu0 0
        %2061 = vmatpush2.bf16.xpose.msra.mxu0 0
        %2062 = vmatprep.subr.bf16.mxu0 0
        %2063 = vmatpush2.bf16.xpose.msra.mxu0 0
        %2064 = vmatprep.subr.bf16.mxu0 0
        %2065 = vmatpush2.bf16.xpose.msra.mxu0 0
        %2066 = vmatprep.subr.bf16.mxu0 0
        %2067 = vmatpush2.bf16.xpose.msra.mxu0 0
        %2068 = vmatprep.subr.bf16.mxu0 0
        %2069 = vmatpush2.bf16.xpose.msra.mxu0 0
        %2070 = vmatprep.subr.bf16.mxu0 0
        %2071 = vmatpush2.bf16.xpose.msra.mxu0 0
        %2072 = vmatprep.mubr.bf16.mxu0 0
        %2073 = vmatmul.mubr.bf16.gmra.mxu0 %v2035
        %v2074 = vpop.f32.mrf.mxu0
        %v2075 = vadd.f32 %v1202, %v2074
        %v2076 = vpop.f32.mrf.mxu0
        %v2077 = vpop.f32.mrf.mxu0
        %v2078 = vpop.f32.mrf.mxu0
        %2079 = vdwg.mxu0
        %v2080 = vsel %vm1345, %v2075, -inf
        %2081 = vmax.xlane.f32.xlu0 %v2080
        %v2082 = vpop.xlane.xlu0 %2081
        %v2083 = vsub.f32 %v2075, %v2082
        %v2084 = vmul.f32 %v2083, 1.442695
        %v2085 = vpow.pop %v2084
        %v2086 = vsel %vm1345, %v2085, 0.0
        %2087 = vadd.xlane.f32.xlu0 %v2086
        %v2088 = vpop.xlane.xlu0 %2087
        %v2089 = vrcp.pop %v2088
        %v2090 = vmul.f32 %v2085, %v2089
        %v2091 = vpack.c.bf16 %v2090, %v2090
        %2092 = vrot.lane.b32.xlu0 %v1804, 48
        %v2093 = vpop.permute.xlu0 %2092
        %v2095 = vsel %vm1345, %v2091, 0
        %v2098 = vsel %vm1409, %v2093, 0
        %2100 = vmatprep.subr.bf16.mxu0 0
        %2101 = vmatpush1.bf16.msra.mxu0 0
        %2102 = vmatprep.subr.bf16.mxu0 0
        %2103 = vmatpush1.bf16.msra.mxu0 0
        %2104 = vmatprep.subr.bf16.mxu0 0
        %2105 = vmatpush1.bf16.msra.mxu0 0
        %2106 = vmatprep.subr.bf16.mxu0 0
        %2107 = vmatpush1.bf16.msra.mxu0 0
        %2108 = vmatprep.subr.bf16.mxu0 0
        %2109 = vmatpush1.bf16.msra.mxu0 0
        %2110 = vmatprep.subr.bf16.mxu0 0
        %2111 = vmatpush1.bf16.msra.mxu0 0
        %2112 = vmatprep.subr.bf16.mxu0 0
        %2113 = vmatpush1.bf16.msra.mxu0 0
        %2114 = vmatprep.subr.bf16.mxu0 0
        %2115 = vmatpush1.bf16.msra.mxu0 %v2098
        %2116 = vmatprep.subr.bf16.mxu0 0
        %2117 = vmatpush2.bf16.msra.mxu0 0
        %2118 = vmatprep.subr.bf16.mxu0 0
        %2119 = vmatpush2.bf16.msra.mxu0 0
        %2120 = vmatprep.subr.bf16.mxu0 0
        %2121 = vmatpush2.bf16.msra.mxu0 0
        %2122 = vmatprep.subr.bf16.mxu0 0
        %2123 = vmatpush2.bf16.msra.mxu0 0
        %2124 = vmatprep.subr.bf16.mxu0 0
        %2125 = vmatpush2.bf16.msra.mxu0 0
        %2126 = vmatprep.subr.bf16.mxu0 0
        %2127 = vmatpush2.bf16.msra.mxu0 0
        %2128 = vmatprep.subr.bf16.mxu0 0
        %2129 = vmatpush2.bf16.msra.mxu0 0
        %2130 = vmatprep.subr.bf16.mxu0 0
        %2131 = vmatpush2.bf16.msra.mxu0 0
        %2132 = vmatprep.mubr.bf16.mxu0 0
        %2133 = vmatmul.mubr.bf16.gmra.mxu0 %v2095
        %v2134 = vpop.f32.mrf.mxu0
        %v2135 = vadd.f32 0.0, %v2134
        %v2136 = vpop.f32.mrf.mxu0
        %v2137 = vpop.f32.mrf.mxu0
        %v2138 = vpop.f32.mrf.mxu0
        %2139 = vdwg.mxu0
        %2141 = vrot.lane.b32.xlu0 %v2135, 16
        %v2142 = vpop.permute.xlu0 %2141
        %2144 = vst.msk [vmem:[#allocation3 + $0x8] sm:$0xff] %vm1685, %v2142
        %2145 = vrot.lane.b32.xlu0 %v1803, 104
        %v2146 = vpop.permute.xlu0 %2145
        %2147 = vrot.lane.b32.xlu0 %v1804, 72
        %v2148 = vpop.permute.xlu0 %2147
        %v2150 = vsel %vm1345, %v2146, 0
        %v2153 = vsel %vm1345, %v2148, 0
        %2155 = vmatprep.subr.bf16.mxu0 0
        %2156 = vmatpush1.bf16.xpose.msra.mxu0 0
        %2157 = vmatprep.subr.bf16.mxu0 0
        %2158 = vmatpush1.bf16.xpose.msra.mxu0 0
        %2159 = vmatprep.subr.bf16.mxu0 0
        %2160 = vmatpush1.bf16.xpose.msra.mxu0 0
        %2161 = vmatprep.subr.bf16.mxu0 0
        %2162 = vmatpush1.bf16.xpose.msra.mxu0 0
        %2163 = vmatprep.subr.bf16.mxu0 0
        %2164 = vmatpush1.bf16.xpose.msra.mxu0 0
        %2165 = vmatprep.subr.bf16.mxu0 0
        %2166 = vmatpush1.bf16.xpose.msra.mxu0 0
        %2167 = vmatprep.subr.bf16.mxu0 0
        %2168 = vmatpush1.bf16.xpose.msra.mxu0 0
        %2169 = vmatprep.subr.bf16.mxu0 0
        %2170 = vmatpush1.bf16.xpose.msra.mxu0 %v2153
        %2171 = vmatprep.subr.bf16.mxu0 0
        %2172 = vmatpush2.bf16.xpose.msra.mxu0 0
        %2173 = vmatprep.subr.bf16.mxu0 0
        %2174 = vmatpush2.bf16.xpose.msra.mxu0 0
        %2175 = vmatprep.subr.bf16.mxu0 0
        %2176 = vmatpush2.bf16.xpose.msra.mxu0 0
        %2177 = vmatprep.subr.bf16.mxu0 0
        %2178 = vmatpush2.bf16.xpose.msra.mxu0 0
        %2179 = vmatprep.subr.bf16.mxu0 0
        %2180 = vmatpush2.bf16.xpose.msra.mxu0 0
        %2181 = vmatprep.subr.bf16.mxu0 0
        %2182 = vmatpush2.bf16.xpose.msra.mxu0 0
        %2183 = vmatprep.subr.bf16.mxu0 0
        %2184 = vmatpush2.bf16.xpose.msra.mxu0 0
        %2185 = vmatprep.subr.bf16.mxu0 0
        %2186 = vmatpush2.bf16.xpose.msra.mxu0 0
        %2187 = vmatprep.mubr.bf16.mxu0 0
        %2188 = vmatmul.mubr.bf16.gmra.mxu0 %v2150
        %v2189 = vpop.f32.mrf.mxu0
        %v2190 = vadd.f32 %v1202, %v2189
        %v2191 = vpop.f32.mrf.mxu0
        %v2192 = vpop.f32.mrf.mxu0
        %v2193 = vpop.f32.mrf.mxu0
        %2194 = vdwg.mxu0
        %v2195 = vsel %vm1345, %v2190, -inf
        %2196 = vmax.xlane.f32.xlu0 %v2195
        %v2197 = vpop.xlane.xlu0 %2196
        %v2198 = vsub.f32 %v2190, %v2197
        %v2199 = vmul.f32 %v2198, 1.442695
        %v2200 = vpow.pop %v2199
        %v2201 = vsel %vm1345, %v2200, 0.0
        %2202 = vadd.xlane.f32.xlu0 %v2201
        %v2203 = vpop.xlane.xlu0 %2202
        %v2204 = vrcp.pop %v2203
        %v2205 = vmul.f32 %v2200, %v2204
        %v2206 = vpack.c.bf16 %v2205, %v2205
        %2207 = vrot.lane.b32.xlu0 %v1804, 40
        %v2208 = vpop.permute.xlu0 %2207
        %v2210 = vsel %vm1345, %v2206, 0
        %v2213 = vsel %vm1409, %v2208, 0
        %2215 = vmatprep.subr.bf16.mxu0 0
        %2216 = vmatpush1.bf16.msra.mxu0 0
        %2217 = vmatprep.subr.bf16.mxu0 0
        %2218 = vmatpush1.bf16.msra.mxu0 0
        %2219 = vmatprep.subr.bf16.mxu0 0
        %2220 = vmatpush1.bf16.msra.mxu0 0
        %2221 = vmatprep.subr.bf16.mxu0 0
        %2222 = vmatpush1.bf16.msra.mxu0 0
        %2223 = vmatprep.subr.bf16.mxu0 0
        %2224 = vmatpush1.bf16.msra.mxu0 0
        %2225 = vmatprep.subr.bf16.mxu0 0
        %2226 = vmatpush1.bf16.msra.mxu0 0
        %2227 = vmatprep.subr.bf16.mxu0 0
        %2228 = vmatpush1.bf16.msra.mxu0 0
        %2229 = vmatprep.subr.bf16.mxu0 0
        %2230 = vmatpush1.bf16.msra.mxu0 %v2213
        %2231 = vmatprep.subr.bf16.mxu0 0
        %2232 = vmatpush2.bf16.msra.mxu0 0
        %2233 = vmatprep.subr.bf16.mxu0 0
        %2234 = vmatpush2.bf16.msra.mxu0 0
        %2235 = vmatprep.subr.bf16.mxu0 0
        %2236 = vmatpush2.bf16.msra.mxu0 0
        %2237 = vmatprep.subr.bf16.mxu0 0
        %2238 = vmatpush2.bf16.msra.mxu0 0
        %2239 = vmatprep.subr.bf16.mxu0 0
        %2240 = vmatpush2.bf16.msra.mxu0 0
        %2241 = vmatprep.subr.bf16.mxu0 0
        %2242 = vmatpush2.bf16.msra.mxu0 0
        %2243 = vmatprep.subr.bf16.mxu0 0
        %2244 = vmatpush2.bf16.msra.mxu0 0
        %2245 = vmatprep.subr.bf16.mxu0 0
        %2246 = vmatpush2.bf16.msra.mxu0 0
        %2247 = vmatprep.mubr.bf16.mxu0 0
        %2248 = vmatmul.mubr.bf16.gmra.mxu0 %v2210
        %v2249 = vpop.f32.mrf.mxu0
        %v2250 = vadd.f32 0.0, %v2249
        %v2251 = vpop.f32.mrf.mxu0
        %v2252 = vpop.f32.mrf.mxu0
        %v2253 = vpop.f32.mrf.mxu0
        %2254 = vdwg.mxu0
        %2256 = vrot.lane.b32.xlu0 %v2250, 24
        %v2257 = vpop.permute.xlu0 %2256
        %2259 = vst.msk [vmem:[#allocation3 + $0x8] sm:$0xff] %vm1801, %v2257
        %v2260 = vld [vmem:[#allocation3] sm:$0xff]
        %v2261 = vld [vmem:[#allocation3 + $0x8] sm:$0xff]
        %v2262 = vpack.c.bf16 %v2261, %v2260
        %v2264 = vlaneseq
        %v2265 = vshrl.u32 %v2264, 7
        %v2266 = vsub.s32 0, %v2265
        %v2267 = vrot.slane %v1340, %v2266
        %v2273 = vunpack.c.l.b16 %v1336
        %v2274 = vunpack.c.l.b16 %v1337
        %v2275 = vunpack.c.l.b16 %v1338
        %v2276 = vunpack.c.l.b16 %v1339
        %v2277 = vpack.c.b16 %v2274, %v2273
        %v2278 = vpack.c.b16 %v2276, %v2275
        %v2282 = vsel %vm1213, %v2262, 0
        %2284 = vmatprep.subr.bf16.mxu0 0
        %2285 = vmatpush1.bf16.msra.mxu0 0
        %2286 = vmatprep.subr.bf16.mxu0 0
        %2287 = vmatpush1.bf16.msra.mxu0 0
        %2288 = vmatprep.subr.bf16.mxu0 0
        %2289 = vmatpush1.bf16.msra.mxu0 0
        %2290 = vmatprep.subr.bf16.mxu0 0
        %2291 = vmatpush1.bf16.msra.mxu0 0
        %2292 = vmatprep.subr.bf16.mxu0 0
        %2293 = vmatpush1.bf16.msra.mxu0 0
        %2294 = vmatprep.subr.bf16.mxu0 0
        %2295 = vmatpush1.bf16.msra.mxu0 0
        %2296 = vmatprep.subr.bf16.mxu0 0
        %2297 = vmatpush1.bf16.msra.mxu0 %v2278
        %2298 = vmatprep.subr.bf16.mxu0 0
        %2299 = vmatpush1.bf16.msra.mxu0 %v2277
        %2300 = vmatprep.subr.bf16.mxu0 0
        %2301 = vmatpush2.bf16.msra.mxu0 0
        %2302 = vmatprep.subr.bf16.mxu0 0
        %2303 = vmatpush2.bf16.msra.mxu0 0
        %2304 = vmatprep.subr.bf16.mxu0 0
        %2305 = vmatpush2.bf16.msra.mxu0 0
        %2306 = vmatprep.subr.bf16.mxu0 0
        %2307 = vmatpush2.bf16.msra.mxu0 0
        %2308 = vmatprep.subr.bf16.mxu0 0
        %2309 = vmatpush2.bf16.msra.mxu0 0
        %2310 = vmatprep.subr.bf16.mxu0 0
        %2311 = vmatpush2.bf16.msra.mxu0 0
        %2312 = vmatprep.subr.bf16.mxu0 0
        %2313 = vmatpush2.bf16.msra.mxu0 0
        %2314 = vmatprep.subr.bf16.mxu0 0
        %2315 = vmatpush2.bf16.msra.mxu0 0
        %2316 = vmatprep.mubr.bf16.mxu0 0
        %2317 = vmatmul.mubr.bf16.gmra.mxu0 %v2282
        %v2318 = vpop.f32.mrf.mxu0
        %v2319 = vadd.f32 %v2267, %v2318
        %v2320 = vpop.f32.mrf.mxu0
        %v2321 = vpop.f32.mrf.mxu0
        %v2322 = vadd.f32 %v2267, %v2321
        %v2323 = vpop.f32.mrf.mxu0
        %2324 = vdwg.mxu0
        %v2325 = vadd.f32 %v1209, %v2319
        %v2326 = vadd.f32 %v1210, %v2322
        %v2327 = vld [vmem:[%s1180 + $0x1] sm:$0x1]
        %v2328 = vld [vmem:[%s1184 + $0x1] sm:$0x1]
        %v2329 = vsel %vm1213, %v2325, 0.0
        %2330 = vadd.xlane.f32.xlu0 %v2329
        %v2331 = vpop.xlane.xlu0 %2330
        %v2332 = vsel %vm1213, %v2326, 0.0
        %2333 = vadd.xlane.f32.xlu0 %v2332
        %v2334 = vpop.xlane.xlu0 %2333
        %v2335 = vmul.f32 %v2331, %v1220
        %v2336 = vmul.f32 %v2334, %v1220
        %v2337 = vsub.f32 %v2325, %v2335
        %v2338 = vsub.f32 %v2326, %v2336
        %v2339 = vmul.f32 %v2337, %v2337
        %v2340 = vmul.f32 %v2338, %v2338
        %v2341 = vsel %vm1213, %v2339, 0.0
        %2342 = vadd.xlane.f32.xlu0 %v2341
        %v2343 = vpop.xlane.xlu0 %2342
        %v2344 = vsel %vm1213, %v2340, 0.0
        %2345 = vadd.xlane.f32.xlu0 %v2344
        %v2346 = vpop.xlane.xlu0 %2345
        %v2347 = vmul.f32 %v2343, 0.032258064
        %v2348 = vmul.f32 %v2346, 0.032258064
        %v2349 = vrsqrt.pop %v2347
        %v2350 = vmul.f32 %v2347, %v2349
        %vm2351 = vcmp.eq.f32.partialorder %v2347, inf
        %v2352 = vsel %vm2351, %v2347, %v2350
        %vm2353 = vcmp.eq.f32.partialorder %v2347, 0.0
        %v2354 = vand.u32 %v2347, 2147483648
        %v2355 = vsel %vm2353, %v2354, %v2352
        %v2356 = vrsqrt.pop %v2348
        %v2357 = vmul.f32 %v2348, %v2356
        %vm2358 = vcmp.eq.f32.partialorder %v2348, inf
        %v2359 = vsel %vm2358, %v2348, %v2357
        %vm2360 = vcmp.eq.f32.partialorder %v2348, 0.0
        %v2361 = vand.u32 %v2348, 2147483648
        %v2362 = vsel %vm2360, %v2361, %v2359
        %v2363 = vadd.f32 %v2355, 1e-06
        %v2364 = vadd.f32 %v2362, 1e-06
        %v2365 = vrcp.pop %v2363
        %v2366 = vrcp.pop %v2364
        %v2367 = vmul.f32 %v2337, %v2365
        %v2368 = vmul.f32 %v2338, %v2366
        %v2369 = vlaneseq
        %v2370 = vshrl.u32 %v2369, 7
        %v2371 = vsub.s32 0, %v2370
        %v2372 = vrot.slane %v2327, %v2371
        %v2373 = vmul.f32 %v2372, %v2367
        %v2374 = vmul.f32 %v2372, %v2368
        %v2375 = vlaneseq
        %v2376 = vshrl.u32 %v2375, 7
        %v2377 = vsub.s32 0, %v2376
        %v2378 = vrot.slane %v2328, %v2377
        %v2379 = vadd.f32 %v2373, %v2378
        %v2380 = vadd.f32 %v2374, %v2378
        %v2381 = vpack.c.bf16 %v2380, %v2379
        %v2382 = vld [vmem:[%s1156] sm:$0xf]
        %v2383 = vld [vmem:[%s1156 + $0x4] sm:$0xf]
        %v2384 = vld [vmem:[%s1156 + $0x8] sm:$0xf]
        %v2385 = vld [vmem:[%s1156 + $0xc] sm:$0xf]
        %v2386 = vld [vmem:[%s946] sm:$0x1]
        %v2388 = vlaneseq
        %v2389 = vshrl.u32 %v2388, 7
        %v2390 = vsub.s32 0, %v2389
        %v2391 = vrot.slane %v2386, %v2390
        %v2397 = vunpack.c.l.b16 %v2382
        %v2398 = vunpack.c.l.b16 %v2383
        %v2399 = vunpack.c.l.b16 %v2384
        %v2400 = vunpack.c.l.b16 %v2385
        %v2401 = vpack.c.b16 %v2398, %v2397
        %v2402 = vpack.c.b16 %v2400, %v2399
        %v2406 = vsel %vm1213, %v2381, 0
        %2408 = vmatprep.subr.bf16.mxu0 0
        %2409 = vmatpush1.bf16.msra.mxu0 0
        %2410 = vmatprep.subr.bf16.mxu0 0
        %2411 = vmatpush1.bf16.msra.mxu0 0
        %2412 = vmatprep.subr.bf16.mxu0 0
        %2413 = vmatpush1.bf16.msra.mxu0 0
        %2414 = vmatprep.subr.bf16.mxu0 0
        %2415 = vmatpush1.bf16.msra.mxu0 0
        %2416 = vmatprep.subr.bf16.mxu0 0
        %2417 = vmatpush1.bf16.msra.mxu0 0
        %2418 = vmatprep.subr.bf16.mxu0 0
        %2419 = vmatpush1.bf16.msra.mxu0 0
        %2420 = vmatprep.subr.bf16.mxu0 0
        %2421 = vmatpush1.bf16.msra.mxu0 %v2402
        %2422 = vmatprep.subr.bf16.mxu0 0
        %2423 = vmatpush1.bf16.msra.mxu0 %v2401
        %2424 = vmatprep.subr.bf16.mxu0 0
        %2425 = vmatpush2.bf16.msra.mxu0 0
        %2426 = vmatprep.subr.bf16.mxu0 0
        %2427 = vmatpush2.bf16.msra.mxu0 0
        %2428 = vmatprep.subr.bf16.mxu0 0
        %2429 = vmatpush2.bf16.msra.mxu0 0
        %2430 = vmatprep.subr.bf16.mxu0 0
        %2431 = vmatpush2.bf16.msra.mxu0 0
        %2432 = vmatprep.subr.bf16.mxu0 0
        %2433 = vmatpush2.bf16.msra.mxu0 0
        %2434 = vmatprep.subr.bf16.mxu0 0
        %2435 = vmatpush2.bf16.msra.mxu0 0
        %2436 = vmatprep.subr.bf16.mxu0 0
        %2437 = vmatpush2.bf16.msra.mxu0 0
        %2438 = vmatprep.subr.bf16.mxu0 0
        %2439 = vmatpush2.bf16.msra.mxu0 0
        %2440 = vmatprep.mubr.bf16.mxu0 0
        %2441 = vmatmul.mubr.bf16.gmra.mxu0 %v2406
        %v2442 = vpop.f32.mrf.mxu0
        %v2443 = vadd.f32 %v2391, %v2442
        %v2444 = vpop.f32.mrf.mxu0
        %v2445 = vpop.f32.mrf.mxu0
        %v2446 = vadd.f32 %v2391, %v2445
        %v2447 = vpop.f32.mrf.mxu0
        %2448 = vdwg.mxu0
        %v2449 = vld [vmem:[%s1134] sm:$0xff]
        %v2450 = vld [vmem:[%s1134 + $0x8] sm:$0x3]
        %v2451 = vpack.c.bf16 %v2450, %v2449
        %v2452 = vld [vmem:[%s1161] sm:$0xf]
        %v2453 = vld [vmem:[%s1161 + $0x4] sm:$0xf]
        %v2454 = vld [vmem:[%s1161 + $0x8] sm:$0xf]
        %v2455 = vld [vmem:[%s1161 + $0xc] sm:$0xf]
        %v2456 = vld [vmem:[%s954] sm:$0x1]
        %v2458 = vlaneseq
        %v2459 = vshrl.u32 %v2458, 7
        %v2460 = vsub.s32 0, %v2459
        %v2461 = vrot.slane %v2456, %v2460
        %v2467 = vunpack.c.l.b16 %v2452
        %v2468 = vunpack.c.l.b16 %v2453
        %v2469 = vunpack.c.l.b16 %v2454
        %v2470 = vunpack.c.l.b16 %v2455
        %v2471 = vpack.c.b16 %v2468, %v2467
        %v2472 = vpack.c.b16 %v2470, %v2469
        %v2476 = vsel %vm1213, %v2451, 0
        %2478 = vmatprep.subr.bf16.mxu0 0
        %2479 = vmatpush1.bf16.msra.mxu0 0
        %2480 = vmatprep.subr.bf16.mxu0 0
        %2481 = vmatpush1.bf16.msra.mxu0 0
        %2482 = vmatprep.subr.bf16.mxu0 0
        %2483 = vmatpush1.bf16.msra.mxu0 0
        %2484 = vmatprep.subr.bf16.mxu0 0
        %2485 = vmatpush1.bf16.msra.mxu0 0
        %2486 = vmatprep.subr.bf16.mxu0 0
        %2487 = vmatpush1.bf16.msra.mxu0 0
        %2488 = vmatprep.subr.bf16.mxu0 0
        %2489 = vmatpush1.bf16.msra.mxu0 0
        %2490 = vmatprep.subr.bf16.mxu0 0
        %2491 = vmatpush1.bf16.msra.mxu0 %v2472
        %2492 = vmatprep.subr.bf16.mxu0 0
        %2493 = vmatpush1.bf16.msra.mxu0 %v2471
        %2494 = vmatprep.subr.bf16.mxu0 0
        %2495 = vmatpush2.bf16.msra.mxu0 0
        %2496 = vmatprep.subr.bf16.mxu0 0
        %2497 = vmatpush2.bf16.msra.mxu0 0
        %2498 = vmatprep.subr.bf16.mxu0 0
        %2499 = vmatpush2.bf16.msra.mxu0 0
        %2500 = vmatprep.subr.bf16.mxu0 0
        %2501 = vmatpush2.bf16.msra.mxu0 0
        %2502 = vmatprep.subr.bf16.mxu0 0
        %2503 = vmatpush2.bf16.msra.mxu0 0
        %2504 = vmatprep.subr.bf16.mxu0 0
        %2505 = vmatpush2.bf16.msra.mxu0 0
        %2506 = vmatprep.subr.bf16.mxu0 0
        %2507 = vmatpush2.bf16.msra.mxu0 0
        %2508 = vmatprep.subr.bf16.mxu0 0
        %2509 = vmatpush2.bf16.msra.mxu0 0
        %2510 = vmatprep.mubr.bf16.mxu0 0
        %2511 = vmatmul.mubr.bf16.gmra.mxu0 %v2476
        %v2512 = vpop.f32.mrf.mxu0
        %v2513 = vadd.f32 %v2461, %v2512
        %v2514 = vpop.f32.mrf.mxu0
        %v2515 = vpop.f32.mrf.mxu0
        %v2516 = vadd.f32 %v2461, %v2515
        %v2517 = vpop.f32.mrf.mxu0
        %2518 = vdwg.mxu0
        %v2519 = vpack.c.bf16 %v2516, %v2513
        %s2520 = scalar_lea.vmem %s1134, 16
        %v2521 = vld [vmem:[%s2520] sm:$0xff]
        %v2522 = vld [vmem:[%s2520 + $0x8] sm:$0x3]
        %v2523 = vpack.c.bf16 %v2522, %v2521
        %v2525 = vsel %vm1213, %v2523, 0
        %2527 = vmatprep.subr.bf16.mxu0 0
        %2528 = vmatpush1.bf16.msra.mxu0 0
        %2529 = vmatprep.subr.bf16.mxu0 0
        %2530 = vmatpush1.bf16.msra.mxu0 0
        %2531 = vmatprep.subr.bf16.mxu0 0
        %2532 = vmatpush1.bf16.msra.mxu0 0
        %2533 = vmatprep.subr.bf16.mxu0 0
        %2534 = vmatpush1.bf16.msra.mxu0 0
        %2535 = vmatprep.subr.bf16.mxu0 0
        %2536 = vmatpush1.bf16.msra.mxu0 0
        %2537 = vmatprep.subr.bf16.mxu0 0
        %2538 = vmatpush1.bf16.msra.mxu0 0
        %2539 = vmatprep.subr.bf16.mxu0 0
        %2540 = vmatpush1.bf16.msra.mxu0 %v2472
        %2541 = vmatprep.subr.bf16.mxu0 0
        %2542 = vmatpush1.bf16.msra.mxu0 %v2471
        %2543 = vmatprep.subr.bf16.mxu0 0
        %2544 = vmatpush2.bf16.msra.mxu0 0
        %2545 = vmatprep.subr.bf16.mxu0 0
        %2546 = vmatpush2.bf16.msra.mxu0 0
        %2547 = vmatprep.subr.bf16.mxu0 0
        %2548 = vmatpush2.bf16.msra.mxu0 0
        %2549 = vmatprep.subr.bf16.mxu0 0
        %2550 = vmatpush2.bf16.msra.mxu0 0
        %2551 = vmatprep.subr.bf16.mxu0 0
        %2552 = vmatpush2.bf16.msra.mxu0 0
        %2553 = vmatprep.subr.bf16.mxu0 0
        %2554 = vmatpush2.bf16.msra.mxu0 0
        %2555 = vmatprep.subr.bf16.mxu0 0
        %2556 = vmatpush2.bf16.msra.mxu0 0
        %2557 = vmatprep.subr.bf16.mxu0 0
        %2558 = vmatpush2.bf16.msra.mxu0 0
        %2559 = vmatprep.mubr.bf16.mxu0 0
        %2560 = vmatmul.mubr.bf16.gmra.mxu0 %v2525
        %v2561 = vpop.f32.mrf.mxu0
        %v2562 = vadd.f32 %v2461, %v2561
        %v2563 = vpop.f32.mrf.mxu0
        %v2564 = vpop.f32.mrf.mxu0
        %v2565 = vadd.f32 %v2461, %v2564
        %v2566 = vpop.f32.mrf.mxu0
        %2567 = vdwg.mxu0
        %v2568 = vpack.c.bf16 %v2565, %v2562
        %v2569 = vld [vmem:[%s1166] sm:$0xf]
        %v2570 = vld [vmem:[%s1166 + $0x4] sm:$0xf]
        %v2571 = vld [vmem:[%s1166 + $0x8] sm:$0xf]
        %v2572 = vld [vmem:[%s1166 + $0xc] sm:$0xf]
        %v2573 = vld [vmem:[%s962] sm:$0x1]
        %v2574 = vpack.c.bf16 %v2443, %v2443
        %v2576 = vlaneseq
        %v2577 = vshrl.u32 %v2576, 7
        %v2578 = vsub.s32 0, %v2577
        %v2579 = vrot.slane %v1207, %v2578
        %v2582 = vsel %vm1345, %v2574, 0
        %v2585 = vsel %vm1345, %v2519, 0
        %2587 = vmatprep.subr.bf16.mxu0 0
        %2588 = vmatpush1.bf16.xpose.msra.mxu0 0
        %2589 = vmatprep.subr.bf16.mxu0 0
        %2590 = vmatpush1.bf16.xpose.msra.mxu0 0
        %2591 = vmatprep.subr.bf16.mxu0 0
        %2592 = vmatpush1.bf16.xpose.msra.mxu0 0
        %2593 = vmatprep.subr.bf16.mxu0 0
        %2594 = vmatpush1.bf16.xpose.msra.mxu0 0
        %2595 = vmatprep.subr.bf16.mxu0 0
        %2596 = vmatpush1.bf16.xpose.msra.mxu0 0
        %2597 = vmatprep.subr.bf16.mxu0 0
        %2598 = vmatpush1.bf16.xpose.msra.mxu0 0
        %2599 = vmatprep.subr.bf16.mxu0 0
        %2600 = vmatpush1.bf16.xpose.msra.mxu0 0
        %2601 = vmatprep.subr.bf16.mxu0 0
        %2602 = vmatpush1.bf16.xpose.msra.mxu0 %v2585
        %2603 = vmatprep.subr.bf16.mxu0 0
        %2604 = vmatpush2.bf16.xpose.msra.mxu0 0
        %2605 = vmatprep.subr.bf16.mxu0 0
        %2606 = vmatpush2.bf16.xpose.msra.mxu0 0
        %2607 = vmatprep.subr.bf16.mxu0 0
        %2608 = vmatpush2.bf16.xpose.msra.mxu0 0
        %2609 = vmatprep.subr.bf16.mxu0 0
        %2610 = vmatpush2.bf16.xpose.msra.mxu0 0
        %2611 = vmatprep.subr.bf16.mxu0 0
        %2612 = vmatpush2.bf16.xpose.msra.mxu0 0
        %2613 = vmatprep.subr.bf16.mxu0 0
        %2614 = vmatpush2.bf16.xpose.msra.mxu0 0
        %2615 = vmatprep.subr.bf16.mxu0 0
        %2616 = vmatpush2.bf16.xpose.msra.mxu0 0
        %2617 = vmatprep.subr.bf16.mxu0 0
        %2618 = vmatpush2.bf16.xpose.msra.mxu0 0
        %2619 = vmatprep.mubr.bf16.mxu0 0
        %2620 = vmatmul.mubr.bf16.gmra.mxu0 %v2582
        %v2621 = vpop.f32.mrf.mxu0
        %v2622 = vadd.f32 %v2579, %v2621
        %v2623 = vpop.f32.mrf.mxu0
        %v2624 = vpop.f32.mrf.mxu0
        %v2625 = vpop.f32.mrf.mxu0
        %2626 = vdwg.mxu0
        %vm2627 = vcmask 80896
        %v2628 = vsel %vm2627, %v2622, -inf
        %2629 = vmax.xlane.f32.xlu0 %v2628
        %v2630 = vpop.xlane.xlu0 %2629
        %v2631 = vsub.f32 %v2622, %v2630
        %v2632 = vmul.f32 %v2631, 1.442695
        %v2633 = vpow.pop %v2632
        %v2634 = vsel %vm2627, %v2633, 0.0
        %2635 = vadd.xlane.f32.xlu0 %v2634
        %v2636 = vpop.xlane.xlu0 %2635
        %v2637 = vrcp.pop %v2636
        %v2638 = vmul.f32 %v2633, %v2637
        %v2639 = vpack.c.bf16 %v2638, %v2638
        %2641 = vrot.lane.b32.xlu0 %v2519, 96
        %v2642 = vpop.permute.xlu0 %2641
        %v2644 = vsel %vm2627, %v2639, 0
        %vm2646 = vcmask 1044480
        %v2648 = vsel %vm2646, %v2642, 0
        %2650 = vmatprep.subr.bf16.mxu0 0
        %2651 = vmatpush1.bf16.msra.mxu0 0
        %2652 = vmatprep.subr.bf16.mxu0 0
        %2653 = vmatpush1.bf16.msra.mxu0 0
        %2654 = vmatprep.subr.bf16.mxu0 0
        %2655 = vmatpush1.bf16.msra.mxu0 0
        %2656 = vmatprep.subr.bf16.mxu0 0
        %2657 = vmatpush1.bf16.msra.mxu0 0
        %2658 = vmatprep.subr.bf16.mxu0 0
        %2659 = vmatpush1.bf16.msra.mxu0 0
        %2660 = vmatprep.subr.bf16.mxu0 0
        %2661 = vmatpush1.bf16.msra.mxu0 0
        %2662 = vmatprep.subr.bf16.mxu0 0
        %2663 = vmatpush1.bf16.msra.mxu0 0
        %2664 = vmatprep.subr.bf16.mxu0 0
        %2665 = vmatpush1.bf16.msra.mxu0 %v2648
        %2666 = vmatprep.subr.bf16.mxu0 0
        %2667 = vmatpush2.bf16.msra.mxu0 0
        %2668 = vmatprep.subr.bf16.mxu0 0
        %2669 = vmatpush2.bf16.msra.mxu0 0
        %2670 = vmatprep.subr.bf16.mxu0 0
        %2671 = vmatpush2.bf16.msra.mxu0 0
        %2672 = vmatprep.subr.bf16.mxu0 0
        %2673 = vmatpush2.bf16.msra.mxu0 0
        %2674 = vmatprep.subr.bf16.mxu0 0
        %2675 = vmatpush2.bf16.msra.mxu0 0
        %2676 = vmatprep.subr.bf16.mxu0 0
        %2677 = vmatpush2.bf16.msra.mxu0 0
        %2678 = vmatprep.subr.bf16.mxu0 0
        %2679 = vmatpush2.bf16.msra.mxu0 0
        %2680 = vmatprep.subr.bf16.mxu0 0
        %2681 = vmatpush2.bf16.msra.mxu0 0
        %2682 = vmatprep.mubr.bf16.mxu0 0
        %2683 = vmatmul.mubr.bf16.gmra.mxu0 %v2644
        %v2684 = vpop.f32.mrf.mxu0
        %v2685 = vadd.f32 0.0, %v2684
        %v2686 = vpop.f32.mrf.mxu0
        %v2687 = vpop.f32.mrf.mxu0
        %v2688 = vpop.f32.mrf.mxu0
        %2689 = vdwg.mxu0
        %2690 = vst.msk [vmem:[#allocation3] sm:$0xff] %vm1345, %v2685
        %2692 = vrot.lane.b32.xlu0 %v2574, 120
        %v2693 = vpop.permute.xlu0 %2692
        %2694 = vrot.lane.b32.xlu0 %v2519, 120
        %v2695 = vpop.permute.xlu0 %2694
        %v2697 = vsel %vm1345, %v2693, 0
        %v2700 = vsel %vm1345, %v2695, 0
        %2702 = vmatprep.subr.bf16.mxu0 0
        %2703 = vmatpush1.bf16.xpose.msra.mxu0 0
        %2704 = vmatprep.subr.bf16.mxu0 0
        %2705 = vmatpush1.bf16.xpose.msra.mxu0 0
        %2706 = vmatprep.subr.bf16.mxu0 0
        %2707 = vmatpush1.bf16.xpose.msra.mxu0 0
        %2708 = vmatprep.subr.bf16.mxu0 0
        %2709 = vmatpush1.bf16.xpose.msra.mxu0 0
        %2710 = vmatprep.subr.bf16.mxu0 0
        %2711 = vmatpush1.bf16.xpose.msra.mxu0 0
        %2712 = vmatprep.subr.bf16.mxu0 0
        %2713 = vmatpush1.bf16.xpose.msra.mxu0 0
        %2714 = vmatprep.subr.bf16.mxu0 0
        %2715 = vmatpush1.bf16.xpose.msra.mxu0 0
        %2716 = vmatprep.subr.bf16.mxu0 0
        %2717 = vmatpush1.bf16.xpose.msra.mxu0 %v2700
        %2718 = vmatprep.subr.bf16.mxu0 0
        %2719 = vmatpush2.bf16.xpose.msra.mxu0 0
        %2720 = vmatprep.subr.bf16.mxu0 0
        %2721 = vmatpush2.bf16.xpose.msra.mxu0 0
        %2722 = vmatprep.subr.bf16.mxu0 0
        %2723 = vmatpush2.bf16.xpose.msra.mxu0 0
        %2724 = vmatprep.subr.bf16.mxu0 0
        %2725 = vmatpush2.bf16.xpose.msra.mxu0 0
        %2726 = vmatprep.subr.bf16.mxu0 0
        %2727 = vmatpush2.bf16.xpose.msra.mxu0 0
        %2728 = vmatprep.subr.bf16.mxu0 0
        %2729 = vmatpush2.bf16.xpose.msra.mxu0 0
        %2730 = vmatprep.subr.bf16.mxu0 0
        %2731 = vmatpush2.bf16.xpose.msra.mxu0 0
        %2732 = vmatprep.subr.bf16.mxu0 0
        %2733 = vmatpush2.bf16.xpose.msra.mxu0 0
        %2734 = vmatprep.mubr.bf16.mxu0 0
        %2735 = vmatmul.mubr.bf16.gmra.mxu0 %v2697
        %v2736 = vpop.f32.mrf.mxu0
        %v2737 = vadd.f32 %v2579, %v2736
        %v2738 = vpop.f32.mrf.mxu0
        %v2739 = vpop.f32.mrf.mxu0
        %v2740 = vpop.f32.mrf.mxu0
        %2741 = vdwg.mxu0
        %v2742 = vsel %vm2627, %v2737, -inf
        %2743 = vmax.xlane.f32.xlu0 %v2742
        %v2744 = vpop.xlane.xlu0 %2743
        %v2745 = vsub.f32 %v2737, %v2744
        %v2746 = vmul.f32 %v2745, 1.442695
        %v2747 = vpow.pop %v2746
        %v2748 = vsel %vm2627, %v2747, 0.0
        %2749 = vadd.xlane.f32.xlu0 %v2748
        %v2750 = vpop.xlane.xlu0 %2749
        %v2751 = vrcp.pop %v2750
        %v2752 = vmul.f32 %v2747, %v2751
        %v2753 = vpack.c.bf16 %v2752, %v2752
        %2754 = vrot.lane.b32.xlu0 %v2519, 88
        %v2755 = vpop.permute.xlu0 %2754
        %v2757 = vsel %vm2627, %v2753, 0
        %v2760 = vsel %vm2646, %v2755, 0
        %2762 = vmatprep.subr.bf16.mxu0 0
        %2763 = vmatpush1.bf16.msra.mxu0 0
        %2764 = vmatprep.subr.bf16.mxu0 0
        %2765 = vmatpush1.bf16.msra.mxu0 0
        %2766 = vmatprep.subr.bf16.mxu0 0
        %2767 = vmatpush1.bf16.msra.mxu0 0
        %2768 = vmatprep.subr.bf16.mxu0 0
        %2769 = vmatpush1.bf16.msra.mxu0 0
        %2770 = vmatprep.subr.bf16.mxu0 0
        %2771 = vmatpush1.bf16.msra.mxu0 0
        %2772 = vmatprep.subr.bf16.mxu0 0
        %2773 = vmatpush1.bf16.msra.mxu0 0
        %2774 = vmatprep.subr.bf16.mxu0 0
        %2775 = vmatpush1.bf16.msra.mxu0 0
        %2776 = vmatprep.subr.bf16.mxu0 0
        %2777 = vmatpush1.bf16.msra.mxu0 %v2760
        %2778 = vmatprep.subr.bf16.mxu0 0
        %2779 = vmatpush2.bf16.msra.mxu0 0
        %2780 = vmatprep.subr.bf16.mxu0 0
        %2781 = vmatpush2.bf16.msra.mxu0 0
        %2782 = vmatprep.subr.bf16.mxu0 0
        %2783 = vmatpush2.bf16.msra.mxu0 0
        %2784 = vmatprep.subr.bf16.mxu0 0
        %2785 = vmatpush2.bf16.msra.mxu0 0
        %2786 = vmatprep.subr.bf16.mxu0 0
        %2787 = vmatpush2.bf16.msra.mxu0 0
        %2788 = vmatprep.subr.bf16.mxu0 0
        %2789 = vmatpush2.bf16.msra.mxu0 0
        %2790 = vmatprep.subr.bf16.mxu0 0
        %2791 = vmatpush2.bf16.msra.mxu0 0
        %2792 = vmatprep.subr.bf16.mxu0 0
        %2793 = vmatpush2.bf16.msra.mxu0 0
        %2794 = vmatprep.mubr.bf16.mxu0 0
        %2795 = vmatmul.mubr.bf16.gmra.mxu0 %v2757
        %v2796 = vpop.f32.mrf.mxu0
        %v2797 = vadd.f32 0.0, %v2796
        %v2798 = vpop.f32.mrf.mxu0
        %v2799 = vpop.f32.mrf.mxu0
        %v2800 = vpop.f32.mrf.mxu0
        %2801 = vdwg.mxu0
        %2803 = vrot.lane.b32.xlu0 %v2797, 8
        %v2804 = vpop.permute.xlu0 %2803
        %2806 = vst.msk [vmem:[#allocation3] sm:$0xff] %vm1569, %v2804
        %2807 = vrot.lane.b32.xlu0 %v2574, 112
        %v2808 = vpop.permute.xlu0 %2807
        %2809 = vrot.lane.b32.xlu0 %v2519, 112
        %v2810 = vpop.permute.xlu0 %2809
        %v2812 = vsel %vm1345, %v2808, 0
        %v2815 = vsel %vm1345, %v2810, 0
        %2817 = vmatprep.subr.bf16.mxu0 0
        %2818 = vmatpush1.bf16.xpose.msra.mxu0 0
        %2819 = vmatprep.subr.bf16.mxu0 0
        %2820 = vmatpush1.bf16.xpose.msra.mxu0 0
        %2821 = vmatprep.subr.bf16.mxu0 0
        %2822 = vmatpush1.bf16.xpose.msra.mxu0 0
        %2823 = vmatprep.subr.bf16.mxu0 0
        %2824 = vmatpush1.bf16.xpose.msra.mxu0 0
        %2825 = vmatprep.subr.bf16.mxu0 0
        %2826 = vmatpush1.bf16.xpose.msra.mxu0 0
        %2827 = vmatprep.subr.bf16.mxu0 0
        %2828 = vmatpush1.bf16.xpose.msra.mxu0 0
        %2829 = vmatprep.subr.bf16.mxu0 0
        %2830 = vmatpush1.bf16.xpose.msra.mxu0 0
        %2831 = vmatprep.subr.bf16.mxu0 0
        %2832 = vmatpush1.bf16.xpose.msra.mxu0 %v2815
        %2833 = vmatprep.subr.bf16.mxu0 0
        %2834 = vmatpush2.bf16.xpose.msra.mxu0 0
        %2835 = vmatprep.subr.bf16.mxu0 0
        %2836 = vmatpush2.bf16.xpose.msra.mxu0 0
        %2837 = vmatprep.subr.bf16.mxu0 0
        %2838 = vmatpush2.bf16.xpose.msra.mxu0 0
        %2839 = vmatprep.subr.bf16.mxu0 0
        %2840 = vmatpush2.bf16.xpose.msra.mxu0 0
        %2841 = vmatprep.subr.bf16.mxu0 0
        %2842 = vmatpush2.bf16.xpose.msra.mxu0 0
        %2843 = vmatprep.subr.bf16.mxu0 0
        %2844 = vmatpush2.bf16.xpose.msra.mxu0 0
        %2845 = vmatprep.subr.bf16.mxu0 0
        %2846 = vmatpush2.bf16.xpose.msra.mxu0 0
        %2847 = vmatprep.subr.bf16.mxu0 0
        %2848 = vmatpush2.bf16.xpose.msra.mxu0 0
        %2849 = vmatprep.mubr.bf16.mxu0 0
        %2850 = vmatmul.mubr.bf16.gmra.mxu0 %v2812
        %v2851 = vpop.f32.mrf.mxu0
        %v2852 = vadd.f32 %v2579, %v2851
        %v2853 = vpop.f32.mrf.mxu0
        %v2854 = vpop.f32.mrf.mxu0
        %v2855 = vpop.f32.mrf.mxu0
        %2856 = vdwg.mxu0
        %v2857 = vsel %vm2627, %v2852, -inf
        %2858 = vmax.xlane.f32.xlu0 %v2857
        %v2859 = vpop.xlane.xlu0 %2858
        %v2860 = vsub.f32 %v2852, %v2859
        %v2861 = vmul.f32 %v2860, 1.442695
        %v2862 = vpow.pop %v2861
        %v2863 = vsel %vm2627, %v2862, 0.0
        %2864 = vadd.xlane.f32.xlu0 %v2863
        %v2865 = vpop.xlane.xlu0 %2864
        %v2866 = vrcp.pop %v2865
        %v2867 = vmul.f32 %v2862, %v2866
        %v2868 = vpack.c.bf16 %v2867, %v2867
        %2869 = vrot.lane.b32.xlu0 %v2519, 80
        %v2870 = vpop.permute.xlu0 %2869
        %v2872 = vsel %vm2627, %v2868, 0
        %v2875 = vsel %vm2646, %v2870, 0
        %2877 = vmatprep.subr.bf16.mxu0 0
        %2878 = vmatpush1.bf16.msra.mxu0 0
        %2879 = vmatprep.subr.bf16.mxu0 0
        %2880 = vmatpush1.bf16.msra.mxu0 0
        %2881 = vmatprep.subr.bf16.mxu0 0
        %2882 = vmatpush1.bf16.msra.mxu0 0
        %2883 = vmatprep.subr.bf16.mxu0 0
        %2884 = vmatpush1.bf16.msra.mxu0 0
        %2885 = vmatprep.subr.bf16.mxu0 0
        %2886 = vmatpush1.bf16.msra.mxu0 0
        %2887 = vmatprep.subr.bf16.mxu0 0
        %2888 = vmatpush1.bf16.msra.mxu0 0
        %2889 = vmatprep.subr.bf16.mxu0 0
        %2890 = vmatpush1.bf16.msra.mxu0 0
        %2891 = vmatprep.subr.bf16.mxu0 0
        %2892 = vmatpush1.bf16.msra.mxu0 %v2875
        %2893 = vmatprep.subr.bf16.mxu0 0
        %2894 = vmatpush2.bf16.msra.mxu0 0
        %2895 = vmatprep.subr.bf16.mxu0 0
        %2896 = vmatpush2.bf16.msra.mxu0 0
        %2897 = vmatprep.subr.bf16.mxu0 0
        %2898 = vmatpush2.bf16.msra.mxu0 0
        %2899 = vmatprep.subr.bf16.mxu0 0
        %2900 = vmatpush2.bf16.msra.mxu0 0
        %2901 = vmatprep.subr.bf16.mxu0 0
        %2902 = vmatpush2.bf16.msra.mxu0 0
        %2903 = vmatprep.subr.bf16.mxu0 0
        %2904 = vmatpush2.bf16.msra.mxu0 0
        %2905 = vmatprep.subr.bf16.mxu0 0
        %2906 = vmatpush2.bf16.msra.mxu0 0
        %2907 = vmatprep.subr.bf16.mxu0 0
        %2908 = vmatpush2.bf16.msra.mxu0 0
        %2909 = vmatprep.mubr.bf16.mxu0 0
        %2910 = vmatmul.mubr.bf16.gmra.mxu0 %v2872
        %v2911 = vpop.f32.mrf.mxu0
        %v2912 = vadd.f32 0.0, %v2911
        %v2913 = vpop.f32.mrf.mxu0
        %v2914 = vpop.f32.mrf.mxu0
        %v2915 = vpop.f32.mrf.mxu0
        %2916 = vdwg.mxu0
        %2918 = vrot.lane.b32.xlu0 %v2912, 16
        %v2919 = vpop.permute.xlu0 %2918
        %2921 = vst.msk [vmem:[#allocation3] sm:$0xff] %vm1685, %v2919
        %2922 = vrot.lane.b32.xlu0 %v2574, 104
        %v2923 = vpop.permute.xlu0 %2922
        %2924 = vrot.lane.b32.xlu0 %v2519, 104
        %v2925 = vpop.permute.xlu0 %2924
        %v2927 = vsel %vm1345, %v2923, 0
        %v2930 = vsel %vm1345, %v2925, 0
        %2932 = vmatprep.subr.bf16.mxu0 0
        %2933 = vmatpush1.bf16.xpose.msra.mxu0 0
        %2934 = vmatprep.subr.bf16.mxu0 0
        %2935 = vmatpush1.bf16.xpose.msra.mxu0 0
        %2936 = vmatprep.subr.bf16.mxu0 0
        %2937 = vmatpush1.bf16.xpose.msra.mxu0 0
        %2938 = vmatprep.subr.bf16.mxu0 0
        %2939 = vmatpush1.bf16.xpose.msra.mxu0 0
        %2940 = vmatprep.subr.bf16.mxu0 0
        %2941 = vmatpush1.bf16.xpose.msra.mxu0 0
        %2942 = vmatprep.subr.bf16.mxu0 0
        %2943 = vmatpush1.bf16.xpose.msra.mxu0 0
        %2944 = vmatprep.subr.bf16.mxu0 0
        %2945 = vmatpush1.bf16.xpose.msra.mxu0 0
        %2946 = vmatprep.subr.bf16.mxu0 0
        %2947 = vmatpush1.bf16.xpose.msra.mxu0 %v2930
        %2948 = vmatprep.subr.bf16.mxu0 0
        %2949 = vmatpush2.bf16.xpose.msra.mxu0 0
        %2950 = vmatprep.subr.bf16.mxu0 0
        %2951 = vmatpush2.bf16.xpose.msra.mxu0 0
        %2952 = vmatprep.subr.bf16.mxu0 0
        %2953 = vmatpush2.bf16.xpose.msra.mxu0 0
        %2954 = vmatprep.subr.bf16.mxu0 0
        %2955 = vmatpush2.bf16.xpose.msra.mxu0 0
        %2956 = vmatprep.subr.bf16.mxu0 0
        %2957 = vmatpush2.bf16.xpose.msra.mxu0 0
        %2958 = vmatprep.subr.bf16.mxu0 0
        %2959 = vmatpush2.bf16.xpose.msra.mxu0 0
        %2960 = vmatprep.subr.bf16.mxu0 0
        %2961 = vmatpush2.bf16.xpose.msra.mxu0 0
        %2962 = vmatprep.subr.bf16.mxu0 0
        %2963 = vmatpush2.bf16.xpose.msra.mxu0 0
        %2964 = vmatprep.mubr.bf16.mxu0 0
        %2965 = vmatmul.mubr.bf16.gmra.mxu0 %v2927
        %v2966 = vpop.f32.mrf.mxu0
        %v2967 = vadd.f32 %v2579, %v2966
        %v2968 = vpop.f32.mrf.mxu0
        %v2969 = vpop.f32.mrf.mxu0
        %v2970 = vpop.f32.mrf.mxu0
        %2971 = vdwg.mxu0
        %v2972 = vsel %vm2627, %v2967, -inf
        %2973 = vmax.xlane.f32.xlu0 %v2972
        %v2974 = vpop.xlane.xlu0 %2973
        %v2975 = vsub.f32 %v2967, %v2974
        %v2976 = vmul.f32 %v2975, 1.442695
        %v2977 = vpow.pop %v2976
        %v2978 = vsel %vm2627, %v2977, 0.0
        %2979 = vadd.xlane.f32.xlu0 %v2978
        %v2980 = vpop.xlane.xlu0 %2979
        %v2981 = vrcp.pop %v2980
        %v2982 = vmul.f32 %v2977, %v2981
        %v2983 = vpack.c.bf16 %v2982, %v2982
        %2984 = vrot.lane.b32.xlu0 %v2519, 72
        %v2985 = vpop.permute.xlu0 %2984
        %v2987 = vsel %vm2627, %v2983, 0
        %v2990 = vsel %vm2646, %v2985, 0
        %2992 = vmatprep.subr.bf16.mxu0 0
        %2993 = vmatpush1.bf16.msra.mxu0 0
        %2994 = vmatprep.subr.bf16.mxu0 0
        %2995 = vmatpush1.bf16.msra.mxu0 0
        %2996 = vmatprep.subr.bf16.mxu0 0
        %2997 = vmatpush1.bf16.msra.mxu0 0
        %2998 = vmatprep.subr.bf16.mxu0 0
        %2999 = vmatpush1.bf16.msra.mxu0 0
        %3000 = vmatprep.subr.bf16.mxu0 0
        %3001 = vmatpush1.bf16.msra.mxu0 0
        %3002 = vmatprep.subr.bf16.mxu0 0
        %3003 = vmatpush1.bf16.msra.mxu0 0
        %3004 = vmatprep.subr.bf16.mxu0 0
        %3005 = vmatpush1.bf16.msra.mxu0 0
        %3006 = vmatprep.subr.bf16.mxu0 0
        %3007 = vmatpush1.bf16.msra.mxu0 %v2990
        %3008 = vmatprep.subr.bf16.mxu0 0
        %3009 = vmatpush2.bf16.msra.mxu0 0
        %3010 = vmatprep.subr.bf16.mxu0 0
        %3011 = vmatpush2.bf16.msra.mxu0 0
        %3012 = vmatprep.subr.bf16.mxu0 0
        %3013 = vmatpush2.bf16.msra.mxu0 0
        %3014 = vmatprep.subr.bf16.mxu0 0
        %3015 = vmatpush2.bf16.msra.mxu0 0
        %3016 = vmatprep.subr.bf16.mxu0 0
        %3017 = vmatpush2.bf16.msra.mxu0 0
        %3018 = vmatprep.subr.bf16.mxu0 0
        %3019 = vmatpush2.bf16.msra.mxu0 0
        %3020 = vmatprep.subr.bf16.mxu0 0
        %3021 = vmatpush2.bf16.msra.mxu0 0
        %3022 = vmatprep.subr.bf16.mxu0 0
        %3023 = vmatpush2.bf16.msra.mxu0 0
        %3024 = vmatprep.mubr.bf16.mxu0 0
        %3025 = vmatmul.mubr.bf16.gmra.mxu0 %v2987
        %v3026 = vpop.f32.mrf.mxu0
        %v3027 = vadd.f32 0.0, %v3026
        %v3028 = vpop.f32.mrf.mxu0
        %v3029 = vpop.f32.mrf.mxu0
        %v3030 = vpop.f32.mrf.mxu0
        %3031 = vdwg.mxu0
        %3033 = vrot.lane.b32.xlu0 %v3027, 24
        %v3034 = vpop.permute.xlu0 %3033
        %3036 = vst.msk [vmem:[#allocation3] sm:$0xff] %vm1801, %v3034
        %v3037 = vpack.c.bf16 %v2446, %v2446
        %v3039 = vlaneseq
        %v3040 = vshrl.u32 %v3039, 7
        %v3041 = vsub.s32 0, %v3040
        %v3042 = vrot.slane %v1208, %v3041
        %v3045 = vsel %vm1345, %v3037, 0
        %v3048 = vsel %vm1345, %v2568, 0
        %3050 = vmatprep.subr.bf16.mxu0 0
        %3051 = vmatpush1.bf16.xpose.msra.mxu0 0
        %3052 = vmatprep.subr.bf16.mxu0 0
        %3053 = vmatpush1.bf16.xpose.msra.mxu0 0
        %3054 = vmatprep.subr.bf16.mxu0 0
        %3055 = vmatpush1.bf16.xpose.msra.mxu0 0
        %3056 = vmatprep.subr.bf16.mxu0 0
        %3057 = vmatpush1.bf16.xpose.msra.mxu0 0
        %3058 = vmatprep.subr.bf16.mxu0 0
        %3059 = vmatpush1.bf16.xpose.msra.mxu0 0
        %3060 = vmatprep.subr.bf16.mxu0 0
        %3061 = vmatpush1.bf16.xpose.msra.mxu0 0
        %3062 = vmatprep.subr.bf16.mxu0 0
        %3063 = vmatpush1.bf16.xpose.msra.mxu0 0
        %3064 = vmatprep.subr.bf16.mxu0 0
        %3065 = vmatpush1.bf16.xpose.msra.mxu0 %v3048
        %3066 = vmatprep.subr.bf16.mxu0 0
        %3067 = vmatpush2.bf16.xpose.msra.mxu0 0
        %3068 = vmatprep.subr.bf16.mxu0 0
        %3069 = vmatpush2.bf16.xpose.msra.mxu0 0
        %3070 = vmatprep.subr.bf16.mxu0 0
        %3071 = vmatpush2.bf16.xpose.msra.mxu0 0
        %3072 = vmatprep.subr.bf16.mxu0 0
        %3073 = vmatpush2.bf16.xpose.msra.mxu0 0
        %3074 = vmatprep.subr.bf16.mxu0 0
        %3075 = vmatpush2.bf16.xpose.msra.mxu0 0
        %3076 = vmatprep.subr.bf16.mxu0 0
        %3077 = vmatpush2.bf16.xpose.msra.mxu0 0
        %3078 = vmatprep.subr.bf16.mxu0 0
        %3079 = vmatpush2.bf16.xpose.msra.mxu0 0
        %3080 = vmatprep.subr.bf16.mxu0 0
        %3081 = vmatpush2.bf16.xpose.msra.mxu0 0
        %3082 = vmatprep.mubr.bf16.mxu0 0
        %3083 = vmatmul.mubr.bf16.gmra.mxu0 %v3045
        %v3084 = vpop.f32.mrf.mxu0
        %v3085 = vadd.f32 %v3042, %v3084
        %v3086 = vpop.f32.mrf.mxu0
        %v3087 = vpop.f32.mrf.mxu0
        %v3088 = vpop.f32.mrf.mxu0
        %3089 = vdwg.mxu0
        %v3090 = vsel %vm2627, %v3085, -inf
        %3091 = vmax.xlane.f32.xlu0 %v3090
        %v3092 = vpop.xlane.xlu0 %3091
        %v3093 = vsub.f32 %v3085, %v3092
        %v3094 = vmul.f32 %v3093, 1.442695
        %v3095 = vpow.pop %v3094
        %v3096 = vsel %vm2627, %v3095, 0.0
        %3097 = vadd.xlane.f32.xlu0 %v3096
        %v3098 = vpop.xlane.xlu0 %3097
        %v3099 = vrcp.pop %v3098
        %v3100 = vmul.f32 %v3095, %v3099
        %v3101 = vpack.c.bf16 %v3100, %v3100
        %3103 = vrot.lane.b32.xlu0 %v2568, 96
        %v3104 = vpop.permute.xlu0 %3103
        %v3106 = vsel %vm2627, %v3101, 0
        %v3109 = vsel %vm2646, %v3104, 0
        %3111 = vmatprep.subr.bf16.mxu0 0
        %3112 = vmatpush1.bf16.msra.mxu0 0
        %3113 = vmatprep.subr.bf16.mxu0 0
        %3114 = vmatpush1.bf16.msra.mxu0 0
        %3115 = vmatprep.subr.bf16.mxu0 0
        %3116 = vmatpush1.bf16.msra.mxu0 0
        %3117 = vmatprep.subr.bf16.mxu0 0
        %3118 = vmatpush1.bf16.msra.mxu0 0
        %3119 = vmatprep.subr.bf16.mxu0 0
        %3120 = vmatpush1.bf16.msra.mxu0 0
        %3121 = vmatprep.subr.bf16.mxu0 0
        %3122 = vmatpush1.bf16.msra.mxu0 0
        %3123 = vmatprep.subr.bf16.mxu0 0
        %3124 = vmatpush1.bf16.msra.mxu0 0
        %3125 = vmatprep.subr.bf16.mxu0 0
        %3126 = vmatpush1.bf16.msra.mxu0 %v3109
        %3127 = vmatprep.subr.bf16.mxu0 0
        %3128 = vmatpush2.bf16.msra.mxu0 0
        %3129 = vmatprep.subr.bf16.mxu0 0
        %3130 = vmatpush2.bf16.msra.mxu0 0
        %3131 = vmatprep.subr.bf16.mxu0 0
        %3132 = vmatpush2.bf16.msra.mxu0 0
        %3133 = vmatprep.subr.bf16.mxu0 0
        %3134 = vmatpush2.bf16.msra.mxu0 0
        %3135 = vmatprep.subr.bf16.mxu0 0
        %3136 = vmatpush2.bf16.msra.mxu0 0
        %3137 = vmatprep.subr.bf16.mxu0 0
        %3138 = vmatpush2.bf16.msra.mxu0 0
        %3139 = vmatprep.subr.bf16.mxu0 0
        %3140 = vmatpush2.bf16.msra.mxu0 0
        %3141 = vmatprep.subr.bf16.mxu0 0
        %3142 = vmatpush2.bf16.msra.mxu0 0
        %3143 = vmatprep.mubr.bf16.mxu0 0
        %3144 = vmatmul.mubr.bf16.gmra.mxu0 %v3106
        %v3145 = vpop.f32.mrf.mxu0
        %v3146 = vadd.f32 0.0, %v3145
        %v3147 = vpop.f32.mrf.mxu0
        %v3148 = vpop.f32.mrf.mxu0
        %v3149 = vpop.f32.mrf.mxu0
        %3150 = vdwg.mxu0
        %3151 = vst.msk [vmem:[#allocation3 + $0x8] sm:$0xff] %vm1345, %v3146
        %3153 = vrot.lane.b32.xlu0 %v3037, 120
        %v3154 = vpop.permute.xlu0 %3153
        %3155 = vrot.lane.b32.xlu0 %v2568, 120
        %v3156 = vpop.permute.xlu0 %3155
        %v3158 = vsel %vm1345, %v3154, 0
        %v3161 = vsel %vm1345, %v3156, 0
        %3163 = vmatprep.subr.bf16.mxu0 0
        %3164 = vmatpush1.bf16.xpose.msra.mxu0 0
        %3165 = vmatprep.subr.bf16.mxu0 0
        %3166 = vmatpush1.bf16.xpose.msra.mxu0 0
        %3167 = vmatprep.subr.bf16.mxu0 0
        %3168 = vmatpush1.bf16.xpose.msra.mxu0 0
        %3169 = vmatprep.subr.bf16.mxu0 0
        %3170 = vmatpush1.bf16.xpose.msra.mxu0 0
        %3171 = vmatprep.subr.bf16.mxu0 0
        %3172 = vmatpush1.bf16.xpose.msra.mxu0 0
        %3173 = vmatprep.subr.bf16.mxu0 0
        %3174 = vmatpush1.bf16.xpose.msra.mxu0 0
        %3175 = vmatprep.subr.bf16.mxu0 0
        %3176 = vmatpush1.bf16.xpose.msra.mxu0 0
        %3177 = vmatprep.subr.bf16.mxu0 0
        %3178 = vmatpush1.bf16.xpose.msra.mxu0 %v3161
        %3179 = vmatprep.subr.bf16.mxu0 0
        %3180 = vmatpush2.bf16.xpose.msra.mxu0 0
        %3181 = vmatprep.subr.bf16.mxu0 0
        %3182 = vmatpush2.bf16.xpose.msra.mxu0 0
        %3183 = vmatprep.subr.bf16.mxu0 0
        %3184 = vmatpush2.bf16.xpose.msra.mxu0 0
        %3185 = vmatprep.subr.bf16.mxu0 0
        %3186 = vmatpush2.bf16.xpose.msra.mxu0 0
        %3187 = vmatprep.subr.bf16.mxu0 0
        %3188 = vmatpush2.bf16.xpose.msra.mxu0 0
        %3189 = vmatprep.subr.bf16.mxu0 0
        %3190 = vmatpush2.bf16.xpose.msra.mxu0 0
        %3191 = vmatprep.subr.bf16.mxu0 0
        %3192 = vmatpush2.bf16.xpose.msra.mxu0 0
        %3193 = vmatprep.subr.bf16.mxu0 0
        %3194 = vmatpush2.bf16.xpose.msra.mxu0 0
        %3195 = vmatprep.mubr.bf16.mxu0 0
        %3196 = vmatmul.mubr.bf16.gmra.mxu0 %v3158
        %v3197 = vpop.f32.mrf.mxu0
        %v3198 = vadd.f32 %v3042, %v3197
        %v3199 = vpop.f32.mrf.mxu0
        %v3200 = vpop.f32.mrf.mxu0
        %v3201 = vpop.f32.mrf.mxu0
        %3202 = vdwg.mxu0
        %v3203 = vsel %vm2627, %v3198, -inf
        %3204 = vmax.xlane.f32.xlu0 %v3203
        %v3205 = vpop.xlane.xlu0 %3204
        %v3206 = vsub.f32 %v3198, %v3205
        %v3207 = vmul.f32 %v3206, 1.442695
        %v3208 = vpow.pop %v3207
        %v3209 = vsel %vm2627, %v3208, 0.0
        %3210 = vadd.xlane.f32.xlu0 %v3209
        %v3211 = vpop.xlane.xlu0 %3210
        %v3212 = vrcp.pop %v3211
        %v3213 = vmul.f32 %v3208, %v3212
        %v3214 = vpack.c.bf16 %v3213, %v3213
        %3215 = vrot.lane.b32.xlu0 %v2568, 88
        %v3216 = vpop.permute.xlu0 %3215
        %v3218 = vsel %vm2627, %v3214, 0
        %v3221 = vsel %vm2646, %v3216, 0
        %3223 = vmatprep.subr.bf16.mxu0 0
        %3224 = vmatpush1.bf16.msra.mxu0 0
        %3225 = vmatprep.subr.bf16.mxu0 0
        %3226 = vmatpush1.bf16.msra.mxu0 0
        %3227 = vmatprep.subr.bf16.mxu0 0
        %3228 = vmatpush1.bf16.msra.mxu0 0
        %3229 = vmatprep.subr.bf16.mxu0 0
        %3230 = vmatpush1.bf16.msra.mxu0 0
        %3231 = vmatprep.subr.bf16.mxu0 0
        %3232 = vmatpush1.bf16.msra.mxu0 0
        %3233 = vmatprep.subr.bf16.mxu0 0
        %3234 = vmatpush1.bf16.msra.mxu0 0
        %3235 = vmatprep.subr.bf16.mxu0 0
        %3236 = vmatpush1.bf16.msra.mxu0 0
        %3237 = vmatprep.subr.bf16.mxu0 0
        %3238 = vmatpush1.bf16.msra.mxu0 %v3221
        %3239 = vmatprep.subr.bf16.mxu0 0
        %3240 = vmatpush2.bf16.msra.mxu0 0
        %3241 = vmatprep.subr.bf16.mxu0 0
        %3242 = vmatpush2.bf16.msra.mxu0 0
        %3243 = vmatprep.subr.bf16.mxu0 0
        %3244 = vmatpush2.bf16.msra.mxu0 0
        %3245 = vmatprep.subr.bf16.mxu0 0
        %3246 = vmatpush2.bf16.msra.mxu0 0
        %3247 = vmatprep.subr.bf16.mxu0 0
        %3248 = vmatpush2.bf16.msra.mxu0 0
        %3249 = vmatprep.subr.bf16.mxu0 0
        %3250 = vmatpush2.bf16.msra.mxu0 0
        %3251 = vmatprep.subr.bf16.mxu0 0
        %3252 = vmatpush2.bf16.msra.mxu0 0
        %3253 = vmatprep.subr.bf16.mxu0 0
        %3254 = vmatpush2.bf16.msra.mxu0 0
        %3255 = vmatprep.mubr.bf16.mxu0 0
        %3256 = vmatmul.mubr.bf16.gmra.mxu0 %v3218
        %v3257 = vpop.f32.mrf.mxu0
        %v3258 = vadd.f32 0.0, %v3257
        %v3259 = vpop.f32.mrf.mxu0
        %v3260 = vpop.f32.mrf.mxu0
        %v3261 = vpop.f32.mrf.mxu0
        %3262 = vdwg.mxu0
        %3264 = vrot.lane.b32.xlu0 %v3258, 8
        %v3265 = vpop.permute.xlu0 %3264
        %3267 = vst.msk [vmem:[#allocation3 + $0x8] sm:$0xff] %vm1569, %v3265
        %3268 = vrot.lane.b32.xlu0 %v3037, 112
        %v3269 = vpop.permute.xlu0 %3268
        %3270 = vrot.lane.b32.xlu0 %v2568, 112
        %v3271 = vpop.permute.xlu0 %3270
        %v3273 = vsel %vm1345, %v3269, 0
        %v3276 = vsel %vm1345, %v3271, 0
        %3278 = vmatprep.subr.bf16.mxu0 0
        %3279 = vmatpush1.bf16.xpose.msra.mxu0 0
        %3280 = vmatprep.subr.bf16.mxu0 0
        %3281 = vmatpush1.bf16.xpose.msra.mxu0 0
        %3282 = vmatprep.subr.bf16.mxu0 0
        %3283 = vmatpush1.bf16.xpose.msra.mxu0 0
        %3284 = vmatprep.subr.bf16.mxu0 0
        %3285 = vmatpush1.bf16.xpose.msra.mxu0 0
        %3286 = vmatprep.subr.bf16.mxu0 0
        %3287 = vmatpush1.bf16.xpose.msra.mxu0 0
        %3288 = vmatprep.subr.bf16.mxu0 0
        %3289 = vmatpush1.bf16.xpose.msra.mxu0 0
        %3290 = vmatprep.subr.bf16.mxu0 0
        %3291 = vmatpush1.bf16.xpose.msra.mxu0 0
        %3292 = vmatprep.subr.bf16.mxu0 0
        %3293 = vmatpush1.bf16.xpose.msra.mxu0 %v3276
        %3294 = vmatprep.subr.bf16.mxu0 0
        %3295 = vmatpush2.bf16.xpose.msra.mxu0 0
        %3296 = vmatprep.subr.bf16.mxu0 0
        %3297 = vmatpush2.bf16.xpose.msra.mxu0 0
        %3298 = vmatprep.subr.bf16.mxu0 0
        %3299 = vmatpush2.bf16.xpose.msra.mxu0 0
        %3300 = vmatprep.subr.bf16.mxu0 0
        %3301 = vmatpush2.bf16.xpose.msra.mxu0 0
        %3302 = vmatprep.subr.bf16.mxu0 0
        %3303 = vmatpush2.bf16.xpose.msra.mxu0 0
        %3304 = vmatprep.subr.bf16.mxu0 0
        %3305 = vmatpush2.bf16.xpose.msra.mxu0 0
        %3306 = vmatprep.subr.bf16.mxu0 0
        %3307 = vmatpush2.bf16.xpose.msra.mxu0 0
        %3308 = vmatprep.subr.bf16.mxu0 0
        %3309 = vmatpush2.bf16.xpose.msra.mxu0 0
        %3310 = vmatprep.mubr.bf16.mxu0 0
        %3311 = vmatmul.mubr.bf16.gmra.mxu0 %v3273
        %v3312 = vpop.f32.mrf.mxu0
        %v3313 = vadd.f32 %v3042, %v3312
        %v3314 = vpop.f32.mrf.mxu0
        %v3315 = vpop.f32.mrf.mxu0
        %v3316 = vpop.f32.mrf.mxu0
        %3317 = vdwg.mxu0
        %v3318 = vsel %vm2627, %v3313, -inf
        %3319 = vmax.xlane.f32.xlu0 %v3318
        %v3320 = vpop.xlane.xlu0 %3319
        %v3321 = vsub.f32 %v3313, %v3320
        %v3322 = vmul.f32 %v3321, 1.442695
        %v3323 = vpow.pop %v3322
        %v3324 = vsel %vm2627, %v3323, 0.0
        %3325 = vadd.xlane.f32.xlu0 %v3324
        %v3326 = vpop.xlane.xlu0 %3325
        %v3327 = vrcp.pop %v3326
        %v3328 = vmul.f32 %v3323, %v3327
        %v3329 = vpack.c.bf16 %v3328, %v3328
        %3330 = vrot.lane.b32.xlu0 %v2568, 80
        %v3331 = vpop.permute.xlu0 %3330
        %v3333 = vsel %vm2627, %v3329, 0
        %v3336 = vsel %vm2646, %v3331, 0
        %3338 = vmatprep.subr.bf16.mxu0 0
        %3339 = vmatpush1.bf16.msra.mxu0 0
        %3340 = vmatprep.subr.bf16.mxu0 0
        %3341 = vmatpush1.bf16.msra.mxu0 0
        %3342 = vmatprep.subr.bf16.mxu0 0
        %3343 = vmatpush1.bf16.msra.mxu0 0
        %3344 = vmatprep.subr.bf16.mxu0 0
        %3345 = vmatpush1.bf16.msra.mxu0 0
        %3346 = vmatprep.subr.bf16.mxu0 0
        %3347 = vmatpush1.bf16.msra.mxu0 0
        %3348 = vmatprep.subr.bf16.mxu0 0
        %3349 = vmatpush1.bf16.msra.mxu0 0
        %3350 = vmatprep.subr.bf16.mxu0 0
        %3351 = vmatpush1.bf16.msra.mxu0 0
        %3352 = vmatprep.subr.bf16.mxu0 0
        %3353 = vmatpush1.bf16.msra.mxu0 %v3336
        %3354 = vmatprep.subr.bf16.mxu0 0
        %3355 = vmatpush2.bf16.msra.mxu0 0
        %3356 = vmatprep.subr.bf16.mxu0 0
        %3357 = vmatpush2.bf16.msra.mxu0 0
        %3358 = vmatprep.subr.bf16.mxu0 0
        %3359 = vmatpush2.bf16.msra.mxu0 0
        %3360 = vmatprep.subr.bf16.mxu0 0
        %3361 = vmatpush2.bf16.msra.mxu0 0
        %3362 = vmatprep.subr.bf16.mxu0 0
        %3363 = vmatpush2.bf16.msra.mxu0 0
        %3364 = vmatprep.subr.bf16.mxu0 0
        %3365 = vmatpush2.bf16.msra.mxu0 0
        %3366 = vmatprep.subr.bf16.mxu0 0
        %3367 = vmatpush2.bf16.msra.mxu0 0
        %3368 = vmatprep.subr.bf16.mxu0 0
        %3369 = vmatpush2.bf16.msra.mxu0 0
        %3370 = vmatprep.mubr.bf16.mxu0 0
        %3371 = vmatmul.mubr.bf16.gmra.mxu0 %v3333
        %v3372 = vpop.f32.mrf.mxu0
        %v3373 = vadd.f32 0.0, %v3372
        %v3374 = vpop.f32.mrf.mxu0
        %v3375 = vpop.f32.mrf.mxu0
        %v3376 = vpop.f32.mrf.mxu0
        %3377 = vdwg.mxu0
        %3379 = vrot.lane.b32.xlu0 %v3373, 16
        %v3380 = vpop.permute.xlu0 %3379
        %3382 = vst.msk [vmem:[#allocation3 + $0x8] sm:$0xff] %vm1685, %v3380
        %3383 = vrot.lane.b32.xlu0 %v3037, 104
        %v3384 = vpop.permute.xlu0 %3383
        %3385 = vrot.lane.b32.xlu0 %v2568, 104
        %v3386 = vpop.permute.xlu0 %3385
        %v3388 = vsel %vm1345, %v3384, 0
        %v3391 = vsel %vm1345, %v3386, 0
        %3393 = vmatprep.subr.bf16.mxu0 0
        %3394 = vmatpush1.bf16.xpose.msra.mxu0 0
        %3395 = vmatprep.subr.bf16.mxu0 0
        %3396 = vmatpush1.bf16.xpose.msra.mxu0 0
        %3397 = vmatprep.subr.bf16.mxu0 0
        %3398 = vmatpush1.bf16.xpose.msra.mxu0 0
        %3399 = vmatprep.subr.bf16.mxu0 0
        %3400 = vmatpush1.bf16.xpose.msra.mxu0 0
        %3401 = vmatprep.subr.bf16.mxu0 0
        %3402 = vmatpush1.bf16.xpose.msra.mxu0 0
        %3403 = vmatprep.subr.bf16.mxu0 0
        %3404 = vmatpush1.bf16.xpose.msra.mxu0 0
        %3405 = vmatprep.subr.bf16.mxu0 0
        %3406 = vmatpush1.bf16.xpose.msra.mxu0 0
        %3407 = vmatprep.subr.bf16.mxu0 0
        %3408 = vmatpush1.bf16.xpose.msra.mxu0 %v3391
        %3409 = vmatprep.subr.bf16.mxu0 0
        %3410 = vmatpush2.bf16.xpose.msra.mxu0 0
        %3411 = vmatprep.subr.bf16.mxu0 0
        %3412 = vmatpush2.bf16.xpose.msra.mxu0 0
        %3413 = vmatprep.subr.bf16.mxu0 0
        %3414 = vmatpush2.bf16.xpose.msra.mxu0 0
        %3415 = vmatprep.subr.bf16.mxu0 0
        %3416 = vmatpush2.bf16.xpose.msra.mxu0 0
        %3417 = vmatprep.subr.bf16.mxu0 0
        %3418 = vmatpush2.bf16.xpose.msra.mxu0 0
        %3419 = vmatprep.subr.bf16.mxu0 0
        %3420 = vmatpush2.bf16.xpose.msra.mxu0 0
        %3421 = vmatprep.subr.bf16.mxu0 0
        %3422 = vmatpush2.bf16.xpose.msra.mxu0 0
        %3423 = vmatprep.subr.bf16.mxu0 0
        %3424 = vmatpush2.bf16.xpose.msra.mxu0 0
        %3425 = vmatprep.mubr.bf16.mxu0 0
        %3426 = vmatmul.mubr.bf16.gmra.mxu0 %v3388
        %v3427 = vpop.f32.mrf.mxu0
        %v3428 = vadd.f32 %v3042, %v3427
        %v3429 = vpop.f32.mrf.mxu0
        %v3430 = vpop.f32.mrf.mxu0
        %v3431 = vpop.f32.mrf.mxu0
        %3432 = vdwg.mxu0
        %v3433 = vsel %vm2627, %v3428, -inf
        %3434 = vmax.xlane.f32.xlu0 %v3433
        %v3435 = vpop.xlane.xlu0 %3434
        %v3436 = vsub.f32 %v3428, %v3435
        %v3437 = vmul.f32 %v3436, 1.442695
        %v3438 = vpow.pop %v3437
        %v3439 = vsel %vm2627, %v3438, 0.0
        %3440 = vadd.xlane.f32.xlu0 %v3439
        %v3441 = vpop.xlane.xlu0 %3440
        %v3442 = vrcp.pop %v3441
        %v3443 = vmul.f32 %v3438, %v3442
        %v3444 = vpack.c.bf16 %v3443, %v3443
        %3445 = vrot.lane.b32.xlu0 %v2568, 72
        %v3446 = vpop.permute.xlu0 %3445
        %v3448 = vsel %vm2627, %v3444, 0
        %v3451 = vsel %vm2646, %v3446, 0
        %3453 = vmatprep.subr.bf16.mxu0 0
        %3454 = vmatpush1.bf16.msra.mxu0 0
        %3455 = vmatprep.subr.bf16.mxu0 0
        %3456 = vmatpush1.bf16.msra.mxu0 0
        %3457 = vmatprep.subr.bf16.mxu0 0
        %3458 = vmatpush1.bf16.msra.mxu0 0
        %3459 = vmatprep.subr.bf16.mxu0 0
        %3460 = vmatpush1.bf16.msra.mxu0 0
        %3461 = vmatprep.subr.bf16.mxu0 0
        %3462 = vmatpush1.bf16.msra.mxu0 0
        %3463 = vmatprep.subr.bf16.mxu0 0
        %3464 = vmatpush1.bf16.msra.mxu0 0
        %3465 = vmatprep.subr.bf16.mxu0 0
        %3466 = vmatpush1.bf16.msra.mxu0 0
        %3467 = vmatprep.subr.bf16.mxu0 0
        %3468 = vmatpush1.bf16.msra.mxu0 %v3451
        %3469 = vmatprep.subr.bf16.mxu0 0
        %3470 = vmatpush2.bf16.msra.mxu0 0
        %3471 = vmatprep.subr.bf16.mxu0 0
        %3472 = vmatpush2.bf16.msra.mxu0 0
        %3473 = vmatprep.subr.bf16.mxu0 0
        %3474 = vmatpush2.bf16.msra.mxu0 0
        %3475 = vmatprep.subr.bf16.mxu0 0
        %3476 = vmatpush2.bf16.msra.mxu0 0
        %3477 = vmatprep.subr.bf16.mxu0 0
        %3478 = vmatpush2.bf16.msra.mxu0 0
        %3479 = vmatprep.subr.bf16.mxu0 0
        %3480 = vmatpush2.bf16.msra.mxu0 0
        %3481 = vmatprep.subr.bf16.mxu0 0
        %3482 = vmatpush2.bf16.msra.mxu0 0
        %3483 = vmatprep.subr.bf16.mxu0 0
        %3484 = vmatpush2.bf16.msra.mxu0 0
        %3485 = vmatprep.mubr.bf16.mxu0 0
        %3486 = vmatmul.mubr.bf16.gmra.mxu0 %v3448
        %v3487 = vpop.f32.mrf.mxu0
        %v3488 = vadd.f32 0.0, %v3487
        %v3489 = vpop.f32.mrf.mxu0
        %v3490 = vpop.f32.mrf.mxu0
        %v3491 = vpop.f32.mrf.mxu0
        %3492 = vdwg.mxu0
        %3494 = vrot.lane.b32.xlu0 %v3488, 24
        %v3495 = vpop.permute.xlu0 %3494
        %3497 = vst.msk [vmem:[#allocation3 + $0x8] sm:$0xff] %vm1801, %v3495
        %v3498 = vld [vmem:[#allocation3] sm:$0xff]
        %v3499 = vld [vmem:[#allocation3 + $0x8] sm:$0xff]
        %v3500 = vpack.c.bf16 %v3499, %v3498
        %v3502 = vlaneseq
        %v3503 = vshrl.u32 %v3502, 7
        %v3504 = vsub.s32 0, %v3503
        %v3505 = vrot.slane %v2573, %v3504
        %v3511 = vunpack.c.l.b16 %v2569
        %v3512 = vunpack.c.l.b16 %v2570
        %v3513 = vunpack.c.l.b16 %v2571
        %v3514 = vunpack.c.l.b16 %v2572
        %v3515 = vpack.c.b16 %v3512, %v3511
        %v3516 = vpack.c.b16 %v3514, %v3513
        %v3520 = vsel %vm1213, %v3500, 0
        %3522 = vmatprep.subr.bf16.mxu0 0
        %3523 = vmatpush1.bf16.msra.mxu0 0
        %3524 = vmatprep.subr.bf16.mxu0 0
        %3525 = vmatpush1.bf16.msra.mxu0 0
        %3526 = vmatprep.subr.bf16.mxu0 0
        %3527 = vmatpush1.bf16.msra.mxu0 0
        %3528 = vmatprep.subr.bf16.mxu0 0
        %3529 = vmatpush1.bf16.msra.mxu0 0
        %3530 = vmatprep.subr.bf16.mxu0 0
        %3531 = vmatpush1.bf16.msra.mxu0 0
        %3532 = vmatprep.subr.bf16.mxu0 0
        %3533 = vmatpush1.bf16.msra.mxu0 0
        %3534 = vmatprep.subr.bf16.mxu0 0
        %3535 = vmatpush1.bf16.msra.mxu0 %v3516
        %3536 = vmatprep.subr.bf16.mxu0 0
        %3537 = vmatpush1.bf16.msra.mxu0 %v3515
        %3538 = vmatprep.subr.bf16.mxu0 0
        %3539 = vmatpush2.bf16.msra.mxu0 0
        %3540 = vmatprep.subr.bf16.mxu0 0
        %3541 = vmatpush2.bf16.msra.mxu0 0
        %3542 = vmatprep.subr.bf16.mxu0 0
        %3543 = vmatpush2.bf16.msra.mxu0 0
        %3544 = vmatprep.subr.bf16.mxu0 0
        %3545 = vmatpush2.bf16.msra.mxu0 0
        %3546 = vmatprep.subr.bf16.mxu0 0
        %3547 = vmatpush2.bf16.msra.mxu0 0
        %3548 = vmatprep.subr.bf16.mxu0 0
        %3549 = vmatpush2.bf16.msra.mxu0 0
        %3550 = vmatprep.subr.bf16.mxu0 0
        %3551 = vmatpush2.bf16.msra.mxu0 0
        %3552 = vmatprep.subr.bf16.mxu0 0
        %3553 = vmatpush2.bf16.msra.mxu0 0
        %3554 = vmatprep.mubr.bf16.mxu0 0
        %3555 = vmatmul.mubr.bf16.gmra.mxu0 %v3520
        %v3556 = vpop.f32.mrf.mxu0
        %v3557 = vadd.f32 %v3505, %v3556
        %v3558 = vpop.f32.mrf.mxu0
        %v3559 = vpop.f32.mrf.mxu0
        %v3560 = vadd.f32 %v3505, %v3559
        %v3561 = vpop.f32.mrf.mxu0
        %3562 = vdwg.mxu0
        %v3563 = vadd.f32 %v2325, %v3557
        %v3564 = vadd.f32 %v2326, %v3560
        %v3565 = vld [vmem:[%s1180 + $0x2] sm:$0x1]
        %v3566 = vld [vmem:[%s1184 + $0x2] sm:$0x1]
        %v3567 = vsel %vm1213, %v3563, 0.0
        %3568 = vadd.xlane.f32.xlu0 %v3567
        %v3569 = vpop.xlane.xlu0 %3568
        %v3570 = vsel %vm1213, %v3564, 0.0
        %3571 = vadd.xlane.f32.xlu0 %v3570
        %v3572 = vpop.xlane.xlu0 %3571
        %v3573 = vmul.f32 %v3569, %v1220
        %v3574 = vmul.f32 %v3572, %v1220
        %v3575 = vsub.f32 %v3563, %v3573
        %v3576 = vsub.f32 %v3564, %v3574
        %v3577 = vmul.f32 %v3575, %v3575
        %v3578 = vmul.f32 %v3576, %v3576
        %v3579 = vsel %vm1213, %v3577, 0.0
        %3580 = vadd.xlane.f32.xlu0 %v3579
        %v3581 = vpop.xlane.xlu0 %3580
        %v3582 = vsel %vm1213, %v3578, 0.0
        %3583 = vadd.xlane.f32.xlu0 %v3582
        %v3584 = vpop.xlane.xlu0 %3583
        %v3585 = vmul.f32 %v3581, 0.032258064
        %v3586 = vmul.f32 %v3584, 0.032258064
        %v3587 = vrsqrt.pop %v3585
        %v3588 = vmul.f32 %v3585, %v3587
        %vm3589 = vcmp.eq.f32.partialorder %v3585, inf
        %v3590 = vsel %vm3589, %v3585, %v3588
        %vm3591 = vcmp.eq.f32.partialorder %v3585, 0.0
        %v3592 = vand.u32 %v3585, 2147483648
        %v3593 = vsel %vm3591, %v3592, %v3590
        %v3594 = vrsqrt.pop %v3586
        %v3595 = vmul.f32 %v3586, %v3594
        %vm3596 = vcmp.eq.f32.partialorder %v3586, inf
        %v3597 = vsel %vm3596, %v3586, %v3595
        %vm3598 = vcmp.eq.f32.partialorder %v3586, 0.0
        %v3599 = vand.u32 %v3586, 2147483648
        %v3600 = vsel %vm3598, %v3599, %v3597
        %v3601 = vadd.f32 %v3593, 1e-06
        %v3602 = vadd.f32 %v3600, 1e-06
        %v3603 = vrcp.pop %v3601
        %v3604 = vrcp.pop %v3602
        %v3605 = vmul.f32 %v3575, %v3603
        %v3606 = vmul.f32 %v3576, %v3604
        %v3607 = vlaneseq
        %v3608 = vshrl.u32 %v3607, 7
        %v3609 = vsub.s32 0, %v3608
        %v3610 = vrot.slane %v3565, %v3609
        %v3611 = vmul.f32 %v3610, %v3605
        %v3612 = vmul.f32 %v3610, %v3606
        %v3613 = vlaneseq
        %v3614 = vshrl.u32 %v3613, 7
        %v3615 = vsub.s32 0, %v3614
        %v3616 = vrot.slane %v3566, %v3615
        %v3617 = vadd.f32 %v3611, %v3616
        %v3618 = vadd.f32 %v3612, %v3616
        %v3619 = vpack.c.bf16 %v3618, %v3617
        %v3620 = vld [vmem:[%s1171] sm:$0xf]
        %v3621 = vld [vmem:[%s1171 + $0x4] sm:$0xf]
        %v3622 = vld [vmem:[%s1171 + $0x8] sm:$0xf]
        %v3623 = vld [vmem:[%s1171 + $0xc] sm:$0xf]
        %v3624 = vld [vmem:[%s970] sm:$0x1]
        %v3626 = vlaneseq
        %v3627 = vshrl.u32 %v3626, 7
        %v3628 = vsub.s32 0, %v3627
        %v3629 = vrot.slane %v3624, %v3628
        %v3635 = vunpack.c.l.b16 %v3620
        %v3636 = vunpack.c.l.b16 %v3621
        %v3637 = vunpack.c.l.b16 %v3622
        %v3638 = vunpack.c.l.b16 %v3623
        %v3639 = vpack.c.b16 %v3636, %v3635
        %v3640 = vpack.c.b16 %v3638, %v3637
        %v3644 = vsel %vm1213, %v3619, 0
        %3646 = vmatprep.subr.bf16.mxu0 0
        %3647 = vmatpush1.bf16.msra.mxu0 0
        %3648 = vmatprep.subr.bf16.mxu0 0
        %3649 = vmatpush1.bf16.msra.mxu0 0
        %3650 = vmatprep.subr.bf16.mxu0 0
        %3651 = vmatpush1.bf16.msra.mxu0 0
        %3652 = vmatprep.subr.bf16.mxu0 0
        %3653 = vmatpush1.bf16.msra.mxu0 0
        %3654 = vmatprep.subr.bf16.mxu0 0
        %3655 = vmatpush1.bf16.msra.mxu0 0
        %3656 = vmatprep.subr.bf16.mxu0 0
        %3657 = vmatpush1.bf16.msra.mxu0 0
        %3658 = vmatprep.subr.bf16.mxu0 0
        %3659 = vmatpush1.bf16.msra.mxu0 %v3640
        %3660 = vmatprep.subr.bf16.mxu0 0
        %3661 = vmatpush1.bf16.msra.mxu0 %v3639
        %3662 = vmatprep.subr.bf16.mxu0 0
        %3663 = vmatpush2.bf16.msra.mxu0 0
        %3664 = vmatprep.subr.bf16.mxu0 0
        %3665 = vmatpush2.bf16.msra.mxu0 0
        %3666 = vmatprep.subr.bf16.mxu0 0
        %3667 = vmatpush2.bf16.msra.mxu0 0
        %3668 = vmatprep.subr.bf16.mxu0 0
        %3669 = vmatpush2.bf16.msra.mxu0 0
        %3670 = vmatprep.subr.bf16.mxu0 0
        %3671 = vmatpush2.bf16.msra.mxu0 0
        %3672 = vmatprep.subr.bf16.mxu0 0
        %3673 = vmatpush2.bf16.msra.mxu0 0
        %3674 = vmatprep.subr.bf16.mxu0 0
        %3675 = vmatpush2.bf16.msra.mxu0 0
        %3676 = vmatprep.subr.bf16.mxu0 0
        %3677 = vmatpush2.bf16.msra.mxu0 0
        %3678 = vmatprep.mubr.bf16.mxu0 0
        %3679 = vmatmul.mubr.bf16.gmra.mxu0 %v3644
        %v3680 = vpop.f32.mrf.mxu0
        %v3681 = vadd.f32 %v3629, %v3680
        %v3682 = vpop.f32.mrf.mxu0
        %v3683 = vpop.f32.mrf.mxu0
        %v3684 = vadd.f32 %v3629, %v3683
        %v3685 = vpop.f32.mrf.mxu0
        %3686 = vdwg.mxu0
        %v3687 = vmax.f32 %v3681, 0.0
        %v3688 = vmax.f32 %v3684, 0.0
        %v3689 = vpack.c.bf16 %v3688, %v3687
        %v3690 = vld [vmem:[%s1176] sm:$0xf]
        %v3691 = vld [vmem:[%s1176 + $0x4] sm:$0xf]
        %v3692 = vld [vmem:[%s1176 + $0x8] sm:$0xf]
        %v3693 = vld [vmem:[%s1176 + $0xc] sm:$0xf]
        %v3694 = vld [vmem:[%s1176 + $0x10] sm:$0xf]
        %v3695 = vld [vmem:[%s1176 + $0x14] sm:$0xf]
        %v3696 = vld [vmem:[%s1176 + $0x18] sm:$0xf]
        %v3697 = vld [vmem:[%s1176 + $0x1c] sm:$0xf]
        %v3706 = vunpack.c.l.b16 %v3690
        %v3707 = vunpack.c.l.b16 %v3691
        %v3708 = vunpack.c.l.b16 %v3692
        %v3709 = vunpack.c.l.b16 %v3693
        %v3710 = vunpack.c.l.b16 %v3694
        %v3711 = vunpack.c.l.b16 %v3695
        %v3712 = vunpack.c.l.b16 %v3696
        %v3713 = vunpack.c.l.b16 %v3697
        %v3714 = vpack.c.b16 %v3707, %v3706
        %v3715 = vpack.c.b16 %v3709, %v3708
        %v3716 = vpack.c.b16 %v3711, %v3710
        %v3717 = vpack.c.b16 %v3713, %v3712
        %vm3722 = vcmask 523264
        %v3724 = vsel %vm3722, %v3689, 0
        %3726 = vmatprep.subr.bf16.mxu0 0
        %3727 = vmatpush1.bf16.msra.mxu0 0
        %3728 = vmatprep.subr.bf16.mxu0 0
        %3729 = vmatpush1.bf16.msra.mxu0 0
        %3730 = vmatprep.subr.bf16.mxu0 0
        %3731 = vmatpush1.bf16.msra.mxu0 0
        %3732 = vmatprep.subr.bf16.mxu0 0
        %3733 = vmatpush1.bf16.msra.mxu0 0
        %3734 = vmatprep.subr.bf16.mxu0 0
        %3735 = vmatpush1.bf16.msra.mxu0 %v3717
        %3736 = vmatprep.subr.bf16.mxu0 0
        %3737 = vmatpush1.bf16.msra.mxu0 %v3716
        %3738 = vmatprep.subr.bf16.mxu0 0
        %3739 = vmatpush1.bf16.msra.mxu0 %v3715
        %3740 = vmatprep.subr.bf16.mxu0 0
        %3741 = vmatpush1.bf16.msra.mxu0 %v3714
        %3742 = vmatprep.subr.bf16.mxu0 0
        %3743 = vmatpush2.bf16.msra.mxu0 0
        %3744 = vmatprep.subr.bf16.mxu0 0
        %3745 = vmatpush2.bf16.msra.mxu0 0
        %3746 = vmatprep.subr.bf16.mxu0 0
        %3747 = vmatpush2.bf16.msra.mxu0 0
        %3748 = vmatprep.subr.bf16.mxu0 0
        %3749 = vmatpush2.bf16.msra.mxu0 0
        %3750 = vmatprep.subr.bf16.mxu0 0
        %3751 = vmatpush2.bf16.msra.mxu0 0
        %3752 = vmatprep.subr.bf16.mxu0 0
        %3753 = vmatpush2.bf16.msra.mxu0 0
        %3754 = vmatprep.subr.bf16.mxu0 0
        %3755 = vmatpush2.bf16.msra.mxu0 0
        %3756 = vmatprep.subr.bf16.mxu0 0
        %3757 = vmatpush2.bf16.msra.mxu0 0
        %3758 = vmatprep.mubr.bf16.mxu0 0
        %3759 = vmatmul.mubr.bf16.gmra.mxu0 %v3724
        %v3760 = vpop.f32.mrf.mxu0
        %v3761 = vadd.f32 0.0, %v3760
        %v3762 = vpop.f32.mrf.mxu0
        %v3763 = vpop.f32.mrf.mxu0
        %v3764 = vadd.f32 0.0, %v3763
        %v3765 = vpop.f32.mrf.mxu0
        %3766 = vdwg.mxu0
        %v3767 = vadd.f32 %v3563, %v3761
        %v3768 = vadd.f32 %v3564, %v3764
        %v3769 = vld [vmem:[%s978] sm:$0x1]
        %v3771 = vlaneseq
        %v3772 = vshrl.u32 %v3771, 7
        %v3773 = vsub.s32 0, %v3772
        %v3774 = vrot.slane %v3769, %v3773
        %v3776 = vadd.f32 %v3767, %v3774
        %v3777 = vadd.f32 %v3768, %v3774
        %3778 = vst.msk [vmem:[#allocation2] sm:$0xff] %vm1213, %v3776
        %3779 = vst.msk [vmem:[#allocation2 + $0x8] sm:$0xff] %vm1213, %v3777
        %p3780 = scmp.eq.s32.totalorder %s53, 1
        // Predicated region
        $region153: #{decoder_forward.1} parent=107 // pred_check
          %p3781 = pneg %p3780
        $region154: #{decoder_forward.1} parent=107 // pred_check_branch
          %3783 = sbr.rel (%p3781) target = $region156
        $region155: #{decoder_forward.1} parent=107 // pred_region
          %v3784 = vld [vmem:[#allocation18] sm:$0x1]
          %v3785 = vld [vmem:[#allocation19] sm:$0x1]
          %v3786 = vsel %vm1213, %v3776, 0.0
          %3787 = vadd.xlane.f32.xlu0 %v3786
          %v3788 = vpop.xlane.xlu0 %3787
          %v3789 = vsel %vm1213, %v3777, 0.0
          %3790 = vadd.xlane.f32.xlu0 %v3789
          %v3791 = vpop.xlane.xlu0 %3790
          %v3792 = vmul.f32 %v3788, %v1220
          %v3793 = vmul.f32 %v3791, %v1220
          %v3794 = vsub.f32 %v3776, %v3792
          %v3795 = vsub.f32 %v3777, %v3793
          %v3796 = vmul.f32 %v3794, %v3794
          %v3797 = vmul.f32 %v3795, %v3795
          %v3798 = vsel %vm1213, %v3796, 0.0
          %3799 = vadd.xlane.f32.xlu0 %v3798
          %v3800 = vpop.xlane.xlu0 %3799
          %v3801 = vsel %vm1213, %v3797, 0.0
          %3802 = vadd.xlane.f32.xlu0 %v3801
          %v3803 = vpop.xlane.xlu0 %3802
          %v3804 = vmul.f32 %v3800, 0.032258064
          %v3805 = vmul.f32 %v3803, 0.032258064
          %v3806 = vrsqrt.pop %v3804
          %v3807 = vmul.f32 %v3804, %v3806
          %vm3808 = vcmp.eq.f32.partialorder %v3804, inf
          %v3809 = vsel %vm3808, %v3804, %v3807
          %vm3810 = vcmp.eq.f32.partialorder %v3804, 0.0
          %v3811 = vand.u32 %v3804, 2147483648
          %v3812 = vsel %vm3810, %v3811, %v3809
          %v3813 = vrsqrt.pop %v3805
          %v3814 = vmul.f32 %v3805, %v3813
          %vm3815 = vcmp.eq.f32.partialorder %v3805, inf
          %v3816 = vsel %vm3815, %v3805, %v3814
          %vm3817 = vcmp.eq.f32.partialorder %v3805, 0.0
          %v3818 = vand.u32 %v3805, 2147483648
          %v3819 = vsel %vm3817, %v3818, %v3816
          %v3820 = vadd.f32 %v3812, 1e-06
          %v3821 = vadd.f32 %v3819, 1e-06
          %v3822 = vrcp.pop %v3820
          %v3823 = vrcp.pop %v3821
          %v3824 = vmul.f32 %v3794, %v3822
          %v3825 = vmul.f32 %v3795, %v3823
          %v3827 = vlaneseq
          %v3828 = vshrl.u32 %v3827, 7
          %v3829 = vsub.s32 0, %v3828
          %v3830 = vrot.slane %v3784, %v3829
          %v3832 = vmul.f32 %v3830, %v3824
          %v3833 = vmul.f32 %v3830, %v3825
          %v3835 = vlaneseq
          %v3836 = vshrl.u32 %v3835, 7
          %v3837 = vsub.s32 0, %v3836
          %v3838 = vrot.slane %v3785, %v3837
          %v3840 = vadd.f32 %v3832, %v3838
          %v3841 = vadd.f32 %v3833, %v3838
          %3842 = vst.msk [vmem:[#allocation21] sm:$0xff] %vm1213, %v3840
          %s3843 = scalar_lea.vmem [#allocation21], 8
          %3844 = vst.msk [vmem:[%s3843] sm:$0xff] %vm1213, %v3841
        $region156: #{decoder_forward.1} parent=107 // pred_fallthru
          _
        // Predicated region
        $region157: #{decoder_forward.1} parent=107 // pred_check
          %p3845 = pneg %p640
        $region158: #{decoder_forward.1} parent=107 // pred_check_branch
          %3847 = sbr.rel (%p3845) target = $region160
        $region159: #{decoder_forward.1} parent=107 // pred_region
          %s3848 = smul.u32 2, %s52
          %s3850 = ssub.s32 256, 256
          %3851 = vsyncadd [#allocation6], %s3850
          %s3852 = smul.addr %s3848, 128
          %s3853 = scalar_lea.hbm %s22, %s3852
          %s3854 = sshll.u32 [#allocation21], 4
          %s3855 = int_to_ptr.vmem [resolvable:$true] %s3854
          %3860 = dma.vmem_to_hbm [thread:$0]  %s3855, 256, %s3853, [#allocation6], 128, 128, 8
        $region160: #{decoder_forward.1} parent=107 // pred_fallthru
          _
        // Predicated region
        $region161: #{decoder_forward.1} parent=107 // pred_check
          %p3861 = pneg %p640
        $region162: #{decoder_forward.1} parent=107 // pred_check_branch
          %3863 = sbr.rel (%p3861) target = $region164
        $region163: #{decoder_forward.1} parent=107 // pred_region
          %3864 = dma.done [#allocation6], 256
        $region164: #{decoder_forward.1} parent=107 // pred_fallthru
          _
      $region108: #{decoder_forward.1} parent=5 // pred_fallthru
        _
      %p3865 = scmp.le.s32.totalorder 2, %s43
      // Predicated region
      $region165: #{decoder_forward.1} parent=5 // pred_check
        %p3866 = pneg %p3865
      $region166: #{decoder_forward.1} parent=5 // pred_check_branch
        %3868 = sbr.rel (%p3866) target = $region168
      $region167: #{decoder_forward.1} parent=5 // pred_region
        %s3869 = ssub.s32 %s43, 2
      $region168: #{decoder_forward.1} parent=5 // pred_fallthru
        _
    $region6: #{decoder_forward.1} parent=1 // loop_footer
      %s47 = sadd.s32 1, %s43
    $region7: #{decoder_forward.1} parent=1 // loop_footer_branch
      %42 = sbr.rel target = $region3
    $region8: #{decoder_forward.1} parent=1 // loop_exit
      _
    %3870 = vsyncpa [#allocation5], 1
    %s3871 = scalar_lea.sflag [#allocation5], 1
    %3872 = vsyncpa %s3871, 1
    %3873 = vsyncpa [#allocation8], 1
    %s3874 = scalar_lea.sflag [#allocation8], 1
    %3875 = vsyncpa %s3874, 1
    %3876 = vsyncpa [#allocation11], 1
    %s3877 = scalar_lea.sflag [#allocation11], 1
    %3878 = vsyncpa %s3877, 1
    %3879 = vsyncpa [#allocation14], 1
    %s3880 = scalar_lea.sflag [#allocation14], 1
    %3881 = vsyncpa %s3880, 1
    %3882 = vsyncpa [#allocation17], 1
    %s3883 = scalar_lea.sflag [#allocation17], 1
    %3884 = vsyncpa %s3883, 1
    %3885 = vsyncpa [#allocation20], 1
    %3886 = vsyncpa [#allocation6], 1
    %s3887 = scalar_lea.sflag [#allocation6], 1
    %3888 = vsyncpa %s3887, 1

</llo_original>
